<compile_context>
chip_gen: v6e
topology: v6e:2x2x1
jax: 0.10.0
libtpu: 0.0.40
codegen_flags: <defaults>
</compile_context>

<pallas_src>
import functools

import jax
import jax.numpy as jnp
from jax.experimental import pallas as pl
from jax.experimental.pallas import tpu as pltpu


def _round_up(x, m):
    return (x + m - 1) // m * m


# ----------------------------------------------------------------------------
# Pallas kernel: full MsTcn forward (all stages) for one batch element.
# ----------------------------------------------------------------------------
def _mstcn_kernel(x_ref, m_ref, win1_ref, bin1_ref, winr_ref, binr_ref,
                  dilw_ref, dilb_ref, onew_ref, oneb_ref, wout_ref, bout_ref,
                  o_ref, pad_ref,
                  *, num_stages, num_layers, num_classes, t_real):
    bf16 = jnp.bfloat16
    t_pad = x_ref.shape[1]
    f_pad = win1_ref.shape[1]
    ncls_pad = wout_ref.shape[2]
    halo = (pad_ref.shape[0] - t_pad) // 2   # >= max dilation, multiple of 8

    # Zero the halo scratch: rows outside [halo, halo + t_pad) stay zero for the
    # whole invocation, reproducing the conv's zero padding beyond the sequence.
    pad_ref[...] = jnp.zeros_like(pad_ref)

    # Hoisted broadcasts (kept out of the stage/layer loops).
    m = m_ref[0]                                         # (t_pad, 1) f32
    m_f = jnp.broadcast_to(m, (t_pad, f_pad))
    m_c = m_f if ncls_pad == f_pad else jnp.broadcast_to(m, (t_pad, ncls_pad))
    if num_stages > 1:
        lane = jax.lax.broadcasted_iota(jnp.int32, (t_pad, ncls_pad), 1)
        cls_valid = lane < num_classes
    if t_real != t_pad:
        row = jax.lax.broadcasted_iota(jnp.int32, (t_pad, f_pad), 0)
        t_valid = (row < t_real).astype(jnp.float32)     # zero the time padding

    prev_logits = None
    for s in range(num_stages):                          # static unroll (small)
        if s == 0:
            inp = x_ref[0]                               # (t_pad, cin_pad) bf16
            w_in, b_in = win1_ref[...], bin1_ref[...]
        else:
            # softmax over the real class lanes (padded lanes masked out), * mask.
            xm = jnp.where(cls_valid, prev_logits, -1e30)
            xmax = jnp.max(xm, axis=-1, keepdims=True)
            e = jnp.exp(xm - xmax)
            inv = pl.reciprocal(jnp.sum(e, axis=-1, keepdims=True), approx=True)
            inp = (e * inv * m_c).astype(bf16)
            w_in, b_in = winr_ref[s - 1], binr_ref[s - 1]

        # conv_1x1: (T, Cin) @ (Cin, F) with f32 accumulation.
        out = jnp.dot(inp, w_in, preferred_element_type=jnp.float32) + b_in
        if t_real != t_pad:
            out = out * t_valid      # time-padding rows must read as conv zeros

        # Dilated residual layers (dilation = 2**l).
        for l in range(num_layers):
            d = 1 << l
            # Aligned whole-slab store into the middle of the halo scratch;
            # the +/-d shifted neighbours are then plain static slices.
            pad_ref[halo:halo + t_pad, :] = out
            x_prev = pad_ref[halo - d:halo - d + t_pad, :]   # out[t - d], 0-pad
            x_next = pad_ref[halo + d:halo + d + t_pad, :]   # out[t + d], 0-pad
            # Fuse the 3 conv taps into one K = 3*F matmul.
            slab = jnp.concatenate(
                [x_prev.astype(bf16), out.astype(bf16), x_next.astype(bf16)],
                axis=-1)
            h = jnp.dot(slab, dilw_ref[s, l],
                        preferred_element_type=jnp.float32) + dilb_ref[s, l]
            h = jnp.maximum(h, 0.0)                          # ReLU
            h = jnp.dot(h.astype(bf16), onew_ref[s, l],
                        preferred_element_type=jnp.float32) + oneb_ref[s, l]
            out = (out + h) * m_f                            # dropout = identity

        # conv_out + mask (lane-dense 128-wide store; sliced back in wrapper).
        logits = (jnp.dot(out.astype(bf16), wout_ref[s],
                          preferred_element_type=jnp.float32)
                  + bout_ref[s]) * m_c
        o_ref[s, 0] = logits
        prev_logits = logits


# ----------------------------------------------------------------------------
# Parameter packing: pad channel dims to multiples of 128, stack stages, bf16.
# ----------------------------------------------------------------------------
def _pack_params(stage_params):
    s0 = stage_params[0]
    c_in, F = s0["w_in"].shape
    ncls = s0["w_out"].shape[1]
    L = s0["dilw"].shape[0]
    cin_p = _round_up(c_in, 128)
    f_p = _round_up(F, 128)
    ncls_p = _round_up(ncls, 128)
    bf16 = jnp.bfloat16

    def pad2(a, rows, cols):
        return jnp.pad(a, ((0, rows - a.shape[0]), (0, cols - a.shape[1])))

    win1 = pad2(s0["w_in"], cin_p, f_p).astype(bf16)
    bin1 = jnp.pad(s0["b_in"], ((0, 0), (0, f_p - F)))

    rest = stage_params[1:]
    if rest:
        win_r = jnp.stack([pad2(p["w_in"], ncls_p, f_p) for p in rest]).astype(bf16)
        bin_r = jnp.stack([jnp.pad(p["b_in"], ((0, 0), (0, f_p - F))) for p in rest])
    else:  # dummy (never indexed when num_stages == 1)
        win_r = jnp.zeros((1, ncls_p, f_p), bf16)
        bin_r = jnp.zeros((1, 1, f_p), jnp.float32)

    def pack_dil(p):
        # (L, 3, F, F) -> pad each tap -> (L, 3*f_p, f_p); tap order [t-d, t, t+d]
        w = jnp.pad(p["dilw"], ((0, 0), (0, 0), (0, f_p - F), (0, f_p - F)))
        return w.reshape(L, 3 * f_p, f_p)

    dilw = jnp.stack([pack_dil(p) for p in stage_params]).astype(bf16)
    dilb = jnp.stack([jnp.pad(p["dilb"], ((0, 0), (0, 0), (0, f_p - F)))
                      for p in stage_params])
    onew = jnp.stack([jnp.pad(p["onew"], ((0, 0), (0, f_p - F), (0, f_p - F)))
                      for p in stage_params]).astype(bf16)
    oneb = jnp.stack([jnp.pad(p["oneb"], ((0, 0), (0, 0), (0, f_p - F)))
                      for p in stage_params])
    wout = jnp.stack([pad2(p["w_out"], f_p, ncls_p) for p in stage_params]).astype(bf16)
    bout = jnp.stack([jnp.pad(p["b_out"], ((0, 0), (0, ncls_p - ncls)))
                      for p in stage_params])

    return {"win1": win1, "bin1": bin1, "win_r": win_r, "bin_r": bin_r,
            "dilw": dilw, "dilb": dilb, "onew": onew, "oneb": oneb,
            "wout": wout, "bout": bout, "dims": (cin_p, f_p, ncls_p)}


# ----------------------------------------------------------------------------
# Full MsTcn forward (wrapper: layout plumbing + single fused pallas_call)
# ----------------------------------------------------------------------------
def mstcn_forward(x_nct, mask_nct, stage_params, num_layers):
    """x_nct: (N, input_feat_dim, T); mask_nct: same shape.
    Returns (num_stages, N, num_classes, T), matching the PyTorch module."""
    N, c_in, T = x_nct.shape
    num_classes = stage_params[0]["w_out"].shape[1]
    num_stages = len(stage_params)

    packed = _pack_params(stage_params)
    cin_p, f_p, ncls_p = packed["dims"]
    t_pad = _round_up(T, 8)
    halo = _round_up(2 ** (num_layers - 1), 8)

    # NCT -> NTC, pad time and channel dims, bf16 for the MXU.
    x = jnp.transpose(x_nct, (0, 2, 1)).astype(jnp.float32)
    x = jnp.pad(x, ((0, 0), (0, t_pad - T), (0, cin_p - c_in))).astype(jnp.bfloat16)
    m = jnp.transpose(mask_nct[:, 0:1, :], (0, 2, 1)).astype(jnp.float32)
    m = jnp.pad(m, ((0, 0), (0, t_pad - T), (0, 0)))           # (N, t_pad, 1)

    weight_names = ("win1", "bin1", "win_r", "bin_r", "dilw", "dilb",
                    "onew", "oneb", "wout", "bout")
    weight_args = [packed[k] for k in weight_names]

    def rep(a):  # whole-array block, resident across the batch grid (no re-DMA)
        nd = a.ndim
        return pl.BlockSpec(a.shape, lambda n: (0,) * nd)

    kernel = functools.partial(_mstcn_kernel, num_stages=num_stages,
                               num_layers=num_layers, num_classes=num_classes,
                               t_real=T)

    out = pl.pallas_call(
        kernel,
        out_shape=jax.ShapeDtypeStruct((num_stages, N, t_pad, ncls_p), jnp.float32),
        grid=(N,),
        in_specs=[pl.BlockSpec((1, t_pad, cin_p), lambda n: (n, 0, 0)),
                  pl.BlockSpec((1, t_pad, 1), lambda n: (n, 0, 0))]
                 + [rep(a) for a in weight_args],
        out_specs=pl.BlockSpec((num_stages, 1, t_pad, ncls_p),
                               lambda n: (0, n, 0, 0)),
        scratch_shapes=[pltpu.VMEM((t_pad + 2 * halo, f_p), jnp.float32)],
        compiler_params=pltpu.CompilerParams(
            dimension_semantics=("parallel",),
            vmem_limit_bytes=64 * 1024 * 1024),
    )(x, m, *weight_args)

    out = out[:, :, :T, :num_classes]                          # drop padding
    return jnp.transpose(out, (0, 1, 3, 2))                    # (S, N, C, T)


# ----------------------------------------------------------------------------
# Deterministic parameter init (unpadded, f32, (C_in, C_out) weight layout)
# ----------------------------------------------------------------------------
def _init_stage(key, num_layers, dim, num_f_maps, num_classes):
    ks = jax.random.split(key, 8)
    s = 0.1
    f32 = jnp.float32
    return {
        "w_in": jax.random.normal(ks[0], (dim, num_f_maps), f32) * s,
        "b_in": jax.random.normal(ks[1], (1, num_f_maps), f32) * s,
        "dilw": jax.random.normal(ks[2], (num_layers, 3, num_f_maps, num_f_maps), f32) * s,
        "dilb": jax.random.normal(ks[3], (num_layers, 1, num_f_maps), f32) * s,
        "onew": jax.random.normal(ks[4], (num_layers, num_f_maps, num_f_maps), f32) * s,
        "oneb": jax.random.normal(ks[5], (num_layers, 1, num_f_maps), f32) * s,
        "w_out": jax.random.normal(ks[6], (num_f_maps, num_classes), f32) * s,
        "b_out": jax.random.normal(ks[7], (1, num_classes), f32) * s,
    }


# ----------------------------------------------------------------------------
# Pure-JAX f32 reference (same math as the PyTorch module) for correctness
# ----------------------------------------------------------------------------
def _stage_ref(x, m, p, num_layers, apply_softmax):
    hp = jax.lax.Precision.HIGHEST
    if apply_softmax:
        x = jax.nn.softmax(x, axis=-1) * m
    out = jnp.matmul(x, p["w_in"], precision=hp) + p["b_in"]
    T = x.shape[1]
    for l in range(num_layers):
        d = 2 ** l
        z = jnp.zeros_like(out[:, :d, :])
        prev = jnp.concatenate([z, out[:, :T - d, :]], axis=1)
        nxt = jnp.concatenate([out[:, d:, :], z], axis=1)
        h = (jnp.matmul(prev, p["dilw"][l, 0], precision=hp)
             + jnp.matmul(out, p["dilw"][l, 1], precision=hp)
             + jnp.matmul(nxt, p["dilw"][l, 2], precision=hp)
             + p["dilb"][l])
        h = jnp.maximum(h, 0.0)
        h = jnp.matmul(h, p["onew"][l], precision=hp) + p["oneb"][l]
        out = (out + h) * m
    return (jnp.matmul(out, p["w_out"], precision=hp) + p["b_out"]) * m


def mstcn_ref(x_nct, mask_nct, stage_params, num_layers):
    x = jnp.transpose(x_nct, (0, 2, 1)).astype(jnp.float32)
    m = jnp.transpose(mask_nct[:, 0:1, :], (0, 2, 1)).astype(jnp.float32)
    outs = []
    inp = x
    for si, p in enumerate(stage_params):
        o = _stage_ref(inp, m, p, num_layers, apply_softmax=(si > 0))
        outs.append(jnp.transpose(o, (0, 2, 1)))
        inp = o
    return jnp.stack(outs, axis=0)


if __name__ == "__main__":
    # Small shapes consistent with MsTcn(num_stages, num_layers, num_f_maps,
    # input_feat_dim, num_classes) forward on (N, input_feat_dim, T).
    # T is deliberately NOT a multiple of 8 to exercise the time-padding path.
    N, C_IN, T = 2, 16, 60
    NUM_F_MAPS, NUM_CLASSES = 32, 8
    NUM_LAYERS, NUM_STAGES = 3, 2

    key = jax.random.PRNGKey(0)
    kx, kp = jax.random.split(key)
    x = jax.random.normal(kx, (N, C_IN, T), jnp.float32)
    mask = jnp.ones((N, C_IN, T), jnp.float32)   # as in MsTcn.predict

    pkeys = jax.random.split(kp, NUM_STAGES)
    stage_params = [_init_stage(pkeys[0], NUM_LAYERS, C_IN, NUM_F_MAPS, NUM_CLASSES)]
    for s in range(1, NUM_STAGES):
        stage_params.append(
            _init_stage(pkeys[s], NUM_LAYERS, NUM_CLASSES, NUM_F_MAPS, NUM_CLASSES))

    out = mstcn_forward(x, mask, stage_params, NUM_LAYERS)
    out = jax.block_until_ready(out)

    ref = mstcn_ref(x, mask, stage_params, NUM_LAYERS)
    assert out.shape == (NUM_STAGES, N, NUM_CLASSES, T), out.shape
    max_err = float(jnp.max(jnp.abs(out - ref)))
    # Kernel uses bf16 MXU operands with f32 accumulation; reference is f32-highest.
    assert jnp.allclose(out, ref, atol=2e-2, rtol=2e-2), f"max_err={max_err}"

    print("KERNEL_OK")
</pallas_src>

<mosaic_0001>
module attributes {stable_mosaic.version = 11 : i64} {
  func.func @_mstcn_kernel(%arg0: i32, %arg1: memref<1x64x128xbf16, #tpu.memory_space<vmem>>, %arg2: memref<1x64x1xf32, #tpu.memory_space<vmem>>, %arg3: memref<128x128xbf16, #tpu.memory_space<vmem>>, %arg4: memref<1x128xf32, #tpu.memory_space<vmem>>, %arg5: memref<1x128x128xbf16, #tpu.memory_space<vmem>>, %arg6: memref<1x1x128xf32, #tpu.memory_space<vmem>>, %arg7: memref<2x3x384x128xbf16, #tpu.memory_space<vmem>>, %arg8: memref<2x3x1x128xf32, #tpu.memory_space<vmem>>, %arg9: memref<2x3x128x128xbf16, #tpu.memory_space<vmem>>, %arg10: memref<2x3x1x128xf32, #tpu.memory_space<vmem>>, %arg11: memref<2x128x128xbf16, #tpu.memory_space<vmem>>, %arg12: memref<2x1x128xf32, #tpu.memory_space<vmem>>, %arg13: memref<2x1x64x128xf32, #tpu.memory_space<vmem>>, %arg14: memref<80x128xf32, #tpu.memory_space<vmem>>) attributes {dimension_semantics = [#tpu.dimension_semantics<parallel>], iteration_bounds = array<i64: 2>, scalar_prefetch = 0 : i64, scratch_operands = 1 : i64, tpu.core_type = #tpu.core_type<tc>, window_params = [{transform_indices = @transform_0, window_bounds = array<i64: 1, 64, 128>}, {transform_indices = @transform_1, window_bounds = array<i64: 1, 64, 1>}, {pipeline_mode = #tpu.pipeline_mode<synchronous>, transform_indices = @transform_2, window_bounds = array<i64: 128, 128>}, {pipeline_mode = #tpu.pipeline_mode<synchronous>, transform_indices = @transform_3, window_bounds = array<i64: 1, 128>}, {pipeline_mode = #tpu.pipeline_mode<synchronous>, transform_indices = @transform_4, window_bounds = array<i64: 1, 128, 128>}, {pipeline_mode = #tpu.pipeline_mode<synchronous>, transform_indices = @transform_5, window_bounds = array<i64: 1, 1, 128>}, {pipeline_mode = #tpu.pipeline_mode<synchronous>, transform_indices = @transform_6, window_bounds = array<i64: 2, 3, 384, 128>}, {pipeline_mode = #tpu.pipeline_mode<synchronous>, transform_indices = @transform_7, window_bounds = array<i64: 2, 3, 1, 128>}, {pipeline_mode = #tpu.pipeline_mode<synchronous>, transform_indices = @transform_8, window_bounds = array<i64: 2, 3, 128, 128>}, {pipeline_mode = #tpu.pipeline_mode<synchronous>, transform_indices = @transform_9, window_bounds = array<i64: 2, 3, 1, 128>}, {pipeline_mode = #tpu.pipeline_mode<synchronous>, transform_indices = @transform_10, window_bounds = array<i64: 2, 128, 128>}, {pipeline_mode = #tpu.pipeline_mode<synchronous>, transform_indices = @transform_11, window_bounds = array<i64: 2, 1, 128>}, {transform_indices = @transform_12, window_bounds = array<i64: 2, 1, 64, 128>}]} {
    %cst = arith.constant 0.000000e+00 : f32
    %0 = vector.broadcast %cst : f32 to vector<80x128xf32>
    %c0 = arith.constant 0 : index
    %c0_0 = arith.constant 0 : index
    %1 = vector.load %arg14[%c0, %c0_0] : memref<80x128xf32, #tpu.memory_space<vmem>>, vector<80x128xf32>
    tpu.vector_store %arg14[%c0, %c0_0], %0 {strides = array<i32>} : memref<80x128xf32, #tpu.memory_space<vmem>>, vector<80x128xf32>,
    %c0_1 = arith.constant 0 : index
    %c0_2 = arith.constant 0 : index
    %c0_3 = arith.constant 0 : index
    %2 = vector.load %arg2[%c0_1, %c0_2, %c0_3] : memref<1x64x1xf32, #tpu.memory_space<vmem>>, vector<1x64x1xf32>
    %3 = vector.shape_cast %2 : vector<1x64x1xf32> to vector<64x1xf32>
    %4 = vector.shape_cast %3 : vector<64x1xf32> to vector<64x1xf32>
    %5 = vector.broadcast %4 : vector<64x1xf32> to vector<64x128xf32>
    %6 = tpu.iota {dimensions = array<i32: 1>} : vector<64x128xi32>
    %c8_i32 = arith.constant 8 : i32
    %7 = vector.broadcast %c8_i32 : i32 to vector<64x128xi32>
    %8 = arith.cmpi slt, %6, %7 : vector<64x128xi32>
    %9 = tpu.iota {dimensions = array<i32: 0>} : vector<64x128xi32>
    %c60_i32 = arith.constant 60 : i32
    %10 = vector.broadcast %c60_i32 : i32 to vector<64x128xi32>
    %11 = arith.cmpi slt, %9, %10 : vector<64x128xi32>
    %12 = arith.extui %11 : vector<64x128xi1> to vector<64x128xi32>
    %13 = arith.sitofp %12 : vector<64x128xi32> to vector<64x128xf32>
    %c0_4 = arith.constant 0 : index
    %c0_5 = arith.constant 0 : index
    %c0_6 = arith.constant 0 : index
    %14 = vector.load %arg1[%c0_4, %c0_5, %c0_6] : memref<1x64x128xbf16, #tpu.memory_space<vmem>>, vector<1x64x128xbf16>
    %15 = vector.shape_cast %14 : vector<1x64x128xbf16> to vector<64x128xbf16>
    %c0_7 = arith.constant 0 : index
    %c0_8 = arith.constant 0 : index
    %16 = vector.load %arg3[%c0_7, %c0_8] : memref<128x128xbf16, #tpu.memory_space<vmem>>, vector<128x128xbf16>
    %c0_9 = arith.constant 0 : index
    %c0_10 = arith.constant 0 : index
    %17 = vector.load %arg4[%c0_9, %c0_10] : memref<1x128xf32, #tpu.memory_space<vmem>>, vector<1x128xf32>
    %cst_11 = arith.constant dense<0.000000e+00> : vector<64x128xf32>
    %18 = tpu.matmul %15, %16, %cst_11 {dimension_numbers = #tpu.dot_dimension_numbers<[1], [0], [0], [1], [0, 0, 1, 1], [], []>} : vector<64x128xbf16>, vector<128x128xbf16>, vector<64x128xf32> -> vector<64x128xf32>
    %19 = vector.broadcast %17 : vector<1x128xf32> to vector<64x128xf32>
    %20 = arith.addf %18, %19 : vector<64x128xf32>
    %21 = arith.mulf %20, %13 : vector<64x128xf32>
    %c8 = arith.constant 8 : index
    %c0_12 = arith.constant 0 : index
    %22 = vector.load %arg14[%c8, %c0_12] : memref<80x128xf32, #tpu.memory_space<vmem>>, vector<64x128xf32>
    tpu.vector_store %arg14[%c8, %c0_12], %21 {strides = array<i32>} : memref<80x128xf32, #tpu.memory_space<vmem>>, vector<64x128xf32>,
    %c7 = arith.constant 7 : index
    %c0_13 = arith.constant 0 : index
    %23 = vector.load %arg14[%c7, %c0_13] : memref<80x128xf32, #tpu.memory_space<vmem>>, vector<64x128xf32>
    %c9 = arith.constant 9 : index
    %c0_14 = arith.constant 0 : index
    %24 = vector.load %arg14[%c9, %c0_14] : memref<80x128xf32, #tpu.memory_space<vmem>>, vector<64x128xf32>
    %25 = arith.truncf %23 : vector<64x128xf32> to vector<64x128xbf16>
    %26 = arith.truncf %21 : vector<64x128xf32> to vector<64x128xbf16>
    %27 = arith.truncf %24 : vector<64x128xf32> to vector<64x128xbf16>
    %28 = tpu.concatenate %25, %26, %27 in 1 : vector<64x128xbf16>, vector<64x128xbf16>, vector<64x128xbf16> -> vector<64x384xbf16>
    %c0_15 = arith.constant 0 : index
    %c0_16 = arith.constant 0 : index
    %c0_17 = arith.constant 0 : index
    %c0_18 = arith.constant 0 : index
    %29 = vector.load %arg7[%c0_15, %c0_16, %c0_17, %c0_18] : memref<2x3x384x128xbf16, #tpu.memory_space<vmem>>, vector<1x1x384x128xbf16>
    %30 = vector.shape_cast %29 : vector<1x1x384x128xbf16> to vector<384x128xbf16>
    %cst_19 = arith.constant dense<0.000000e+00> : vector<64x128xf32>
    %31 = tpu.matmul %28, %30, %cst_19 {dimension_numbers = #tpu.dot_dimension_numbers<[1], [0], [0], [1], [0, 0, 1, 1], [], []>} : vector<64x384xbf16>, vector<384x128xbf16>, vector<64x128xf32> -> vector<64x128xf32>
    %c0_20 = arith.constant 0 : index
    %c0_21 = arith.constant 0 : index
    %c0_22 = arith.constant 0 : index
    %c0_23 = arith.constant 0 : index
    %32 = vector.load %arg8[%c0_20, %c0_21, %c0_22, %c0_23] : memref<2x3x1x128xf32, #tpu.memory_space<vmem>>, vector<1x1x1x128xf32>
    %33 = vector.shape_cast %32 : vector<1x1x1x128xf32> to vector<1x128xf32>
    %34 = vector.broadcast %33 : vector<1x128xf32> to vector<64x128xf32>
    %35 = arith.addf %31, %34 : vector<64x128xf32>
    %cst_24 = arith.constant 0.000000e+00 : f32
    %36 = vector.broadcast %cst_24 : f32 to vector<64x128xf32>
    %37 = arith.maximumf %35, %36 : vector<64x128xf32>
    %38 = arith.truncf %37 : vector<64x128xf32> to vector<64x128xbf16>
    %c0_25 = arith.constant 0 : index
    %c0_26 = arith.constant 0 : index
    %c0_27 = arith.constant 0 : index
    %c0_28 = arith.constant 0 : index
    %39 = vector.load %arg9[%c0_25, %c0_26, %c0_27, %c0_28] : memref<2x3x128x128xbf16, #tpu.memory_space<vmem>>, vector<1x1x128x128xbf16>
    %40 = vector.shape_cast %39 : vector<1x1x128x128xbf16> to vector<128x128xbf16>
    %cst_29 = arith.constant dense<0.000000e+00> : vector<64x128xf32>
    %41 = tpu.matmul %38, %40, %cst_29 {dimension_numbers = #tpu.dot_dimension_numbers<[1], [0], [0], [1], [0, 0, 1, 1], [], []>} : vector<64x128xbf16>, vector<128x128xbf16>, vector<64x128xf32> -> vector<64x128xf32>
    %c0_30 = arith.constant 0 : index
    %c0_31 = arith.constant 0 : index
    %c0_32 = arith.constant 0 : index
    %c0_33 = arith.constant 0 : index
    %42 = vector.load %arg10[%c0_30, %c0_31, %c0_32, %c0_33] : memref<2x3x1x128xf32, #tpu.memory_space<vmem>>, vector<1x1x1x128xf32>
    %43 = vector.shape_cast %42 : vector<1x1x1x128xf32> to vector<1x128xf32>
    %44 = vector.broadcast %43 : vector<1x128xf32> to vector<64x128xf32>
    %45 = arith.addf %41, %44 : vector<64x128xf32>
    %46 = arith.addf %21, %45 : vector<64x128xf32>
    %47 = arith.mulf %46, %5 : vector<64x128xf32>
    %c8_34 = arith.constant 8 : index
    %c0_35 = arith.constant 0 : index
    %48 = vector.load %arg14[%c8_34, %c0_35] : memref<80x128xf32, #tpu.memory_space<vmem>>, vector<64x128xf32>
    tpu.vector_store %arg14[%c8_34, %c0_35], %47 {strides = array<i32>} : memref<80x128xf32, #tpu.memory_space<vmem>>, vector<64x128xf32>,
    %c6 = arith.constant 6 : index
    %c0_36 = arith.constant 0 : index
    %49 = vector.load %arg14[%c6, %c0_36] : memref<80x128xf32, #tpu.memory_space<vmem>>, vector<64x128xf32>
    %c10 = arith.constant 10 : index
    %c0_37 = arith.constant 0 : index
    %50 = vector.load %arg14[%c10, %c0_37] : memref<80x128xf32, #tpu.memory_space<vmem>>, vector<64x128xf32>
    %51 = arith.truncf %49 : vector<64x128xf32> to vector<64x128xbf16>
    %52 = arith.truncf %47 : vector<64x128xf32> to vector<64x128xbf16>
    %53 = arith.truncf %50 : vector<64x128xf32> to vector<64x128xbf16>
    %54 = tpu.concatenate %51, %52, %53 in 1 : vector<64x128xbf16>, vector<64x128xbf16>, vector<64x128xbf16> -> vector<64x384xbf16>
    %c0_38 = arith.constant 0 : index
    %c1 = arith.constant 1 : index
    %c0_39 = arith.constant 0 : index
    %c0_40 = arith.constant 0 : index
    %55 = vector.load %arg7[%c0_38, %c1, %c0_39, %c0_40] : memref<2x3x384x128xbf16, #tpu.memory_space<vmem>>, vector<1x1x384x128xbf16>
    %56 = vector.shape_cast %55 : vector<1x1x384x128xbf16> to vector<384x128xbf16>
    %cst_41 = arith.constant dense<0.000000e+00> : vector<64x128xf32>
    %57 = tpu.matmul %54, %56, %cst_41 {dimension_numbers = #tpu.dot_dimension_numbers<[1], [0], [0], [1], [0, 0, 1, 1], [], []>} : vector<64x384xbf16>, vector<384x128xbf16>, vector<64x128xf32> -> vector<64x128xf32>
    %c0_42 = arith.constant 0 : index
    %c1_43 = arith.constant 1 : index
    %c0_44 = arith.constant 0 : index
    %c0_45 = arith.constant 0 : index
    %58 = vector.load %arg8[%c0_42, %c1_43, %c0_44, %c0_45] : memref<2x3x1x128xf32, #tpu.memory_space<vmem>>, vector<1x1x1x128xf32>
    %59 = vector.shape_cast %58 : vector<1x1x1x128xf32> to vector<1x128xf32>
    %60 = vector.broadcast %59 : vector<1x128xf32> to vector<64x128xf32>
    %61 = arith.addf %57, %60 : vector<64x128xf32>
    %cst_46 = arith.constant 0.000000e+00 : f32
    %62 = vector.broadcast %cst_46 : f32 to vector<64x128xf32>
    %63 = arith.maximumf %61, %62 : vector<64x128xf32>
    %64 = arith.truncf %63 : vector<64x128xf32> to vector<64x128xbf16>
    %c0_47 = arith.constant 0 : index
    %c1_48 = arith.constant 1 : index
    %c0_49 = arith.constant 0 : index
    %c0_50 = arith.constant 0 : index
    %65 = vector.load %arg9[%c0_47, %c1_48, %c0_49, %c0_50] : memref<2x3x128x128xbf16, #tpu.memory_space<vmem>>, vector<1x1x128x128xbf16>
    %66 = vector.shape_cast %65 : vector<1x1x128x128xbf16> to vector<128x128xbf16>
    %cst_51 = arith.constant dense<0.000000e+00> : vector<64x128xf32>
    %67 = tpu.matmul %64, %66, %cst_51 {dimension_numbers = #tpu.dot_dimension_numbers<[1], [0], [0], [1], [0, 0, 1, 1], [], []>} : vector<64x128xbf16>, vector<128x128xbf16>, vector<64x128xf32> -> vector<64x128xf32>
    %c0_52 = arith.constant 0 : index
    %c1_53 = arith.constant 1 : index
    %c0_54 = arith.constant 0 : index
    %c0_55 = arith.constant 0 : index
    %68 = vector.load %arg10[%c0_52, %c1_53, %c0_54, %c0_55] : memref<2x3x1x128xf32, #tpu.memory_space<vmem>>, vector<1x1x1x128xf32>
    %69 = vector.shape_cast %68 : vector<1x1x1x128xf32> to vector<1x128xf32>
    %70 = vector.broadcast %69 : vector<1x128xf32> to vector<64x128xf32>
    %71 = arith.addf %67, %70 : vector<64x128xf32>
    %72 = arith.addf %47, %71 : vector<64x128xf32>
    %73 = arith.mulf %72, %5 : vector<64x128xf32>
    %c8_56 = arith.constant 8 : index
    %c0_57 = arith.constant 0 : index
    %74 = vector.load %arg14[%c8_56, %c0_57] : memref<80x128xf32, #tpu.memory_space<vmem>>, vector<64x128xf32>
    tpu.vector_store %arg14[%c8_56, %c0_57], %73 {strides = array<i32>} : memref<80x128xf32, #tpu.memory_space<vmem>>, vector<64x128xf32>,
    %c4 = arith.constant 4 : index
    %c0_58 = arith.constant 0 : index
    %75 = vector.load %arg14[%c4, %c0_58] : memref<80x128xf32, #tpu.memory_space<vmem>>, vector<64x128xf32>
    %c12 = arith.constant 12 : index
    %c0_59 = arith.constant 0 : index
    %76 = vector.load %arg14[%c12, %c0_59] : memref<80x128xf32, #tpu.memory_space<vmem>>, vector<64x128xf32>
    %77 = arith.truncf %75 : vector<64x128xf32> to vector<64x128xbf16>
    %78 = arith.truncf %73 : vector<64x128xf32> to vector<64x128xbf16>
    %79 = arith.truncf %76 : vector<64x128xf32> to vector<64x128xbf16>
    %80 = tpu.concatenate %77, %78, %79 in 1 : vector<64x128xbf16>, vector<64x128xbf16>, vector<64x128xbf16> -> vector<64x384xbf16>
    %c0_60 = arith.constant 0 : index
    %c2 = arith.constant 2 : index
    %c0_61 = arith.constant 0 : index
    %c0_62 = arith.constant 0 : index
    %81 = vector.load %arg7[%c0_60, %c2, %c0_61, %c0_62] : memref<2x3x384x128xbf16, #tpu.memory_space<vmem>>, vector<1x1x384x128xbf16>
    %82 = vector.shape_cast %81 : vector<1x1x384x128xbf16> to vector<384x128xbf16>
    %cst_63 = arith.constant dense<0.000000e+00> : vector<64x128xf32>
    %83 = tpu.matmul %80, %82, %cst_63 {dimension_numbers = #tpu.dot_dimension_numbers<[1], [0], [0], [1], [0, 0, 1, 1], [], []>} : vector<64x384xbf16>, vector<384x128xbf16>, vector<64x128xf32> -> vector<64x128xf32>
    %c0_64 = arith.constant 0 : index
    %c2_65 = arith.constant 2 : index
    %c0_66 = arith.constant 0 : index
    %c0_67 = arith.constant 0 : index
    %84 = vector.load %arg8[%c0_64, %c2_65, %c0_66, %c0_67] : memref<2x3x1x128xf32, #tpu.memory_space<vmem>>, vector<1x1x1x128xf32>
    %85 = vector.shape_cast %84 : vector<1x1x1x128xf32> to vector<1x128xf32>
    %86 = vector.broadcast %85 : vector<1x128xf32> to vector<64x128xf32>
    %87 = arith.addf %83, %86 : vector<64x128xf32>
    %cst_68 = arith.constant 0.000000e+00 : f32
    %88 = vector.broadcast %cst_68 : f32 to vector<64x128xf32>
    %89 = arith.maximumf %87, %88 : vector<64x128xf32>
    %90 = arith.truncf %89 : vector<64x128xf32> to vector<64x128xbf16>
    %c0_69 = arith.constant 0 : index
    %c2_70 = arith.constant 2 : index
    %c0_71 = arith.constant 0 : index
    %c0_72 = arith.constant 0 : index
    %91 = vector.load %arg9[%c0_69, %c2_70, %c0_71, %c0_72] : memref<2x3x128x128xbf16, #tpu.memory_space<vmem>>, vector<1x1x128x128xbf16>
    %92 = vector.shape_cast %91 : vector<1x1x128x128xbf16> to vector<128x128xbf16>
    %cst_73 = arith.constant dense<0.000000e+00> : vector<64x128xf32>
    %93 = tpu.matmul %90, %92, %cst_73 {dimension_numbers = #tpu.dot_dimension_numbers<[1], [0], [0], [1], [0, 0, 1, 1], [], []>} : vector<64x128xbf16>, vector<128x128xbf16>, vector<64x128xf32> -> vector<64x128xf32>
    %c0_74 = arith.constant 0 : index
    %c2_75 = arith.constant 2 : index
    %c0_76 = arith.constant 0 : index
    %c0_77 = arith.constant 0 : index
    %94 = vector.load %arg10[%c0_74, %c2_75, %c0_76, %c0_77] : memref<2x3x1x128xf32, #tpu.memory_space<vmem>>, vector<1x1x1x128xf32>
    %95 = vector.shape_cast %94 : vector<1x1x1x128xf32> to vector<1x128xf32>
    %96 = vector.broadcast %95 : vector<1x128xf32> to vector<64x128xf32>
    %97 = arith.addf %93, %96 : vector<64x128xf32>
    %98 = arith.addf %73, %97 : vector<64x128xf32>
    %99 = arith.mulf %98, %5 : vector<64x128xf32>
    %100 = arith.truncf %99 : vector<64x128xf32> to vector<64x128xbf16>
    %c0_78 = arith.constant 0 : index
    %c0_79 = arith.constant 0 : index
    %c0_80 = arith.constant 0 : index
    %101 = vector.load %arg11[%c0_78, %c0_79, %c0_80] : memref<2x128x128xbf16, #tpu.memory_space<vmem>>, vector<1x128x128xbf16>
    %102 = vector.shape_cast %101 : vector<1x128x128xbf16> to vector<128x128xbf16>
    %cst_81 = arith.constant dense<0.000000e+00> : vector<64x128xf32>
    %103 = tpu.matmul %100, %102, %cst_81 {dimension_numbers = #tpu.dot_dimension_numbers<[1], [0], [0], [1], [0, 0, 1, 1], [], []>} : vector<64x128xbf16>, vector<128x128xbf16>, vector<64x128xf32> -> vector<64x128xf32>
    %c0_82 = arith.constant 0 : index
    %c0_83 = arith.constant 0 : index
    %c0_84 = arith.constant 0 : index
    %104 = vector.load %arg12[%c0_82, %c0_83, %c0_84] : memref<2x1x128xf32, #tpu.memory_space<vmem>>, vector<1x1x128xf32>
    %105 = vector.shape_cast %104 : vector<1x1x128xf32> to vector<1x128xf32>
    %106 = vector.broadcast %105 : vector<1x128xf32> to vector<64x128xf32>
    %107 = arith.addf %103, %106 : vector<64x128xf32>
    %108 = arith.mulf %107, %5 : vector<64x128xf32>
    %c0_85 = arith.constant 0 : index
    %c0_86 = arith.constant 0 : index
    %c0_87 = arith.constant 0 : index
    %c0_88 = arith.constant 0 : index
    %109 = vector.load %arg13[%c0_85, %c0_86, %c0_87, %c0_88] : memref<2x1x64x128xf32, #tpu.memory_space<vmem>>, vector<1x1x64x128xf32>
    %110 = vector.shape_cast %109 : vector<1x1x64x128xf32> to vector<64x128xf32>
    %111 = vector.shape_cast %108 : vector<64x128xf32> to vector<1x1x64x128xf32>
    tpu.vector_store %arg13[%c0_85, %c0_86, %c0_87, %c0_88], %111 {strides = array<i32>} : memref<2x1x64x128xf32, #tpu.memory_space<vmem>>, vector<1x1x64x128xf32>,
    %cst_89 = arith.constant -1.000000e+30 : f32
    %112 = vector.broadcast %cst_89 : f32 to vector<64x128xf32>
    %113 = arith.select %8, %108, %112 : vector<64x128xi1>, vector<64x128xf32>
    %cst_90 = arith.constant dense<0xFF800000> : vector<64xf32>
    %114 = vector.multi_reduction <maximumf>, %113, %cst_90 [1] : vector<64x128xf32> to vector<64xf32>
    %115 = vector.shape_cast %114 : vector<64xf32> to vector<64x1xf32>
    %116 = vector.broadcast %115 : vector<64x1xf32> to vector<64x128xf32>
    %117 = arith.subf %113, %116 : vector<64x128xf32>
    %118 = math.exp %117 : vector<64x128xf32>
    %cst_91 = arith.constant dense<0.000000e+00> : vector<64xf32>
    %119 = vector.multi_reduction <add>, %118, %cst_91 [1] : vector<64x128xf32> to vector<64xf32>
    %120 = vector.shape_cast %119 : vector<64xf32> to vector<64x1xf32>
    %121 = tpu.reciprocal %120 {approx = true} : vector<64x1xf32> -> vector<64x1xf32>
    %122 = vector.broadcast %121 : vector<64x1xf32> to vector<64x128xf32>
    %123 = arith.mulf %118, %122 : vector<64x128xf32>
    %124 = arith.mulf %123, %5 : vector<64x128xf32>
    %125 = arith.truncf %124 : vector<64x128xf32> to vector<64x128xbf16>
    %c0_92 = arith.constant 0 : index
    %c0_93 = arith.constant 0 : index
    %c0_94 = arith.constant 0 : index
    %126 = vector.load %arg5[%c0_92, %c0_93, %c0_94] : memref<1x128x128xbf16, #tpu.memory_space<vmem>>, vector<1x128x128xbf16>
    %127 = vector.shape_cast %126 : vector<1x128x128xbf16> to vector<128x128xbf16>
    %c0_95 = arith.constant 0 : index
    %c0_96 = arith.constant 0 : index
    %c0_97 = arith.constant 0 : index
    %128 = vector.load %arg6[%c0_95, %c0_96, %c0_97] : memref<1x1x128xf32, #tpu.memory_space<vmem>>, vector<1x1x128xf32>
    %129 = vector.shape_cast %128 : vector<1x1x128xf32> to vector<1x128xf32>
    %cst_98 = arith.constant dense<0.000000e+00> : vector<64x128xf32>
    %130 = tpu.matmul %125, %127, %cst_98 {dimension_numbers = #tpu.dot_dimension_numbers<[1], [0], [0], [1], [0, 0, 1, 1], [], []>} : vector<64x128xbf16>, vector<128x128xbf16>, vector<64x128xf32> -> vector<64x128xf32>
    %131 = vector.broadcast %129 : vector<1x128xf32> to vector<64x128xf32>
    %132 = arith.addf %130, %131 : vector<64x128xf32>
    %133 = arith.mulf %132, %13 : vector<64x128xf32>
    %c8_99 = arith.constant 8 : index
    %c0_100 = arith.constant 0 : index
    %134 = vector.load %arg14[%c8_99, %c0_100] : memref<80x128xf32, #tpu.memory_space<vmem>>, vector<64x128xf32>
    tpu.vector_store %arg14[%c8_99, %c0_100], %133 {strides = array<i32>} : memref<80x128xf32, #tpu.memory_space<vmem>>, vector<64x128xf32>,
    %c7_101 = arith.constant 7 : index
    %c0_102 = arith.constant 0 : index
    %135 = vector.load %arg14[%c7_101, %c0_102] : memref<80x128xf32, #tpu.memory_space<vmem>>, vector<64x128xf32>
    %c9_103 = arith.constant 9 : index
    %c0_104 = arith.constant 0 : index
    %136 = vector.load %arg14[%c9_103, %c0_104] : memref<80x128xf32, #tpu.memory_space<vmem>>, vector<64x128xf32>
    %137 = arith.truncf %135 : vector<64x128xf32> to vector<64x128xbf16>
    %138 = arith.truncf %133 : vector<64x128xf32> to vector<64x128xbf16>
    %139 = arith.truncf %136 : vector<64x128xf32> to vector<64x128xbf16>
    %140 = tpu.concatenate %137, %138, %139 in 1 : vector<64x128xbf16>, vector<64x128xbf16>, vector<64x128xbf16> -> vector<64x384xbf16>
    %c1_105 = arith.constant 1 : index
    %c0_106 = arith.constant 0 : index
    %c0_107 = arith.constant 0 : index
    %c0_108 = arith.constant 0 : index
    %141 = vector.load %arg7[%c1_105, %c0_106, %c0_107, %c0_108] : memref<2x3x384x128xbf16, #tpu.memory_space<vmem>>, vector<1x1x384x128xbf16>
    %142 = vector.shape_cast %141 : vector<1x1x384x128xbf16> to vector<384x128xbf16>
    %cst_109 = arith.constant dense<0.000000e+00> : vector<64x128xf32>
    %143 = tpu.matmul %140, %142, %cst_109 {dimension_numbers = #tpu.dot_dimension_numbers<[1], [0], [0], [1], [0, 0, 1, 1], [], []>} : vector<64x384xbf16>, vector<384x128xbf16>, vector<64x128xf32> -> vector<64x128xf32>
    %c1_110 = arith.constant 1 : index
    %c0_111 = arith.constant 0 : index
    %c0_112 = arith.constant 0 : index
    %c0_113 = arith.constant 0 : index
    %144 = vector.load %arg8[%c1_110, %c0_111, %c0_112, %c0_113] : memref<2x3x1x128xf32, #tpu.memory_space<vmem>>, vector<1x1x1x128xf32>
    %145 = vector.shape_cast %144 : vector<1x1x1x128xf32> to vector<1x128xf32>
    %146 = vector.broadcast %145 : vector<1x128xf32> to vector<64x128xf32>
    %147 = arith.addf %143, %146 : vector<64x128xf32>
    %cst_114 = arith.constant 0.000000e+00 : f32
    %148 = vector.broadcast %cst_114 : f32 to vector<64x128xf32>
    %149 = arith.maximumf %147, %148 : vector<64x128xf32>
    %150 = arith.truncf %149 : vector<64x128xf32> to vector<64x128xbf16>
    %c1_115 = arith.constant 1 : index
    %c0_116 = arith.constant 0 : index
    %c0_117 = arith.constant 0 : index
    %c0_118 = arith.constant 0 : index
    %151 = vector.load %arg9[%c1_115, %c0_116, %c0_117, %c0_118] : memref<2x3x128x128xbf16, #tpu.memory_space<vmem>>, vector<1x1x128x128xbf16>
    %152 = vector.shape_cast %151 : vector<1x1x128x128xbf16> to vector<128x128xbf16>
    %cst_119 = arith.constant dense<0.000000e+00> : vector<64x128xf32>
    %153 = tpu.matmul %150, %152, %cst_119 {dimension_numbers = #tpu.dot_dimension_numbers<[1], [0], [0], [1], [0, 0, 1, 1], [], []>} : vector<64x128xbf16>, vector<128x128xbf16>, vector<64x128xf32> -> vector<64x128xf32>
    %c1_120 = arith.constant 1 : index
    %c0_121 = arith.constant 0 : index
    %c0_122 = arith.constant 0 : index
    %c0_123 = arith.constant 0 : index
    %154 = vector.load %arg10[%c1_120, %c0_121, %c0_122, %c0_123] : memref<2x3x1x128xf32, #tpu.memory_space<vmem>>, vector<1x1x1x128xf32>
    %155 = vector.shape_cast %154 : vector<1x1x1x128xf32> to vector<1x128xf32>
    %156 = vector.broadcast %155 : vector<1x128xf32> to vector<64x128xf32>
    %157 = arith.addf %153, %156 : vector<64x128xf32>
    %158 = arith.addf %133, %157 : vector<64x128xf32>
    %159 = arith.mulf %158, %5 : vector<64x128xf32>
    %c8_124 = arith.constant 8 : index
    %c0_125 = arith.constant 0 : index
    %160 = vector.load %arg14[%c8_124, %c0_125] : memref<80x128xf32, #tpu.memory_space<vmem>>, vector<64x128xf32>
    tpu.vector_store %arg14[%c8_124, %c0_125], %159 {strides = array<i32>} : memref<80x128xf32, #tpu.memory_space<vmem>>, vector<64x128xf32>,
    %c6_126 = arith.constant 6 : index
    %c0_127 = arith.constant 0 : index
    %161 = vector.load %arg14[%c6_126, %c0_127] : memref<80x128xf32, #tpu.memory_space<vmem>>, vector<64x128xf32>
    %c10_128 = arith.constant 10 : index
    %c0_129 = arith.constant 0 : index
    %162 = vector.load %arg14[%c10_128, %c0_129] : memref<80x128xf32, #tpu.memory_space<vmem>>, vector<64x128xf32>
    %163 = arith.truncf %161 : vector<64x128xf32> to vector<64x128xbf16>
    %164 = arith.truncf %159 : vector<64x128xf32> to vector<64x128xbf16>
    %165 = arith.truncf %162 : vector<64x128xf32> to vector<64x128xbf16>
    %166 = tpu.concatenate %163, %164, %165 in 1 : vector<64x128xbf16>, vector<64x128xbf16>, vector<64x128xbf16> -> vector<64x384xbf16>
    %c1_130 = arith.constant 1 : index
    %c1_131 = arith.constant 1 : index
    %c0_132 = arith.constant 0 : index
    %c0_133 = arith.constant 0 : index
    %167 = vector.load %arg7[%c1_130, %c1_131, %c0_132, %c0_133] : memref<2x3x384x128xbf16, #tpu.memory_space<vmem>>, vector<1x1x384x128xbf16>
    %168 = vector.shape_cast %167 : vector<1x1x384x128xbf16> to vector<384x128xbf16>
    %cst_134 = arith.constant dense<0.000000e+00> : vector<64x128xf32>
    %169 = tpu.matmul %166, %168, %cst_134 {dimension_numbers = #tpu.dot_dimension_numbers<[1], [0], [0], [1], [0, 0, 1, 1], [], []>} : vector<64x384xbf16>, vector<384x128xbf16>, vector<64x128xf32> -> vector<64x128xf32>
    %c1_135 = arith.constant 1 : index
    %c1_136 = arith.constant 1 : index
    %c0_137 = arith.constant 0 : index
    %c0_138 = arith.constant 0 : index
    %170 = vector.load %arg8[%c1_135, %c1_136, %c0_137, %c0_138] : memref<2x3x1x128xf32, #tpu.memory_space<vmem>>, vector<1x1x1x128xf32>
    %171 = vector.shape_cast %170 : vector<1x1x1x128xf32> to vector<1x128xf32>
    %172 = vector.broadcast %171 : vector<1x128xf32> to vector<64x128xf32>
    %173 = arith.addf %169, %172 : vector<64x128xf32>
    %cst_139 = arith.constant 0.000000e+00 : f32
    %174 = vector.broadcast %cst_139 : f32 to vector<64x128xf32>
    %175 = arith.maximumf %173, %174 : vector<64x128xf32>
    %176 = arith.truncf %175 : vector<64x128xf32> to vector<64x128xbf16>
    %c1_140 = arith.constant 1 : index
    %c1_141 = arith.constant 1 : index
    %c0_142 = arith.constant 0 : index
    %c0_143 = arith.constant 0 : index
    %177 = vector.load %arg9[%c1_140, %c1_141, %c0_142, %c0_143] : memref<2x3x128x128xbf16, #tpu.memory_space<vmem>>, vector<1x1x128x128xbf16>
    %178 = vector.shape_cast %177 : vector<1x1x128x128xbf16> to vector<128x128xbf16>
    %cst_144 = arith.constant dense<0.000000e+00> : vector<64x128xf32>
    %179 = tpu.matmul %176, %178, %cst_144 {dimension_numbers = #tpu.dot_dimension_numbers<[1], [0], [0], [1], [0, 0, 1, 1], [], []>} : vector<64x128xbf16>, vector<128x128xbf16>, vector<64x128xf32> -> vector<64x128xf32>
    %c1_145 = arith.constant 1 : index
    %c1_146 = arith.constant 1 : index
    %c0_147 = arith.constant 0 : index
    %c0_148 = arith.constant 0 : index
    %180 = vector.load %arg10[%c1_145, %c1_146, %c0_147, %c0_148] : memref<2x3x1x128xf32, #tpu.memory_space<vmem>>, vector<1x1x1x128xf32>
    %181 = vector.shape_cast %180 : vector<1x1x1x128xf32> to vector<1x128xf32>
    %182 = vector.broadcast %181 : vector<1x128xf32> to vector<64x128xf32>
    %183 = arith.addf %179, %182 : vector<64x128xf32>
    %184 = arith.addf %159, %183 : vector<64x128xf32>
    %185 = arith.mulf %184, %5 : vector<64x128xf32>
    %c8_149 = arith.constant 8 : index
    %c0_150 = arith.constant 0 : index
    %186 = vector.load %arg14[%c8_149, %c0_150] : memref<80x128xf32, #tpu.memory_space<vmem>>, vector<64x128xf32>
    tpu.vector_store %arg14[%c8_149, %c0_150], %185 {strides = array<i32>} : memref<80x128xf32, #tpu.memory_space<vmem>>, vector<64x128xf32>,
    %c4_151 = arith.constant 4 : index
    %c0_152 = arith.constant 0 : index
    %187 = vector.load %arg14[%c4_151, %c0_152] : memref<80x128xf32, #tpu.memory_space<vmem>>, vector<64x128xf32>
    %c12_153 = arith.constant 12 : index
    %c0_154 = arith.constant 0 : index
    %188 = vector.load %arg14[%c12_153, %c0_154] : memref<80x128xf32, #tpu.memory_space<vmem>>, vector<64x128xf32>
    %189 = arith.truncf %187 : vector<64x128xf32> to vector<64x128xbf16>
    %190 = arith.truncf %185 : vector<64x128xf32> to vector<64x128xbf16>
    %191 = arith.truncf %188 : vector<64x128xf32> to vector<64x128xbf16>
    %192 = tpu.concatenate %189, %190, %191 in 1 : vector<64x128xbf16>, vector<64x128xbf16>, vector<64x128xbf16> -> vector<64x384xbf16>
    %c1_155 = arith.constant 1 : index
    %c2_156 = arith.constant 2 : index
    %c0_157 = arith.constant 0 : index
    %c0_158 = arith.constant 0 : index
    %193 = vector.load %arg7[%c1_155, %c2_156, %c0_157, %c0_158] : memref<2x3x384x128xbf16, #tpu.memory_space<vmem>>, vector<1x1x384x128xbf16>
    %194 = vector.shape_cast %193 : vector<1x1x384x128xbf16> to vector<384x128xbf16>
    %cst_159 = arith.constant dense<0.000000e+00> : vector<64x128xf32>
    %195 = tpu.matmul %192, %194, %cst_159 {dimension_numbers = #tpu.dot_dimension_numbers<[1], [0], [0], [1], [0, 0, 1, 1], [], []>} : vector<64x384xbf16>, vector<384x128xbf16>, vector<64x128xf32> -> vector<64x128xf32>
    %c1_160 = arith.constant 1 : index
    %c2_161 = arith.constant 2 : index
    %c0_162 = arith.constant 0 : index
    %c0_163 = arith.constant 0 : index
    %196 = vector.load %arg8[%c1_160, %c2_161, %c0_162, %c0_163] : memref<2x3x1x128xf32, #tpu.memory_space<vmem>>, vector<1x1x1x128xf32>
    %197 = vector.shape_cast %196 : vector<1x1x1x128xf32> to vector<1x128xf32>
    %198 = vector.broadcast %197 : vector<1x128xf32> to vector<64x128xf32>
    %199 = arith.addf %195, %198 : vector<64x128xf32>
    %cst_164 = arith.constant 0.000000e+00 : f32
    %200 = vector.broadcast %cst_164 : f32 to vector<64x128xf32>
    %201 = arith.maximumf %199, %200 : vector<64x128xf32>
    %202 = arith.truncf %201 : vector<64x128xf32> to vector<64x128xbf16>
    %c1_165 = arith.constant 1 : index
    %c2_166 = arith.constant 2 : index
    %c0_167 = arith.constant 0 : index
    %c0_168 = arith.constant 0 : index
    %203 = vector.load %arg9[%c1_165, %c2_166, %c0_167, %c0_168] : memref<2x3x128x128xbf16, #tpu.memory_space<vmem>>, vector<1x1x128x128xbf16>
    %204 = vector.shape_cast %203 : vector<1x1x128x128xbf16> to vector<128x128xbf16>
    %cst_169 = arith.constant dense<0.000000e+00> : vector<64x128xf32>
    %205 = tpu.matmul %202, %204, %cst_169 {dimension_numbers = #tpu.dot_dimension_numbers<[1], [0], [0], [1], [0, 0, 1, 1], [], []>} : vector<64x128xbf16>, vector<128x128xbf16>, vector<64x128xf32> -> vector<64x128xf32>
    %c1_170 = arith.constant 1 : index
    %c2_171 = arith.constant 2 : index
    %c0_172 = arith.constant 0 : index
    %c0_173 = arith.constant 0 : index
    %206 = vector.load %arg10[%c1_170, %c2_171, %c0_172, %c0_173] : memref<2x3x1x128xf32, #tpu.memory_space<vmem>>, vector<1x1x1x128xf32>
    %207 = vector.shape_cast %206 : vector<1x1x1x128xf32> to vector<1x128xf32>
    %208 = vector.broadcast %207 : vector<1x128xf32> to vector<64x128xf32>
    %209 = arith.addf %205, %208 : vector<64x128xf32>
    %210 = arith.addf %185, %209 : vector<64x128xf32>
    %211 = arith.mulf %210, %5 : vector<64x128xf32>
    %212 = arith.truncf %211 : vector<64x128xf32> to vector<64x128xbf16>
    %c1_174 = arith.constant 1 : index
    %c0_175 = arith.constant 0 : index
    %c0_176 = arith.constant 0 : index
    %213 = vector.load %arg11[%c1_174, %c0_175, %c0_176] : memref<2x128x128xbf16, #tpu.memory_space<vmem>>, vector<1x128x128xbf16>
    %214 = vector.shape_cast %213 : vector<1x128x128xbf16> to vector<128x128xbf16>
    %cst_177 = arith.constant dense<0.000000e+00> : vector<64x128xf32>
    %215 = tpu.matmul %212, %214, %cst_177 {dimension_numbers = #tpu.dot_dimension_numbers<[1], [0], [0], [1], [0, 0, 1, 1], [], []>} : vector<64x128xbf16>, vector<128x128xbf16>, vector<64x128xf32> -> vector<64x128xf32>
    %c1_178 = arith.constant 1 : index
    %c0_179 = arith.constant 0 : index
    %c0_180 = arith.constant 0 : index
    %216 = vector.load %arg12[%c1_178, %c0_179, %c0_180] : memref<2x1x128xf32, #tpu.memory_space<vmem>>, vector<1x1x128xf32>
    %217 = vector.shape_cast %216 : vector<1x1x128xf32> to vector<1x128xf32>
    %218 = vector.broadcast %217 : vector<1x128xf32> to vector<64x128xf32>
    %219 = arith.addf %215, %218 : vector<64x128xf32>
    %220 = arith.mulf %219, %5 : vector<64x128xf32>
    %c1_181 = arith.constant 1 : index
    %c0_182 = arith.constant 0 : index
    %c0_183 = arith.constant 0 : index
    %c0_184 = arith.constant 0 : index
    %221 = vector.load %arg13[%c1_181, %c0_182, %c0_183, %c0_184] : memref<2x1x64x128xf32, #tpu.memory_space<vmem>>, vector<1x1x64x128xf32>
    %222 = vector.shape_cast %221 : vector<1x1x64x128xf32> to vector<64x128xf32>
    %223 = vector.shape_cast %220 : vector<64x128xf32> to vector<1x1x64x128xf32>
    tpu.vector_store %arg13[%c1_181, %c0_182, %c0_183, %c0_184], %223 {strides = array<i32>} : memref<2x1x64x128xf32, #tpu.memory_space<vmem>>, vector<1x1x64x128xf32>,
    return
  }
  func.func @transform_0(%arg0: i32) -> (i32, i32, i32) {
    %c0_i32 = arith.constant 0 : i32
    %c0_i32_0 = arith.constant 0 : i32
    %c0_i32_1 = arith.constant 0 : i32
    return %arg0, %c0_i32, %c0_i32_0 : i32, i32, i32
  }
  func.func @transform_1(%arg0: i32) -> (i32, i32, i32) {
    %c0_i32 = arith.constant 0 : i32
    %c0_i32_0 = arith.constant 0 : i32
    %c0_i32_1 = arith.constant 0 : i32
    return %arg0, %c0_i32, %c0_i32_0 : i32, i32, i32
  }
  func.func @transform_2(%arg0: i32) -> (i32, i32) {
    %c0_i32 = arith.constant 0 : i32
    %c0_i32_0 = arith.constant 0 : i32
    %c0_i32_1 = arith.constant 0 : i32
    return %c0_i32, %c0_i32_0 : i32, i32
  }
  func.func @transform_3(%arg0: i32) -> (i32, i32) {
    %c0_i32 = arith.constant 0 : i32
    %c0_i32_0 = arith.constant 0 : i32
    %c0_i32_1 = arith.constant 0 : i32
    return %c0_i32, %c0_i32_0 : i32, i32
  }
  func.func @transform_4(%arg0: i32) -> (i32, i32, i32) {
    %c0_i32 = arith.constant 0 : i32
    %c0_i32_0 = arith.constant 0 : i32
    %c0_i32_1 = arith.constant 0 : i32
    %c0_i32_2 = arith.constant 0 : i32
    return %c0_i32, %c0_i32_0, %c0_i32_1 : i32, i32, i32
  }
  func.func @transform_5(%arg0: i32) -> (i32, i32, i32) {
    %c0_i32 = arith.constant 0 : i32
    %c0_i32_0 = arith.constant 0 : i32
    %c0_i32_1 = arith.constant 0 : i32
    %c0_i32_2 = arith.constant 0 : i32
    return %c0_i32, %c0_i32_0, %c0_i32_1 : i32, i32, i32
  }
  func.func @transform_6(%arg0: i32) -> (i32, i32, i32, i32) {
    %c0_i32 = arith.constant 0 : i32
    %c0_i32_0 = arith.constant 0 : i32
    %c0_i32_1 = arith.constant 0 : i32
    %c0_i32_2 = arith.constant 0 : i32
    %c0_i32_3 = arith.constant 0 : i32
    return %c0_i32, %c0_i32_0, %c0_i32_1, %c0_i32_2 : i32, i32, i32, i32
  }
  func.func @transform_7(%arg0: i32) -> (i32, i32, i32, i32) {
    %c0_i32 = arith.constant 0 : i32
    %c0_i32_0 = arith.constant 0 : i32
    %c0_i32_1 = arith.constant 0 : i32
    %c0_i32_2 = arith.constant 0 : i32
    %c0_i32_3 = arith.constant 0 : i32
    return %c0_i32, %c0_i32_0, %c0_i32_1, %c0_i32_2 : i32, i32, i32, i32
  }
  func.func @transform_8(%arg0: i32) -> (i32, i32, i32, i32) {
    %c0_i32 = arith.constant 0 : i32
    %c0_i32_0 = arith.constant 0 : i32
    %c0_i32_1 = arith.constant 0 : i32
    %c0_i32_2 = arith.constant 0 : i32
    %c0_i32_3 = arith.constant 0 : i32
    return %c0_i32, %c0_i32_0, %c0_i32_1, %c0_i32_2 : i32, i32, i32, i32
  }
  func.func @transform_9(%arg0: i32) -> (i32, i32, i32, i32) {
    %c0_i32 = arith.constant 0 : i32
    %c0_i32_0 = arith.constant 0 : i32
    %c0_i32_1 = arith.constant 0 : i32
    %c0_i32_2 = arith.constant 0 : i32
    %c0_i32_3 = arith.constant 0 : i32
    return %c0_i32, %c0_i32_0, %c0_i32_1, %c0_i32_2 : i32, i32, i32, i32
  }
  func.func @transform_10(%arg0: i32) -> (i32, i32, i32) {
    %c0_i32 = arith.constant 0 : i32
    %c0_i32_0 = arith.constant 0 : i32
    %c0_i32_1 = arith.constant 0 : i32
    %c0_i32_2 = arith.constant 0 : i32
    return %c0_i32, %c0_i32_0, %c0_i32_1 : i32, i32, i32
  }
  func.func @transform_11(%arg0: i32) -> (i32, i32, i32) {
    %c0_i32 = arith.constant 0 : i32
    %c0_i32_0 = arith.constant 0 : i32
    %c0_i32_1 = arith.constant 0 : i32
    %c0_i32_2 = arith.constant 0 : i32
    return %c0_i32, %c0_i32_0, %c0_i32_1 : i32, i32, i32
  }
  func.func @transform_12(%arg0: i32) -> (i32, i32, i32, i32) {
    %c0_i32 = arith.constant 0 : i32
    %c0_i32_0 = arith.constant 0 : i32
    %c0_i32_1 = arith.constant 0 : i32
    %c0_i32_2 = arith.constant 0 : i32
    return %c0_i32, %arg0, %c0_i32_0, %c0_i32_1 : i32, i32, i32, i32
  }
}

</mosaic_0001>

<llo_original>
// kernel: tpu_custom_call.1
$region0: #{tpu_custom_call.1}
  #allocation0 [shape = 'u32[]', space=smem, size = 0x4, offset = 0x4, fixed_abs, tag = 'smem constant byte address 0x4 - core index']
  #allocation1 [shape = 'u32[144,128]{1,0:T(1,128)}', space=vmem, size = 0x12000, scoped, tag = 'internal scratch']
  #allocation2 [shape = 'f32[80,128]{1,0:T(8,128)}', space=vmem, size = 0xa000, scoped, tag = 'scratch operand']
  #allocation13 [shape = 's32[]', space=sflag, size = 0x4, offset = 0, fixed_abs, tag = 'sflag constant byte address 0x0 - dummy sync flag']
  %s0 = inlined_call_operand.hbm [shape: bf16[2,64,128], index: 0, kind: input, shape index: {}]
  %s1 = inlined_call_operand.vmem [shape: f32[2,64,1], index: 1, kind: input, shape index: {}]
  %s2 = inlined_call_operand.hbm [shape: bf16[128,128], index: 2, kind: input, shape index: {}]
  %s3 = inlined_call_operand.vmem [shape: f32[1,128], index: 3, kind: input, shape index: {}]
  %s4 = inlined_call_operand.hbm [shape: bf16[1,128,128], index: 4, kind: input, shape index: {}]
  %s5 = inlined_call_operand.vmem [shape: f32[1,1,128], index: 5, kind: input, shape index: {}]
  %s6 = inlined_call_operand.hbm [shape: bf16[2,3,384,128], index: 6, kind: input, shape index: {}]
  %s7 = inlined_call_operand.vmem [shape: f32[2,3,1,128], index: 7, kind: input, shape index: {}]
  %s8 = inlined_call_operand.hbm [shape: bf16[2,3,128,128], index: 8, kind: input, shape index: {}]
  %s9 = inlined_call_operand.vmem [shape: f32[2,3,1,128], index: 9, kind: input, shape index: {}]
  %s10 = inlined_call_operand.vmem [shape: bf16[2,128,128], index: 10, kind: input, shape index: {}]
  %s11 = inlined_call_operand.vmem [shape: f32[2,1,128], index: 11, kind: input, shape index: {}]
  %s12 = inlined_call_operand.hbm [shape: f32[2,2,64,128], index: 12, kind: output, shape index: {}]
  %s13 = sld [smem:[#allocation0]]
  $region101: #{tpu_custom_call.1} parent=0
    _
  %s15 = ssub.s32 1, %s13
  %s16 = scalar_select 0, %s15, %s13
  $region1: #{tpu_custom_call.1} parent=0
    #allocation3 [shape = 'u8[32768]{0}', space=vmem, size = 0x8000, scoped, tag = 'input window, operand 0']
    #allocation4 [shape = 's32[2]{0}', space=sflag, size = 0x8, scoped, tag = 'scoped memory for tpu_custom_call.1']
    #allocation5 [shape = 's32[2]{0}', space=sflag, size = 0x8, scoped, tag = 'scoped memory for tpu_custom_call.1']
    #allocation6 [shape = 'u8[32768]{0}', space=vmem, size = 0x8000, scoped, tag = 'input window, operand 2, single buffered']
    #allocation7 [shape = 's32[1]{0}', space=sflag, size = 0x4, scoped, tag = 'scoped memory for tpu_custom_call.1']
    #allocation8 [shape = 'u8[32768]{0}', space=vmem, size = 0x8000, scoped, tag = 'input window, operand 4, single buffered']
    #allocation9 [shape = 'u8[589824]{0}', space=vmem, size = 0x90000, scoped, tag = 'input window, operand 6, single buffered']
    #allocation10 [shape = 's32[1]{0}', space=sflag, size = 0x4, scoped, tag = 'scoped memory for tpu_custom_call.1']
    #allocation11 [shape = 'u8[196608]{0}', space=vmem, size = 0x30000, scoped, tag = 'input window, operand 8, single buffered']
    #allocation12 [shape = 'u8[131072]{0}', space=vmem, size = 0x20000, scoped, tag = 'output window, operand 0']
    %17 = vsyncpa [#allocation4], 0
    %s18 = scalar_lea.sflag [#allocation4], 1
    %19 = vsyncpa %s18, 0
    %20 = vsyncpa [#allocation7], 0
    %21 = vsyncpa [#allocation10], 0
    %22 = vsyncpa [#allocation5], 0
    %s23 = scalar_lea.sflag [#allocation5], 1
    %24 = vsyncpa %s23, 0
    loop: start=0, step=1, limit=4
    $region2: #{tpu_custom_call.1} parent=1 // loop_pre_header
      _
    $region3: #{tpu_custom_call.1} parent=1 // loop_header
      %s26 = sphi 0, %s30
      %p27 = scmp.ge.s32.totalorder %s26, 4
      %s36 = sphi 0, %s38
      %s39 = sphi 0, %s36
      %s40 = sphi 0, %s39
      %s56 = sphi 0, %s40
      %s62 = sphi 0, %s64
      %s65 = sphi 0, %s62
      %s66 = sphi 0, %s65
      %s82 = sphi 0, %s66
      %s86 = sphi 0, %s86
      %s88 = sphi 0, %s86
      %s89 = sphi 0, %s88
      %s103 = sphi 0, %s89
      %s107 = sphi 0, %s107
      %s109 = sphi 0, %s107
      %s110 = sphi 0, %s109
      %s124 = sphi 0, %s110
      %s128 = sphi 0, %s128
      %s130 = sphi 0, %s128
      %s131 = sphi 0, %s130
      %s145 = sphi 0, %s131
      %s149 = sphi 0, %s149
      %s151 = sphi 0, %s149
      %s152 = sphi 0, %s151
      %s166 = sphi 0, %s152
      %s170 = sphi 0, %s170
      %s172 = sphi 0, %s170
      %s173 = sphi 0, %s172
      %s187 = sphi 0, %s173
      %s191 = sphi 0, %s191
      %s193 = sphi 0, %s191
      %s194 = sphi 0, %s193
      %s208 = sphi 0, %s194
      %s212 = sphi 0, %s212
      %s214 = sphi 0, %s212
      %s215 = sphi 0, %s214
      %s229 = sphi 0, %s215
      %s233 = sphi 0, %s233
      %s235 = sphi 0, %s233
      %s236 = sphi 0, %s235
      %s250 = sphi 0, %s236
      %s254 = sphi 0, %s254
      %s256 = sphi 0, %s254
      %s257 = sphi 0, %s256
      %s271 = sphi 0, %s257
      %s275 = sphi 0, %s275
      %s277 = sphi 0, %s275
      %s278 = sphi 0, %s277
      %s292 = sphi 0, %s278
      %s298 = sphi 0, %s300
      %s301 = sphi 0, %s298
      %s302 = sphi 0, %s301
      %s318 = sphi 0, %s302
    $region4: #{tpu_custom_call.1} parent=1 // loop_header_branch
      %29 = sbr.rel (%p27) target = $region8
    $region5: #{tpu_custom_call.1} parent=1 // loop_body
      %s31 = ssub.s32 %s26, 1
      %s32 = ssub.s32 %s26, 2
      %s33 = sadd.s32 %s26, 1
      %s34 = ssub.s32 %s26, %s33
      %p35 = scmp.eq.s32.totalorder %s34, 0
      %s37 = sadd.s32 %s36, 1
      %s38 = scalar_select %p35, %s36, %s37
      %p41 = pneg %p35
      %p42 = scmp.eq.s32.totalorder %s26, 1
      %p43 = por %p41, %p42
      %p44 = scmp.ne.s32.totalorder %s36, %s39
      %p45 = scmp.eq.s32.totalorder %s26, 0
      %p46 = por %p44, %p45
      %p47 = scmp.ne.s32.totalorder %s36, %s39
      %p48 = scmp.eq.s32.totalorder %s31, 1
      %p49 = por %p47, %p48
      %p50 = scmp.ne.s32.totalorder %s39, %s40
      %p51 = scmp.eq.s32.totalorder %s31, 0
      %p52 = por %p50, %p51
      %p53 = scmp.ne.s32.totalorder %s39, %s40
      %p54 = scmp.eq.s32.totalorder %s32, 1
      %p55 = por %p53, %p54
      %p57 = scmp.ne.s32.totalorder %s40, %s56
      %p58 = scmp.eq.s32.totalorder %s32, 0
      %p59 = por %p57, %p58
      %s60 = ssub.s32 %s26, %s33
      %p61 = scmp.eq.s32.totalorder %s60, 0
      %s63 = sadd.s32 %s62, 1
      %s64 = scalar_select %p61, %s62, %s63
      %p67 = pneg %p61
      %p68 = scmp.eq.s32.totalorder %s26, 1
      %p69 = por %p67, %p68
      %p70 = scmp.ne.s32.totalorder %s62, %s65
      %p71 = scmp.eq.s32.totalorder %s26, 0
      %p72 = por %p70, %p71
      %p73 = scmp.ne.s32.totalorder %s62, %s65
      %p74 = scmp.eq.s32.totalorder %s31, 1
      %p75 = por %p73, %p74
      %p76 = scmp.ne.s32.totalorder %s65, %s66
      %p77 = scmp.eq.s32.totalorder %s31, 0
      %p78 = por %p76, %p77
      %p79 = scmp.ne.s32.totalorder %s65, %s66
      %p80 = scmp.eq.s32.totalorder %s32, 1
      %p81 = por %p79, %p80
      %p83 = scmp.ne.s32.totalorder %s66, %s82
      %p84 = scmp.eq.s32.totalorder %s32, 0
      %p85 = por %p83, %p84
      %s87 = sadd.s32 %s86, 1
      %p90 = scmp.eq.s32.totalorder %s26, 1
      %p91 = scmp.ne.s32.totalorder %s86, %s88
      %p92 = scmp.eq.s32.totalorder %s26, 0
      %p93 = por %p91, %p92
      %p94 = scmp.ne.s32.totalorder %s86, %s88
      %p95 = scmp.eq.s32.totalorder %s31, 1
      %p96 = por %p94, %p95
      %p97 = scmp.ne.s32.totalorder %s88, %s89
      %p98 = scmp.eq.s32.totalorder %s31, 0
      %p99 = por %p97, %p98
      %p100 = scmp.ne.s32.totalorder %s88, %s89
      %p101 = scmp.eq.s32.totalorder %s32, 1
      %p102 = por %p100, %p101
      %p104 = scmp.ne.s32.totalorder %s89, %s103
      %p105 = scmp.eq.s32.totalorder %s32, 0
      %p106 = por %p104, %p105
      %s108 = sadd.s32 %s107, 1
      %p111 = scmp.eq.s32.totalorder %s26, 1
      %p112 = scmp.ne.s32.totalorder %s107, %s109
      %p113 = scmp.eq.s32.totalorder %s26, 0
      %p114 = por %p112, %p113
      %p115 = scmp.ne.s32.totalorder %s107, %s109
      %p116 = scmp.eq.s32.totalorder %s31, 1
      %p117 = por %p115, %p116
      %p118 = scmp.ne.s32.totalorder %s109, %s110
      %p119 = scmp.eq.s32.totalorder %s31, 0
      %p120 = por %p118, %p119
      %p121 = scmp.ne.s32.totalorder %s109, %s110
      %p122 = scmp.eq.s32.totalorder %s32, 1
      %p123 = por %p121, %p122
      %p125 = scmp.ne.s32.totalorder %s110, %s124
      %p126 = scmp.eq.s32.totalorder %s32, 0
      %p127 = por %p125, %p126
      %s129 = sadd.s32 %s128, 1
      %p132 = scmp.eq.s32.totalorder %s26, 1
      %p133 = scmp.ne.s32.totalorder %s128, %s130
      %p134 = scmp.eq.s32.totalorder %s26, 0
      %p135 = por %p133, %p134
      %p136 = scmp.ne.s32.totalorder %s128, %s130
      %p137 = scmp.eq.s32.totalorder %s31, 1
      %p138 = por %p136, %p137
      %p139 = scmp.ne.s32.totalorder %s130, %s131
      %p140 = scmp.eq.s32.totalorder %s31, 0
      %p141 = por %p139, %p140
      %p142 = scmp.ne.s32.totalorder %s130, %s131
      %p143 = scmp.eq.s32.totalorder %s32, 1
      %p144 = por %p142, %p143
      %p146 = scmp.ne.s32.totalorder %s131, %s145
      %p147 = scmp.eq.s32.totalorder %s32, 0
      %p148 = por %p146, %p147
      %s150 = sadd.s32 %s149, 1
      %p153 = scmp.eq.s32.totalorder %s26, 1
      %p154 = scmp.ne.s32.totalorder %s149, %s151
      %p155 = scmp.eq.s32.totalorder %s26, 0
      %p156 = por %p154, %p155
      %p157 = scmp.ne.s32.totalorder %s149, %s151
      %p158 = scmp.eq.s32.totalorder %s31, 1
      %p159 = por %p157, %p158
      %p160 = scmp.ne.s32.totalorder %s151, %s152
      %p161 = scmp.eq.s32.totalorder %s31, 0
      %p162 = por %p160, %p161
      %p163 = scmp.ne.s32.totalorder %s151, %s152
      %p164 = scmp.eq.s32.totalorder %s32, 1
      %p165 = por %p163, %p164
      %p167 = scmp.ne.s32.totalorder %s152, %s166
      %p168 = scmp.eq.s32.totalorder %s32, 0
      %p169 = por %p167, %p168
      %s171 = sadd.s32 %s170, 1
      %p174 = scmp.eq.s32.totalorder %s26, 1
      %p175 = scmp.ne.s32.totalorder %s170, %s172
      %p176 = scmp.eq.s32.totalorder %s26, 0
      %p177 = por %p175, %p176
      %p178 = scmp.ne.s32.totalorder %s170, %s172
      %p179 = scmp.eq.s32.totalorder %s31, 1
      %p180 = por %p178, %p179
      %p181 = scmp.ne.s32.totalorder %s172, %s173
      %p182 = scmp.eq.s32.totalorder %s31, 0
      %p183 = por %p181, %p182
      %p184 = scmp.ne.s32.totalorder %s172, %s173
      %p185 = scmp.eq.s32.totalorder %s32, 1
      %p186 = por %p184, %p185
      %p188 = scmp.ne.s32.totalorder %s173, %s187
      %p189 = scmp.eq.s32.totalorder %s32, 0
      %p190 = por %p188, %p189
      %s192 = sadd.s32 %s191, 1
      %p195 = scmp.eq.s32.totalorder %s26, 1
      %p196 = scmp.ne.s32.totalorder %s191, %s193
      %p197 = scmp.eq.s32.totalorder %s26, 0
      %p198 = por %p196, %p197
      %p199 = scmp.ne.s32.totalorder %s191, %s193
      %p200 = scmp.eq.s32.totalorder %s31, 1
      %p201 = por %p199, %p200
      %p202 = scmp.ne.s32.totalorder %s193, %s194
      %p203 = scmp.eq.s32.totalorder %s31, 0
      %p204 = por %p202, %p203
      %p205 = scmp.ne.s32.totalorder %s193, %s194
      %p206 = scmp.eq.s32.totalorder %s32, 1
      %p207 = por %p205, %p206
      %p209 = scmp.ne.s32.totalorder %s194, %s208
      %p210 = scmp.eq.s32.totalorder %s32, 0
      %p211 = por %p209, %p210
      %s213 = sadd.s32 %s212, 1
      %p216 = scmp.eq.s32.totalorder %s26, 1
      %p217 = scmp.ne.s32.totalorder %s212, %s214
      %p218 = scmp.eq.s32.totalorder %s26, 0
      %p219 = por %p217, %p218
      %p220 = scmp.ne.s32.totalorder %s212, %s214
      %p221 = scmp.eq.s32.totalorder %s31, 1
      %p222 = por %p220, %p221
      %p223 = scmp.ne.s32.totalorder %s214, %s215
      %p224 = scmp.eq.s32.totalorder %s31, 0
      %p225 = por %p223, %p224
      %p226 = scmp.ne.s32.totalorder %s214, %s215
      %p227 = scmp.eq.s32.totalorder %s32, 1
      %p228 = por %p226, %p227
      %p230 = scmp.ne.s32.totalorder %s215, %s229
      %p231 = scmp.eq.s32.totalorder %s32, 0
      %p232 = por %p230, %p231
      %s234 = sadd.s32 %s233, 1
      %p237 = scmp.eq.s32.totalorder %s26, 1
      %p238 = scmp.ne.s32.totalorder %s233, %s235
      %p239 = scmp.eq.s32.totalorder %s26, 0
      %p240 = por %p238, %p239
      %p241 = scmp.ne.s32.totalorder %s233, %s235
      %p242 = scmp.eq.s32.totalorder %s31, 1
      %p243 = por %p241, %p242
      %p244 = scmp.ne.s32.totalorder %s235, %s236
      %p245 = scmp.eq.s32.totalorder %s31, 0
      %p246 = por %p244, %p245
      %p247 = scmp.ne.s32.totalorder %s235, %s236
      %p248 = scmp.eq.s32.totalorder %s32, 1
      %p249 = por %p247, %p248
      %p251 = scmp.ne.s32.totalorder %s236, %s250
      %p252 = scmp.eq.s32.totalorder %s32, 0
      %p253 = por %p251, %p252
      %s255 = sadd.s32 %s254, 1
      %p258 = scmp.eq.s32.totalorder %s26, 1
      %p259 = scmp.ne.s32.totalorder %s254, %s256
      %p260 = scmp.eq.s32.totalorder %s26, 0
      %p261 = por %p259, %p260
      %p262 = scmp.ne.s32.totalorder %s254, %s256
      %p263 = scmp.eq.s32.totalorder %s31, 1
      %p264 = por %p262, %p263
      %p265 = scmp.ne.s32.totalorder %s256, %s257
      %p266 = scmp.eq.s32.totalorder %s31, 0
      %p267 = por %p265, %p266
      %p268 = scmp.ne.s32.totalorder %s256, %s257
      %p269 = scmp.eq.s32.totalorder %s32, 1
      %p270 = por %p268, %p269
      %p272 = scmp.ne.s32.totalorder %s257, %s271
      %p273 = scmp.eq.s32.totalorder %s32, 0
      %p274 = por %p272, %p273
      %s276 = sadd.s32 %s275, 1
      %p279 = scmp.eq.s32.totalorder %s26, 1
      %p280 = scmp.ne.s32.totalorder %s275, %s277
      %p281 = scmp.eq.s32.totalorder %s26, 0
      %p282 = por %p280, %p281
      %p283 = scmp.ne.s32.totalorder %s275, %s277
      %p284 = scmp.eq.s32.totalorder %s31, 1
      %p285 = por %p283, %p284
      %p286 = scmp.ne.s32.totalorder %s277, %s278
      %p287 = scmp.eq.s32.totalorder %s31, 0
      %p288 = por %p286, %p287
      %p289 = scmp.ne.s32.totalorder %s277, %s278
      %p290 = scmp.eq.s32.totalorder %s32, 1
      %p291 = por %p289, %p290
      %p293 = scmp.ne.s32.totalorder %s278, %s292
      %p294 = scmp.eq.s32.totalorder %s32, 0
      %p295 = por %p293, %p294
      %s296 = ssub.s32 %s26, %s33
      %p297 = scmp.eq.s32.totalorder %s296, 0
      %s299 = sadd.s32 %s298, 1
      %s300 = scalar_select %p297, %s298, %s299
      %p303 = pneg %p297
      %p304 = scmp.eq.s32.totalorder %s26, 1
      %p305 = por %p303, %p304
      %p306 = scmp.ne.s32.totalorder %s298, %s301
      %p307 = scmp.eq.s32.totalorder %s26, 0
      %p308 = por %p306, %p307
      %p309 = scmp.ne.s32.totalorder %s298, %s301
      %p310 = scmp.eq.s32.totalorder %s31, 1
      %p311 = por %p309, %p310
      %p312 = scmp.ne.s32.totalorder %s301, %s302
      %p313 = scmp.eq.s32.totalorder %s31, 0
      %p314 = por %p312, %p313
      %p315 = scmp.ne.s32.totalorder %s301, %s302
      %p316 = scmp.eq.s32.totalorder %s32, 1
      %p317 = por %p315, %p316
      %p319 = scmp.ne.s32.totalorder %s302, %s318
      %p320 = scmp.eq.s32.totalorder %s32, 0
      %p321 = por %p319, %p320
      %p322 = scmp.le.s32.totalorder 1, %s26
      %p323 = scmp.lt.s32.totalorder %s26, 3
      %p324 = pnand %p322, %p323
      %p325 = pneg %p324
      // Predicated region
      $region9: #{tpu_custom_call.1} parent=5 // pred_check
        _
      $region10: #{tpu_custom_call.1} parent=5 // pred_check_branch
        %327 = sbr.rel (%p324) target = $region12
      $region11: #{tpu_custom_call.1} parent=5 // pred_region
        %s328 = ssub.s32 %s26, 1
        // Predicated region
        $region13: #{tpu_custom_call.1} parent=11 // pred_check
          %p329 = pneg %p99
        $region14: #{tpu_custom_call.1} parent=11 // pred_check_branch
          %331 = sbr.rel (%p329) target = $region16
        $region15: #{tpu_custom_call.1} parent=11 // pred_region
          %s333 = ssub.s32 1024, 1024
          %334 = vsyncadd [#allocation7], %s333
          %s335 = sshll.u32 [#allocation6], 4
          %s336 = int_to_ptr.vmem [resolvable:$true] %s335
          %341 = dma.hbm_to_vmem [thread:$0]  %s2, 1024, %s336, [#allocation7], 64, 64, 4
        $region16: #{tpu_custom_call.1} parent=11 // pred_fallthru
          _
        // Predicated region
        $region17: #{tpu_custom_call.1} parent=11 // pred_check
          %p342 = pneg %p120
        $region18: #{tpu_custom_call.1} parent=11 // pred_check_branch
          %344 = sbr.rel (%p342) target = $region20
        $region19: #{tpu_custom_call.1} parent=11 // pred_region
          _
        $region20: #{tpu_custom_call.1} parent=11 // pred_fallthru
          _
        // Predicated region
        $region21: #{tpu_custom_call.1} parent=11 // pred_check
          %p345 = pneg %p141
        $region22: #{tpu_custom_call.1} parent=11 // pred_check_branch
          %347 = sbr.rel (%p345) target = $region24
        $region23: #{tpu_custom_call.1} parent=11 // pred_region
          %s349 = ssub.s32 1024, 1024
          %350 = vsyncadd [#allocation7], %s349
          %s351 = sshll.u32 [#allocation8], 4
          %s352 = int_to_ptr.vmem [resolvable:$true] %s351
          %357 = dma.hbm_to_vmem [thread:$0]  %s4, 1024, %s352, [#allocation7], 64, 64, 4
        $region24: #{tpu_custom_call.1} parent=11 // pred_fallthru
          _
        // Predicated region
        $region25: #{tpu_custom_call.1} parent=11 // pred_check
          %p358 = pneg %p162
        $region26: #{tpu_custom_call.1} parent=11 // pred_check_branch
          %360 = sbr.rel (%p358) target = $region28
        $region27: #{tpu_custom_call.1} parent=11 // pred_region
          _
        $region28: #{tpu_custom_call.1} parent=11 // pred_fallthru
          _
        // Predicated region
        $region29: #{tpu_custom_call.1} parent=11 // pred_check
          %p361 = pneg %p183
        $region30: #{tpu_custom_call.1} parent=11 // pred_check_branch
          %363 = sbr.rel (%p361) target = $region32
        $region31: #{tpu_custom_call.1} parent=11 // pred_region
          %s365 = ssub.s32 18432, 18432
          %366 = vsyncadd [#allocation10], %s365
          %s367 = sshll.u32 [#allocation9], 4
          %s368 = int_to_ptr.vmem [resolvable:$true] %s367
          %373 = dma.hbm_to_vmem [thread:$0]  %s6, 18432, %s368, [#allocation10], 64, 64, 4
        $region32: #{tpu_custom_call.1} parent=11 // pred_fallthru
          _
        // Predicated region
        $region33: #{tpu_custom_call.1} parent=11 // pred_check
          %p374 = pneg %p204
        $region34: #{tpu_custom_call.1} parent=11 // pred_check_branch
          %376 = sbr.rel (%p374) target = $region36
        $region35: #{tpu_custom_call.1} parent=11 // pred_region
          _
        $region36: #{tpu_custom_call.1} parent=11 // pred_fallthru
          _
        // Predicated region
        $region37: #{tpu_custom_call.1} parent=11 // pred_check
          %p377 = pneg %p225
        $region38: #{tpu_custom_call.1} parent=11 // pred_check_branch
          %379 = sbr.rel (%p377) target = $region40
        $region39: #{tpu_custom_call.1} parent=11 // pred_region
          %s381 = ssub.s32 6144, 6144
          %382 = vsyncadd [#allocation10], %s381
          %s383 = sshll.u32 [#allocation11], 4
          %s384 = int_to_ptr.vmem [resolvable:$true] %s383
          %389 = dma.hbm_to_vmem [thread:$0]  %s8, 6144, %s384, [#allocation10], 64, 64, 4
        $region40: #{tpu_custom_call.1} parent=11 // pred_fallthru
          _
        // Predicated region
        $region41: #{tpu_custom_call.1} parent=11 // pred_check
          %p390 = pneg %p246
        $region42: #{tpu_custom_call.1} parent=11 // pred_check_branch
          %392 = sbr.rel (%p390) target = $region44
        $region43: #{tpu_custom_call.1} parent=11 // pred_region
          _
        $region44: #{tpu_custom_call.1} parent=11 // pred_fallthru
          _
        // Predicated region
        $region45: #{tpu_custom_call.1} parent=11 // pred_check
          %p393 = pneg %p267
        $region46: #{tpu_custom_call.1} parent=11 // pred_check_branch
          %395 = sbr.rel (%p393) target = $region48
        $region47: #{tpu_custom_call.1} parent=11 // pred_region
          _
        $region48: #{tpu_custom_call.1} parent=11 // pred_fallthru
          _
        // Predicated region
        $region49: #{tpu_custom_call.1} parent=11 // pred_check
          %p396 = pneg %p288
        $region50: #{tpu_custom_call.1} parent=11 // pred_check_branch
          %398 = sbr.rel (%p396) target = $region52
        $region51: #{tpu_custom_call.1} parent=11 // pred_region
          _
        $region52: #{tpu_custom_call.1} parent=11 // pred_fallthru
          _
      $region12: #{tpu_custom_call.1} parent=5 // pred_fallthru
        _
      %p399 = scmp.lt.s32.totalorder %s26, 2
      // Predicated region
      $region53: #{tpu_custom_call.1} parent=5 // pred_check
        %p400 = pneg %p399
      $region54: #{tpu_custom_call.1} parent=5 // pred_check_branch
        %402 = sbr.rel (%p400) target = $region56
      $region55: #{tpu_custom_call.1} parent=5 // pred_region
        // Predicated region
        $region57: #{tpu_custom_call.1} parent=55 // pred_check
          %p403 = pneg %p46
        $region58: #{tpu_custom_call.1} parent=55 // pred_check_branch
          %405 = sbr.rel (%p403) target = $region60
        $region59: #{tpu_custom_call.1} parent=55 // pred_region
          %s406 = sand.u32 %s36, 1
          %s407 = scalar_lea.sflag [#allocation4], %s406
          %s408 = sand.u32 %s36, 1
          %s409 = smul.addr %s408, 32
          %s410 = scalar_lea.vmem [#allocation3], %s409
          %s412 = ssub.s32 512, 512
          %413 = vsyncadd %s407, %s412
          %s414 = smul.addr %s26, 8
          %s415 = smul.addr %s414, 64
          %s416 = scalar_lea.hbm %s0, %s415
          %s417 = sshll.u32 %s410, 4
          %s418 = int_to_ptr.vmem [resolvable:$true] %s417
          %423 = dma.hbm_to_vmem [thread:$0]  %s416, 512, %s418, %s407, 64, 64, 4
        $region60: #{tpu_custom_call.1} parent=55 // pred_fallthru
          _
        // Predicated region
        $region61: #{tpu_custom_call.1} parent=55 // pred_check
          %p424 = pneg %p72
        $region62: #{tpu_custom_call.1} parent=55 // pred_check_branch
          %426 = sbr.rel (%p424) target = $region64
        $region63: #{tpu_custom_call.1} parent=55 // pred_region
          %p427 = scmp.lt.s32.totalorder %s26, 1
          %s428 = scalar_select %p427, %s26, 1
          %s429 = smul.addr %s428, 8
          %s430 = smul.addr %s429, 8
          %s431 = scalar_lea.vmem %s1, %s430
        $region64: #{tpu_custom_call.1} parent=55 // pred_fallthru
          _
      $region56: #{tpu_custom_call.1} parent=5 // pred_fallthru
        _
      %p432 = scmp.le.s32.totalorder 1, %s26
      %p433 = scmp.lt.s32.totalorder %s26, 3
      %p434 = pnand %p432, %p433
      %p435 = pneg %p434
      // Predicated region
      $region65: #{tpu_custom_call.1} parent=5 // pred_check
        _
      $region66: #{tpu_custom_call.1} parent=5 // pred_check_branch
        %437 = sbr.rel (%p434) target = $region68
      $region67: #{tpu_custom_call.1} parent=5 // pred_region
        %s438 = ssub.s32 %s26, 1
        %s439 = sand.u32 %s39, 1
        %s440 = scalar_lea.sflag [#allocation4], %s439
        %s441 = sand.u32 %s39, 1
        %s442 = smul.addr %s441, 32
        %s443 = scalar_lea.vmem [#allocation3], %s442
        // Predicated region
        $region69: #{tpu_custom_call.1} parent=67 // pred_check
          %p444 = pneg %p52
        $region70: #{tpu_custom_call.1} parent=67 // pred_check_branch
          %446 = sbr.rel (%p444) target = $region72
        $region71: #{tpu_custom_call.1} parent=67 // pred_region
          %447 = dma.done %s440, 512
        $region72: #{tpu_custom_call.1} parent=67 // pred_fallthru
          _
        // Predicated region
        $region73: #{tpu_custom_call.1} parent=67 // pred_check
          %p448 = pneg %p99
        $region74: #{tpu_custom_call.1} parent=67 // pred_check_branch
          %450 = sbr.rel (%p448) target = $region76
        $region75: #{tpu_custom_call.1} parent=67 // pred_region
          %451 = dma.done [#allocation7], 1024
        $region76: #{tpu_custom_call.1} parent=67 // pred_fallthru
          _
        // Predicated region
        $region77: #{tpu_custom_call.1} parent=67 // pred_check
          %p452 = pneg %p141
        $region78: #{tpu_custom_call.1} parent=67 // pred_check_branch
          %454 = sbr.rel (%p452) target = $region80
        $region79: #{tpu_custom_call.1} parent=67 // pred_region
          %455 = dma.done [#allocation7], 1024
        $region80: #{tpu_custom_call.1} parent=67 // pred_fallthru
          _
        // Predicated region
        $region81: #{tpu_custom_call.1} parent=67 // pred_check
          %p456 = pneg %p183
        $region82: #{tpu_custom_call.1} parent=67 // pred_check_branch
          %458 = sbr.rel (%p456) target = $region84
        $region83: #{tpu_custom_call.1} parent=67 // pred_region
          %459 = dma.done [#allocation10], 18432
        $region84: #{tpu_custom_call.1} parent=67 // pred_fallthru
          _
        // Predicated region
        $region85: #{tpu_custom_call.1} parent=67 // pred_check
          %p460 = pneg %p225
        $region86: #{tpu_custom_call.1} parent=67 // pred_check_branch
          %462 = sbr.rel (%p460) target = $region88
        $region87: #{tpu_custom_call.1} parent=67 // pred_region
          %463 = dma.done [#allocation10], 6144
        $region88: #{tpu_custom_call.1} parent=67 // pred_fallthru
          _
        %s464 = sand.u32 %s39, 1
        %s465 = scalar_lea.sflag [#allocation4], %s464
        %s466 = sand.u32 %s39, 1
        %s467 = smul.addr %s466, 32
        %s468 = scalar_lea.vmem [#allocation3], %s467
        %p469 = pneg %p52
        %p470 = pneg %p49
        %p471 = scmp.lt.s32.totalorder %s31, 1
        %s472 = scalar_select %p471, %s31, 1
        %s473 = smul.addr %s472, 8
        %s474 = smul.addr %s473, 8
        %s475 = scalar_lea.vmem %s1, %s474
        %p476 = pneg %p78
        %p477 = pneg %p75
        %p478 = pneg %p99
        %p479 = pneg %p96
        %p480 = pneg %p120
        %p481 = pneg %p117
        %p482 = pneg %p141
        %p483 = pneg %p138
        %p484 = pneg %p162
        %p485 = pneg %p159
        %p486 = pneg %p183
        %p487 = pneg %p180
        %p488 = pneg %p204
        %p489 = pneg %p201
        %p490 = pneg %p225
        %p491 = pneg %p222
        %p492 = pneg %p246
        %p493 = pneg %p243
        %p494 = pneg %p267
        %p495 = pneg %p264
        %p496 = pneg %p288
        %p497 = pneg %p285
        %p498 = pneg %p314
        %p499 = pneg %p311
        %s500 = sand.u32 %s301, 1
        %s501 = scalar_lea.sflag [#allocation5], %s500
        %s502 = sand.u32 %s301, 1
        %s503 = smul.addr %s502, 128
        %s504 = scalar_lea.vmem [#allocation12], %s503
        %p505 = scmp.lt.s32.totalorder %s31, 1
        %s506 = scalar_select %p505, %s31, 1
        %s507 = smul.addr %s506, 8
        %s508 = smul.addr %s507, 8
        %s509 = scalar_lea.vmem %s1, %s508
        %511 = vst [vmem:[#allocation2] sm:$0xff] 0.0
        %512 = vst [vmem:[#allocation2 + $0x8] sm:$0xff] 0.0
        %513 = vst [vmem:[#allocation2 + $0x10] sm:$0xff] 0.0
        %514 = vst [vmem:[#allocation2 + $0x18] sm:$0xff] 0.0
        %515 = vst [vmem:[#allocation2 + $0x20] sm:$0xff] 0.0
        %516 = vst [vmem:[#allocation2 + $0x28] sm:$0xff] 0.0
        %517 = vst [vmem:[#allocation2 + $0x30] sm:$0xff] 0.0
        %518 = vst [vmem:[#allocation2 + $0x38] sm:$0xff] 0.0
        %519 = vst [vmem:[#allocation2 + $0x40] sm:$0xff] 0.0
        %520 = vst [vmem:[#allocation2 + $0x48] sm:$0xff] 0.0
        %v521 = vld [vmem:[%s509] sm:$0xff]
        %v522 = vld [vmem:[%s509 + $0x8] sm:$0xff]
        %v523 = vld [vmem:[%s509 + $0x10] sm:$0xff]
        %v524 = vld [vmem:[%s509 + $0x18] sm:$0xff]
        %v525 = vld [vmem:[%s509 + $0x20] sm:$0xff]
        %v526 = vld [vmem:[%s509 + $0x28] sm:$0xff]
        %v527 = vld [vmem:[%s509 + $0x30] sm:$0xff]
        %v528 = vld [vmem:[%s509 + $0x38] sm:$0xff]
        %530 = vset.pattern.permute.xlu0 0
        %531 = vperm.xlu0 %530, %v521
        %v532 = vpop.permute.xlu0 %531
        %535 = vset.pattern.permute.xlu0 0
        %536 = vperm.xlu0 %535, %v522
        %v537 = vpop.permute.xlu0 %536
        %540 = vset.pattern.permute.xlu0 0
        %541 = vperm.xlu0 %540, %v523
        %v542 = vpop.permute.xlu0 %541
        %545 = vset.pattern.permute.xlu0 0
        %546 = vperm.xlu0 %545, %v524
        %v547 = vpop.permute.xlu0 %546
        %550 = vset.pattern.permute.xlu0 0
        %551 = vperm.xlu0 %550, %v525
        %v552 = vpop.permute.xlu0 %551
        %555 = vset.pattern.permute.xlu0 0
        %556 = vperm.xlu0 %555, %v526
        %v557 = vpop.permute.xlu0 %556
        %560 = vset.pattern.permute.xlu0 0
        %561 = vperm.xlu0 %560, %v527
        %v562 = vpop.permute.xlu0 %561
        %565 = vset.pattern.permute.xlu0 0
        %566 = vperm.xlu0 %565, %v528
        %v567 = vpop.permute.xlu0 %566
        %v569 = vlaneseq
        %v570 = vand.u32 %v569, 127
        %vm571 = vcmp.lt.s32.totalorder %v570, 8
        %v572 = vlaneseq
        %v573 = vshrl.u32 %v572, 7
        %v574 = vadd.s32 %v573, 8
        %v575 = vadd.s32 %v573, 16
        %v576 = vadd.s32 %v573, 24
        %v577 = vadd.s32 %v573, 32
        %v578 = vadd.s32 %v573, 40
        %v579 = vadd.s32 %v573, 48
        %v580 = vadd.s32 %v573, 56
        %vm581 = vcmp.lt.s32.totalorder %v573, 60
        %vm582 = vcmp.lt.s32.totalorder %v574, 60
        %vm583 = vcmp.lt.s32.totalorder %v575, 60
        %vm584 = vcmp.lt.s32.totalorder %v576, 60
        %vm585 = vcmp.lt.s32.totalorder %v577, 60
        %vm586 = vcmp.lt.s32.totalorder %v578, 60
        %vm587 = vcmp.lt.s32.totalorder %v579, 60
        %vm588 = vcmp.lt.s32.totalorder %v580, 60
        %v589 = vsel %vm581, 1, 0
        %v590 = vsel %vm582, 1, 0
        %v591 = vsel %vm583, 1, 0
        %v592 = vsel %vm584, 1, 0
        %v593 = vsel %vm585, 1, 0
        %v594 = vsel %vm586, 1, 0
        %v595 = vsel %vm587, 1, 0
        %v596 = vsel %vm588, 1, 0
        %v597 = vcvt.s32.f32 %v589
        %v598 = vcvt.s32.f32 %v590
        %v599 = vcvt.s32.f32 %v591
        %v600 = vcvt.s32.f32 %v592
        %v601 = vcvt.s32.f32 %v593
        %v602 = vcvt.s32.f32 %v594
        %v603 = vcvt.s32.f32 %v595
        %v604 = vcvt.s32.f32 %v596
        %v605 = vld [vmem:[%s443] sm:$0xf]
        %v606 = vld [vmem:[%s443 + $0x4] sm:$0xf]
        %v607 = vld [vmem:[%s443 + $0x8] sm:$0xf]
        %v608 = vld [vmem:[%s443 + $0xc] sm:$0xf]
        %v609 = vld [vmem:[%s443 + $0x10] sm:$0xf]
        %v610 = vld [vmem:[%s443 + $0x14] sm:$0xf]
        %v611 = vld [vmem:[%s443 + $0x18] sm:$0xf]
        %v612 = vld [vmem:[%s443 + $0x1c] sm:$0xf]
        %v613 = vld [vmem:[#allocation6] sm:$0xf]
        %v614 = vld [vmem:[#allocation6 + $0x4] sm:$0xf]
        %v615 = vld [vmem:[#allocation6 + $0x8] sm:$0xf]
        %v616 = vld [vmem:[#allocation6 + $0xc] sm:$0xf]
        %v617 = vld [vmem:[#allocation6 + $0x10] sm:$0xf]
        %v618 = vld [vmem:[#allocation6 + $0x14] sm:$0xf]
        %v619 = vld [vmem:[#allocation6 + $0x18] sm:$0xf]
        %v620 = vld [vmem:[#allocation6 + $0x1c] sm:$0xf]
        %v621 = vld [vmem:[#allocation6 + $0x20] sm:$0xf]
        %v622 = vld [vmem:[#allocation6 + $0x24] sm:$0xf]
        %v623 = vld [vmem:[#allocation6 + $0x28] sm:$0xf]
        %v624 = vld [vmem:[#allocation6 + $0x2c] sm:$0xf]
        %v625 = vld [vmem:[#allocation6 + $0x30] sm:$0xf]
        %v626 = vld [vmem:[#allocation6 + $0x34] sm:$0xf]
        %v627 = vld [vmem:[#allocation6 + $0x38] sm:$0xf]
        %v628 = vld [vmem:[#allocation6 + $0x3c] sm:$0xf]
        %v629 = vld [vmem:[%s3] sm:$0x1]
        %v631 = vlaneseq
        %v632 = vshrl.u32 %v631, 7
        %v633 = vsub.s32 0, %v632
        %v634 = vrot.slane %v629, %v633
        %v644 = vunpack.c.l.b16 %v605
        %v645 = vunpack.c.l.b16 %v606
        %v646 = vunpack.c.l.b16 %v607
        %v647 = vunpack.c.l.b16 %v608
        %v648 = vunpack.c.l.b16 %v609
        %v649 = vunpack.c.l.b16 %v610
        %v650 = vunpack.c.l.b16 %v611
        %v651 = vunpack.c.l.b16 %v612
        %v652 = vpack.c.b16 %v645, %v644
        %v653 = vpack.c.b16 %v647, %v646
        %v654 = vpack.c.b16 %v649, %v648
        %v655 = vpack.c.b16 %v651, %v650
        %v676 = vunpack.c.l.b16 %v613
        %v677 = vunpack.c.l.b16 %v614
        %v678 = vunpack.c.l.b16 %v615
        %v679 = vunpack.c.l.b16 %v616
        %v680 = vunpack.c.l.b16 %v617
        %v681 = vunpack.c.l.b16 %v618
        %v682 = vunpack.c.l.b16 %v619
        %v683 = vunpack.c.l.b16 %v620
        %v684 = vunpack.c.l.b16 %v621
        %v685 = vunpack.c.l.b16 %v622
        %v686 = vunpack.c.l.b16 %v623
        %v687 = vunpack.c.l.b16 %v624
        %v688 = vunpack.c.l.b16 %v625
        %v689 = vunpack.c.l.b16 %v626
        %v690 = vunpack.c.l.b16 %v627
        %v691 = vunpack.c.l.b16 %v628
        %v692 = vpack.c.b16 %v677, %v676
        %v693 = vpack.c.b16 %v679, %v678
        %v694 = vpack.c.b16 %v681, %v680
        %v695 = vpack.c.b16 %v683, %v682
        %v696 = vpack.c.b16 %v685, %v684
        %v697 = vpack.c.b16 %v687, %v686
        %v698 = vpack.c.b16 %v689, %v688
        %v699 = vpack.c.b16 %v691, %v690
        %708 = vmatprep.subr.bf16.mxu0 0
        %709 = vmatpush1.bf16.msra.mxu0 %v699
        %710 = vmatprep.subr.bf16.mxu0 0
        %711 = vmatpush1.bf16.msra.mxu0 %v698
        %712 = vmatprep.subr.bf16.mxu0 0
        %713 = vmatpush1.bf16.msra.mxu0 %v697
        %714 = vmatprep.subr.bf16.mxu0 0
        %715 = vmatpush1.bf16.msra.mxu0 %v696
        %716 = vmatprep.subr.bf16.mxu0 0
        %717 = vmatpush1.bf16.msra.mxu0 %v695
        %718 = vmatprep.subr.bf16.mxu0 0
        %719 = vmatpush1.bf16.msra.mxu0 %v694
        %720 = vmatprep.subr.bf16.mxu0 0
        %721 = vmatpush1.bf16.msra.mxu0 %v693
        %722 = vmatprep.subr.bf16.mxu0 0
        %723 = vmatpush1.bf16.msra.mxu0 %v692
        %724 = vmatprep.subr.bf16.mxu0 0
        %725 = vmatpush2.bf16.msra.mxu0 0
        %726 = vmatprep.subr.bf16.mxu0 0
        %727 = vmatpush2.bf16.msra.mxu0 0
        %728 = vmatprep.subr.bf16.mxu0 0
        %729 = vmatpush2.bf16.msra.mxu0 0
        %730 = vmatprep.subr.bf16.mxu0 0
        %731 = vmatpush2.bf16.msra.mxu0 0
        %732 = vmatprep.subr.bf16.mxu0 0
        %733 = vmatpush2.bf16.msra.mxu0 0
        %734 = vmatprep.subr.bf16.mxu0 0
        %735 = vmatpush2.bf16.msra.mxu0 0
        %736 = vmatprep.subr.bf16.mxu0 0
        %737 = vmatpush2.bf16.msra.mxu0 0
        %738 = vmatprep.subr.bf16.mxu0 0
        %739 = vmatpush2.bf16.msra.mxu0 0
        %740 = vmatprep.mubr.bf16.mxu0 0
        %741 = vmatmul.mubr.bf16.gmra.mxu0 %v652
        %v742 = vpop.f32.mrf.mxu0
        %v743 = vadd.f32 %v634, %v742
        %v744 = vpop.f32.mrf.mxu0
        %v745 = vpop.f32.mrf.mxu0
        %v746 = vadd.f32 %v634, %v745
        %v747 = vpop.f32.mrf.mxu0
        %748 = vmatprep.mubr.bf16.mxu0 0
        %749 = vmatmul.mubr.bf16.gmra.mxu0 %v653
        %v750 = vpop.f32.mrf.mxu0
        %v751 = vadd.f32 %v634, %v750
        %v752 = vpop.f32.mrf.mxu0
        %v753 = vpop.f32.mrf.mxu0
        %v754 = vadd.f32 %v634, %v753
        %v755 = vpop.f32.mrf.mxu0
        %756 = vmatprep.mubr.bf16.mxu0 0
        %757 = vmatmul.mubr.bf16.gmra.mxu0 %v654
        %v758 = vpop.f32.mrf.mxu0
        %v759 = vadd.f32 %v634, %v758
        %v760 = vpop.f32.mrf.mxu0
        %v761 = vpop.f32.mrf.mxu0
        %v762 = vadd.f32 %v634, %v761
        %v763 = vpop.f32.mrf.mxu0
        %764 = vmatprep.mubr.bf16.mxu0 0
        %765 = vmatmul.mubr.bf16.gmra.mxu0 %v655
        %v766 = vpop.f32.mrf.mxu0
        %v767 = vadd.f32 %v634, %v766
        %v768 = vpop.f32.mrf.mxu0
        %v769 = vpop.f32.mrf.mxu0
        %v770 = vadd.f32 %v634, %v769
        %v771 = vpop.f32.mrf.mxu0
        %772 = vdwg.mxu0
        %v773 = vmul.f32 %v743, %v597
        %v774 = vmul.f32 %v746, %v598
        %v775 = vmul.f32 %v751, %v599
        %v776 = vmul.f32 %v754, %v600
        %v777 = vmul.f32 %v759, %v601
        %v778 = vmul.f32 %v762, %v602
        %v779 = vmul.f32 %v767, %v603
        %v780 = vmul.f32 %v770, %v604
        %781 = vst [vmem:[#allocation2 + $0x8] sm:$0xff] %v773
        %782 = vst [vmem:[#allocation2 + $0x10] sm:$0xff] %v774
        %783 = vst [vmem:[#allocation2 + $0x18] sm:$0xff] %v775
        %784 = vst [vmem:[#allocation2 + $0x20] sm:$0xff] %v776
        %785 = vst [vmem:[#allocation2 + $0x28] sm:$0xff] %v777
        %786 = vst [vmem:[#allocation2 + $0x30] sm:$0xff] %v778
        %787 = vst [vmem:[#allocation2 + $0x38] sm:$0xff] %v779
        %788 = vst [vmem:[#allocation2 + $0x40] sm:$0xff] %v780
        %v789 = vld [vmem:[#allocation2 + $0x7] sm:$0xff]
        %v790 = vld [vmem:[#allocation2 + $0xf] sm:$0xff]
        %v791 = vld [vmem:[#allocation2 + $0x17] sm:$0xff]
        %v792 = vld [vmem:[#allocation2 + $0x1f] sm:$0xff]
        %v793 = vld [vmem:[#allocation2 + $0x27] sm:$0xff]
        %v794 = vld [vmem:[#allocation2 + $0x2f] sm:$0xff]
        %v795 = vld [vmem:[#allocation2 + $0x37] sm:$0xff]
        %v796 = vld [vmem:[#allocation2 + $0x3f] sm:$0xff]
        %v797 = vld [vmem:[#allocation2 + $0x9] sm:$0xff]
        %v798 = vld [vmem:[#allocation2 + $0x11] sm:$0xff]
        %v799 = vld [vmem:[#allocation2 + $0x19] sm:$0xff]
        %v800 = vld [vmem:[#allocation2 + $0x21] sm:$0xff]
        %v801 = vld [vmem:[#allocation2 + $0x29] sm:$0xff]
        %v802 = vld [vmem:[#allocation2 + $0x31] sm:$0xff]
        %v803 = vld [vmem:[#allocation2 + $0x39] sm:$0xff]
        %v804 = vld [vmem:[#allocation2 + $0x41] sm:$0xff]
        %v805 = vpack.c.bf16 %v790, %v789
        %v806 = vpack.c.bf16 %v792, %v791
        %v807 = vpack.c.bf16 %v794, %v793
        %v808 = vpack.c.bf16 %v796, %v795
        %v809 = vpack.c.bf16 %v774, %v773
        %v810 = vpack.c.bf16 %v776, %v775
        %v811 = vpack.c.bf16 %v778, %v777
        %v812 = vpack.c.bf16 %v780, %v779
        %v813 = vpack.c.bf16 %v798, %v797
        %v814 = vpack.c.bf16 %v800, %v799
        %v815 = vpack.c.bf16 %v802, %v801
        %v816 = vpack.c.bf16 %v804, %v803
        %v817 = vld [vmem:[#allocation9] sm:$0xf]
        %v818 = vld [vmem:[#allocation9 + $0x4] sm:$0xf]
        %v819 = vld [vmem:[#allocation9 + $0x8] sm:$0xf]
        %v820 = vld [vmem:[#allocation9 + $0xc] sm:$0xf]
        %v821 = vld [vmem:[#allocation9 + $0x10] sm:$0xf]
        %v822 = vld [vmem:[#allocation9 + $0x14] sm:$0xf]
        %v823 = vld [vmem:[#allocation9 + $0x18] sm:$0xf]
        %v824 = vld [vmem:[#allocation9 + $0x1c] sm:$0xf]
        %v825 = vld [vmem:[#allocation9 + $0x20] sm:$0xf]
        %v826 = vld [vmem:[#allocation9 + $0x24] sm:$0xf]
        %v827 = vld [vmem:[#allocation9 + $0x28] sm:$0xf]
        %v828 = vld [vmem:[#allocation9 + $0x2c] sm:$0xf]
        %v829 = vld [vmem:[#allocation9 + $0x30] sm:$0xf]
        %v830 = vld [vmem:[#allocation9 + $0x34] sm:$0xf]
        %v831 = vld [vmem:[#allocation9 + $0x38] sm:$0xf]
        %v832 = vld [vmem:[#allocation9 + $0x3c] sm:$0xf]
        %v833 = vld [vmem:[#allocation9 + $0x40] sm:$0xf]
        %v834 = vld [vmem:[#allocation9 + $0x44] sm:$0xf]
        %v835 = vld [vmem:[#allocation9 + $0x48] sm:$0xf]
        %v836 = vld [vmem:[#allocation9 + $0x4c] sm:$0xf]
        %v837 = vld [vmem:[#allocation9 + $0x50] sm:$0xf]
        %v838 = vld [vmem:[#allocation9 + $0x54] sm:$0xf]
        %v839 = vld [vmem:[#allocation9 + $0x58] sm:$0xf]
        %v840 = vld [vmem:[#allocation9 + $0x5c] sm:$0xf]
        %v841 = vld [vmem:[#allocation9 + $0x60] sm:$0xf]
        %v842 = vld [vmem:[#allocation9 + $0x64] sm:$0xf]
        %v843 = vld [vmem:[#allocation9 + $0x68] sm:$0xf]
        %v844 = vld [vmem:[#allocation9 + $0x6c] sm:$0xf]
        %v845 = vld [vmem:[#allocation9 + $0x70] sm:$0xf]
        %v846 = vld [vmem:[#allocation9 + $0x74] sm:$0xf]
        %v847 = vld [vmem:[#allocation9 + $0x78] sm:$0xf]
        %v848 = vld [vmem:[#allocation9 + $0x7c] sm:$0xf]
        %v849 = vld [vmem:[#allocation9 + $0x80] sm:$0xf]
        %v850 = vld [vmem:[#allocation9 + $0x84] sm:$0xf]
        %v851 = vld [vmem:[#allocation9 + $0x88] sm:$0xf]
        %v852 = vld [vmem:[#allocation9 + $0x8c] sm:$0xf]
        %v853 = vld [vmem:[#allocation9 + $0x90] sm:$0xf]
        %v854 = vld [vmem:[#allocation9 + $0x94] sm:$0xf]
        %v855 = vld [vmem:[#allocation9 + $0x98] sm:$0xf]
        %v856 = vld [vmem:[#allocation9 + $0x9c] sm:$0xf]
        %v857 = vld [vmem:[#allocation9 + $0xa0] sm:$0xf]
        %v858 = vld [vmem:[#allocation9 + $0xa4] sm:$0xf]
        %v859 = vld [vmem:[#allocation9 + $0xa8] sm:$0xf]
        %v860 = vld [vmem:[#allocation9 + $0xac] sm:$0xf]
        %v861 = vld [vmem:[#allocation9 + $0xb0] sm:$0xf]
        %v862 = vld [vmem:[#allocation9 + $0xb4] sm:$0xf]
        %v863 = vld [vmem:[#allocation9 + $0xb8] sm:$0xf]
        %v864 = vld [vmem:[#allocation9 + $0xbc] sm:$0xf]
        %v865 = vld [vmem:[%s7] sm:$0x1]
        %v867 = vlaneseq
        %v868 = vshrl.u32 %v867, 7
        %v869 = vsub.s32 0, %v868
        %v870 = vrot.slane %v865, %v869
        %v920 = vunpack.c.l.b16 %v817
        %v921 = vunpack.c.l.b16 %v818
        %v922 = vunpack.c.l.b16 %v819
        %v923 = vunpack.c.l.b16 %v820
        %v924 = vunpack.c.l.b16 %v821
        %v925 = vunpack.c.l.b16 %v822
        %v926 = vunpack.c.l.b16 %v823
        %v927 = vunpack.c.l.b16 %v824
        %v928 = vunpack.c.l.b16 %v825
        %v929 = vunpack.c.l.b16 %v826
        %v930 = vunpack.c.l.b16 %v827
        %v931 = vunpack.c.l.b16 %v828
        %v932 = vunpack.c.l.b16 %v829
        %v933 = vunpack.c.l.b16 %v830
        %v934 = vunpack.c.l.b16 %v831
        %v935 = vunpack.c.l.b16 %v832
        %v936 = vunpack.c.l.b16 %v833
        %v937 = vunpack.c.l.b16 %v834
        %v938 = vunpack.c.l.b16 %v835
        %v939 = vunpack.c.l.b16 %v836
        %v940 = vunpack.c.l.b16 %v837
        %v941 = vunpack.c.l.b16 %v838
        %v942 = vunpack.c.l.b16 %v839
        %v943 = vunpack.c.l.b16 %v840
        %v944 = vunpack.c.l.b16 %v841
        %v945 = vunpack.c.l.b16 %v842
        %v946 = vunpack.c.l.b16 %v843
        %v947 = vunpack.c.l.b16 %v844
        %v948 = vunpack.c.l.b16 %v845
        %v949 = vunpack.c.l.b16 %v846
        %v950 = vunpack.c.l.b16 %v847
        %v951 = vunpack.c.l.b16 %v848
        %v952 = vunpack.c.l.b16 %v849
        %v953 = vunpack.c.l.b16 %v850
        %v954 = vunpack.c.l.b16 %v851
        %v955 = vunpack.c.l.b16 %v852
        %v956 = vunpack.c.l.b16 %v853
        %v957 = vunpack.c.l.b16 %v854
        %v958 = vunpack.c.l.b16 %v855
        %v959 = vunpack.c.l.b16 %v856
        %v960 = vunpack.c.l.b16 %v857
        %v961 = vunpack.c.l.b16 %v858
        %v962 = vunpack.c.l.b16 %v859
        %v963 = vunpack.c.l.b16 %v860
        %v964 = vunpack.c.l.b16 %v861
        %v965 = vunpack.c.l.b16 %v862
        %v966 = vunpack.c.l.b16 %v863
        %v967 = vunpack.c.l.b16 %v864
        %v968 = vpack.c.b16 %v921, %v920
        %v969 = vpack.c.b16 %v923, %v922
        %v970 = vpack.c.b16 %v925, %v924
        %v971 = vpack.c.b16 %v927, %v926
        %v972 = vpack.c.b16 %v929, %v928
        %v973 = vpack.c.b16 %v931, %v930
        %v974 = vpack.c.b16 %v933, %v932
        %v975 = vpack.c.b16 %v935, %v934
        %v976 = vpack.c.b16 %v937, %v936
        %v977 = vpack.c.b16 %v939, %v938
        %v978 = vpack.c.b16 %v941, %v940
        %v979 = vpack.c.b16 %v943, %v942
        %v980 = vpack.c.b16 %v945, %v944
        %v981 = vpack.c.b16 %v947, %v946
        %v982 = vpack.c.b16 %v949, %v948
        %v983 = vpack.c.b16 %v951, %v950
        %v984 = vpack.c.b16 %v953, %v952
        %v985 = vpack.c.b16 %v955, %v954
        %v986 = vpack.c.b16 %v957, %v956
        %v987 = vpack.c.b16 %v959, %v958
        %v988 = vpack.c.b16 %v961, %v960
        %v989 = vpack.c.b16 %v963, %v962
        %v990 = vpack.c.b16 %v965, %v964
        %v991 = vpack.c.b16 %v967, %v966
        %1016 = vmatprep.subr.bf16.mxu0 0
        %1017 = vmatpush1.bf16.msra.mxu0 %v975
        %1018 = vmatprep.subr.bf16.mxu0 0
        %1019 = vmatpush1.bf16.msra.mxu0 %v974
        %1020 = vmatprep.subr.bf16.mxu0 0
        %1021 = vmatpush1.bf16.msra.mxu0 %v973
        %1022 = vmatprep.subr.bf16.mxu0 0
        %1023 = vmatpush1.bf16.msra.mxu0 %v972
        %1024 = vmatprep.subr.bf16.mxu0 0
        %1025 = vmatpush1.bf16.msra.mxu0 %v971
        %1026 = vmatprep.subr.bf16.mxu0 0
        %1027 = vmatpush1.bf16.msra.mxu0 %v970
        %1028 = vmatprep.subr.bf16.mxu0 0
        %1029 = vmatpush1.bf16.msra.mxu0 %v969
        %1030 = vmatprep.subr.bf16.mxu0 0
        %1031 = vmatpush1.bf16.msra.mxu0 %v968
        %1032 = vmatprep.subr.bf16.mxu0 0
        %1033 = vmatpush2.bf16.msra.mxu0 %v983
        %1034 = vmatprep.subr.bf16.mxu0 0
        %1035 = vmatpush2.bf16.msra.mxu0 %v982
        %1036 = vmatprep.subr.bf16.mxu0 0
        %1037 = vmatpush2.bf16.msra.mxu0 %v981
        %1038 = vmatprep.subr.bf16.mxu0 0
        %1039 = vmatpush2.bf16.msra.mxu0 %v980
        %1040 = vmatprep.subr.bf16.mxu0 0
        %1041 = vmatpush2.bf16.msra.mxu0 %v979
        %1042 = vmatprep.subr.bf16.mxu0 0
        %1043 = vmatpush2.bf16.msra.mxu0 %v978
        %1044 = vmatprep.subr.bf16.mxu0 0
        %1045 = vmatpush2.bf16.msra.mxu0 %v977
        %1046 = vmatprep.subr.bf16.mxu0 0
        %1047 = vmatpush2.bf16.msra.mxu0 %v976
        %1048 = vmatprep.mubr.bf16.mxu0 %v809
        %1049 = vmatmul.mubr.bf16.gmra.mxu0 %v805
        %v1050 = vpop.f32.mrf.mxu0
        %v1051 = vadd.f32 %v870, %v1050
        %v1052 = vpop.f32.mrf.mxu0
        %v1053 = vpop.f32.mrf.mxu0
        %v1054 = vadd.f32 %v870, %v1053
        %v1055 = vpop.f32.mrf.mxu0
        %1056 = vmatprep.mubr.bf16.mxu0 %v810
        %1057 = vmatmul.mubr.bf16.gmra.mxu0 %v806
        %v1058 = vpop.f32.mrf.mxu0
        %v1059 = vadd.f32 %v870, %v1058
        %v1060 = vpop.f32.mrf.mxu0
        %v1061 = vpop.f32.mrf.mxu0
        %v1062 = vadd.f32 %v870, %v1061
        %v1063 = vpop.f32.mrf.mxu0
        %1064 = vmatprep.mubr.bf16.mxu0 %v811
        %1065 = vmatmul.mubr.bf16.gmra.mxu0 %v807
        %v1066 = vpop.f32.mrf.mxu0
        %v1067 = vadd.f32 %v870, %v1066
        %v1068 = vpop.f32.mrf.mxu0
        %v1069 = vpop.f32.mrf.mxu0
        %v1070 = vadd.f32 %v870, %v1069
        %v1071 = vpop.f32.mrf.mxu0
        %1072 = vmatprep.mubr.bf16.mxu0 %v812
        %1073 = vmatmul.mubr.bf16.gmra.mxu0 %v808
        %v1074 = vpop.f32.mrf.mxu0
        %v1075 = vadd.f32 %v870, %v1074
        %v1076 = vpop.f32.mrf.mxu0
        %v1077 = vpop.f32.mrf.mxu0
        %v1078 = vadd.f32 %v870, %v1077
        %v1079 = vpop.f32.mrf.mxu0
        %1080 = vdwg.mxu0
        %1081 = vmatprep.subr.bf16.mxu0 0
        %1082 = vmatpush1.bf16.msra.mxu0 %v991
        %1083 = vmatprep.subr.bf16.mxu0 0
        %1084 = vmatpush1.bf16.msra.mxu0 %v990
        %1085 = vmatprep.subr.bf16.mxu0 0
        %1086 = vmatpush1.bf16.msra.mxu0 %v989
        %1087 = vmatprep.subr.bf16.mxu0 0
        %1088 = vmatpush1.bf16.msra.mxu0 %v988
        %1089 = vmatprep.subr.bf16.mxu0 0
        %1090 = vmatpush1.bf16.msra.mxu0 %v987
        %1091 = vmatprep.subr.bf16.mxu0 0
        %1092 = vmatpush1.bf16.msra.mxu0 %v986
        %1093 = vmatprep.subr.bf16.mxu0 0
        %1094 = vmatpush1.bf16.msra.mxu0 %v985
        %1095 = vmatprep.subr.bf16.mxu0 0
        %1096 = vmatpush1.bf16.msra.mxu0 %v984
        %1097 = vmatprep.subr.bf16.mxu0 0
        %1098 = vmatpush2.bf16.msra.mxu0 0
        %1099 = vmatprep.subr.bf16.mxu0 0
        %1100 = vmatpush2.bf16.msra.mxu0 0
        %1101 = vmatprep.subr.bf16.mxu0 0
        %1102 = vmatpush2.bf16.msra.mxu0 0
        %1103 = vmatprep.subr.bf16.mxu0 0
        %1104 = vmatpush2.bf16.msra.mxu0 0
        %1105 = vmatprep.subr.bf16.mxu0 0
        %1106 = vmatpush2.bf16.msra.mxu0 0
        %1107 = vmatprep.subr.bf16.mxu0 0
        %1108 = vmatpush2.bf16.msra.mxu0 0
        %1109 = vmatprep.subr.bf16.mxu0 0
        %1110 = vmatpush2.bf16.msra.mxu0 0
        %1111 = vmatprep.subr.bf16.mxu0 0
        %1112 = vmatpush2.bf16.msra.mxu0 0
        %1113 = vmatprep.mubr.bf16.mxu0 0
        %1114 = vmatmul.mubr.bf16.gmra.mxu0 %v813
        %v1115 = vpop.f32.mrf.mxu0
        %v1116 = vadd.f32 %v1051, %v1115
        %v1117 = vpop.f32.mrf.mxu0
        %v1118 = vpop.f32.mrf.mxu0
        %v1119 = vadd.f32 %v1054, %v1118
        %v1120 = vpop.f32.mrf.mxu0
        %1121 = vmatprep.mubr.bf16.mxu0 0
        %1122 = vmatmul.mubr.bf16.gmra.mxu0 %v814
        %v1123 = vpop.f32.mrf.mxu0
        %v1124 = vadd.f32 %v1059, %v1123
        %v1125 = vpop.f32.mrf.mxu0
        %v1126 = vpop.f32.mrf.mxu0
        %v1127 = vadd.f32 %v1062, %v1126
        %v1128 = vpop.f32.mrf.mxu0
        %1129 = vmatprep.mubr.bf16.mxu0 0
        %1130 = vmatmul.mubr.bf16.gmra.mxu0 %v815
        %v1131 = vpop.f32.mrf.mxu0
        %v1132 = vadd.f32 %v1067, %v1131
        %v1133 = vpop.f32.mrf.mxu0
        %v1134 = vpop.f32.mrf.mxu0
        %v1135 = vadd.f32 %v1070, %v1134
        %v1136 = vpop.f32.mrf.mxu0
        %1137 = vmatprep.mubr.bf16.mxu0 0
        %1138 = vmatmul.mubr.bf16.gmra.mxu0 %v816
        %v1139 = vpop.f32.mrf.mxu0
        %v1140 = vadd.f32 %v1075, %v1139
        %v1141 = vpop.f32.mrf.mxu0
        %v1142 = vpop.f32.mrf.mxu0
        %v1143 = vadd.f32 %v1078, %v1142
        %v1144 = vpop.f32.mrf.mxu0
        %1145 = vdwg.mxu0
        %v1146 = vmax.f32 %v1116, 0.0
        %v1147 = vmax.f32 %v1119, 0.0
        %v1148 = vmax.f32 %v1124, 0.0
        %v1149 = vmax.f32 %v1127, 0.0
        %v1150 = vmax.f32 %v1132, 0.0
        %v1151 = vmax.f32 %v1135, 0.0
        %v1152 = vmax.f32 %v1140, 0.0
        %v1153 = vmax.f32 %v1143, 0.0
        %v1154 = vpack.c.bf16 %v1147, %v1146
        %v1155 = vpack.c.bf16 %v1149, %v1148
        %v1156 = vpack.c.bf16 %v1151, %v1150
        %v1157 = vpack.c.bf16 %v1153, %v1152
        %v1158 = vld [vmem:[#allocation11] sm:$0xf]
        %v1159 = vld [vmem:[#allocation11 + $0x4] sm:$0xf]
        %v1160 = vld [vmem:[#allocation11 + $0x8] sm:$0xf]
        %v1161 = vld [vmem:[#allocation11 + $0xc] sm:$0xf]
        %v1162 = vld [vmem:[#allocation11 + $0x10] sm:$0xf]
        %v1163 = vld [vmem:[#allocation11 + $0x14] sm:$0xf]
        %v1164 = vld [vmem:[#allocation11 + $0x18] sm:$0xf]
        %v1165 = vld [vmem:[#allocation11 + $0x1c] sm:$0xf]
        %v1166 = vld [vmem:[#allocation11 + $0x20] sm:$0xf]
        %v1167 = vld [vmem:[#allocation11 + $0x24] sm:$0xf]
        %v1168 = vld [vmem:[#allocation11 + $0x28] sm:$0xf]
        %v1169 = vld [vmem:[#allocation11 + $0x2c] sm:$0xf]
        %v1170 = vld [vmem:[#allocation11 + $0x30] sm:$0xf]
        %v1171 = vld [vmem:[#allocation11 + $0x34] sm:$0xf]
        %v1172 = vld [vmem:[#allocation11 + $0x38] sm:$0xf]
        %v1173 = vld [vmem:[#allocation11 + $0x3c] sm:$0xf]
        %v1174 = vld [vmem:[%s9] sm:$0x1]
        %v1176 = vlaneseq
        %v1177 = vshrl.u32 %v1176, 7
        %v1178 = vsub.s32 0, %v1177
        %v1179 = vrot.slane %v1174, %v1178
        %v1197 = vunpack.c.l.b16 %v1158
        %v1198 = vunpack.c.l.b16 %v1159
        %v1199 = vunpack.c.l.b16 %v1160
        %v1200 = vunpack.c.l.b16 %v1161
        %v1201 = vunpack.c.l.b16 %v1162
        %v1202 = vunpack.c.l.b16 %v1163
        %v1203 = vunpack.c.l.b16 %v1164
        %v1204 = vunpack.c.l.b16 %v1165
        %v1205 = vunpack.c.l.b16 %v1166
        %v1206 = vunpack.c.l.b16 %v1167
        %v1207 = vunpack.c.l.b16 %v1168
        %v1208 = vunpack.c.l.b16 %v1169
        %v1209 = vunpack.c.l.b16 %v1170
        %v1210 = vunpack.c.l.b16 %v1171
        %v1211 = vunpack.c.l.b16 %v1172
        %v1212 = vunpack.c.l.b16 %v1173
        %v1213 = vpack.c.b16 %v1198, %v1197
        %v1214 = vpack.c.b16 %v1200, %v1199
        %v1215 = vpack.c.b16 %v1202, %v1201
        %v1216 = vpack.c.b16 %v1204, %v1203
        %v1217 = vpack.c.b16 %v1206, %v1205
        %v1218 = vpack.c.b16 %v1208, %v1207
        %v1219 = vpack.c.b16 %v1210, %v1209
        %v1220 = vpack.c.b16 %v1212, %v1211
        %1229 = vmatprep.subr.bf16.mxu0 0
        %1230 = vmatpush1.bf16.msra.mxu0 %v1220
        %1231 = vmatprep.subr.bf16.mxu0 0
        %1232 = vmatpush1.bf16.msra.mxu0 %v1219
        %1233 = vmatprep.subr.bf16.mxu0 0
        %1234 = vmatpush1.bf16.msra.mxu0 %v1218
        %1235 = vmatprep.subr.bf16.mxu0 0
        %1236 = vmatpush1.bf16.msra.mxu0 %v1217
        %1237 = vmatprep.subr.bf16.mxu0 0
        %1238 = vmatpush1.bf16.msra.mxu0 %v1216
        %1239 = vmatprep.subr.bf16.mxu0 0
        %1240 = vmatpush1.bf16.msra.mxu0 %v1215
        %1241 = vmatprep.subr.bf16.mxu0 0
        %1242 = vmatpush1.bf16.msra.mxu0 %v1214
        %1243 = vmatprep.subr.bf16.mxu0 0
        %1244 = vmatpush1.bf16.msra.mxu0 %v1213
        %1245 = vmatprep.subr.bf16.mxu0 0
        %1246 = vmatpush2.bf16.msra.mxu0 0
        %1247 = vmatprep.subr.bf16.mxu0 0
        %1248 = vmatpush2.bf16.msra.mxu0 0
        %1249 = vmatprep.subr.bf16.mxu0 0
        %1250 = vmatpush2.bf16.msra.mxu0 0
        %1251 = vmatprep.subr.bf16.mxu0 0
        %1252 = vmatpush2.bf16.msra.mxu0 0
        %1253 = vmatprep.subr.bf16.mxu0 0
        %1254 = vmatpush2.bf16.msra.mxu0 0
        %1255 = vmatprep.subr.bf16.mxu0 0
        %1256 = vmatpush2.bf16.msra.mxu0 0
        %1257 = vmatprep.subr.bf16.mxu0 0
        %1258 = vmatpush2.bf16.msra.mxu0 0
        %1259 = vmatprep.subr.bf16.mxu0 0
        %1260 = vmatpush2.bf16.msra.mxu0 0
        %1261 = vmatprep.mubr.bf16.mxu0 0
        %1262 = vmatmul.mubr.bf16.gmra.mxu0 %v1154
        %v1263 = vpop.f32.mrf.mxu0
        %v1264 = vadd.f32 %v1179, %v1263
        %v1265 = vpop.f32.mrf.mxu0
        %v1266 = vpop.f32.mrf.mxu0
        %v1267 = vadd.f32 %v1179, %v1266
        %v1268 = vpop.f32.mrf.mxu0
        %1269 = vmatprep.mubr.bf16.mxu0 0
        %1270 = vmatmul.mubr.bf16.gmra.mxu0 %v1155
        %v1271 = vpop.f32.mrf.mxu0
        %v1272 = vadd.f32 %v1179, %v1271
        %v1273 = vpop.f32.mrf.mxu0
        %v1274 = vpop.f32.mrf.mxu0
        %v1275 = vadd.f32 %v1179, %v1274
        %v1276 = vpop.f32.mrf.mxu0
        %1277 = vmatprep.mubr.bf16.mxu0 0
        %1278 = vmatmul.mubr.bf16.gmra.mxu0 %v1156
        %v1279 = vpop.f32.mrf.mxu0
        %v1280 = vadd.f32 %v1179, %v1279
        %v1281 = vpop.f32.mrf.mxu0
        %v1282 = vpop.f32.mrf.mxu0
        %v1283 = vadd.f32 %v1179, %v1282
        %v1284 = vpop.f32.mrf.mxu0
        %1285 = vmatprep.mubr.bf16.mxu0 0
        %1286 = vmatmul.mubr.bf16.gmra.mxu0 %v1157
        %v1287 = vpop.f32.mrf.mxu0
        %v1288 = vadd.f32 %v1179, %v1287
        %v1289 = vpop.f32.mrf.mxu0
        %v1290 = vpop.f32.mrf.mxu0
        %v1291 = vadd.f32 %v1179, %v1290
        %v1292 = vpop.f32.mrf.mxu0
        %1293 = vdwg.mxu0
        %v1294 = vadd.f32 %v773, %v1264
        %v1295 = vadd.f32 %v774, %v1267
        %v1296 = vadd.f32 %v775, %v1272
        %v1297 = vadd.f32 %v776, %v1275
        %v1298 = vadd.f32 %v777, %v1280
        %v1299 = vadd.f32 %v778, %v1283
        %v1300 = vadd.f32 %v779, %v1288
        %v1301 = vadd.f32 %v780, %v1291
        %v1302 = vmul.f32 %v1294, %v532
        %v1303 = vmul.f32 %v1295, %v537
        %v1304 = vmul.f32 %v1296, %v542
        %v1305 = vmul.f32 %v1297, %v547
        %v1306 = vmul.f32 %v1298, %v552
        %v1307 = vmul.f32 %v1299, %v557
        %v1308 = vmul.f32 %v1300, %v562
        %v1309 = vmul.f32 %v1301, %v567
        %1310 = vst [vmem:[#allocation2 + $0x8] sm:$0xff] %v1302
        %1311 = vst [vmem:[#allocation2 + $0x10] sm:$0xff] %v1303
        %1312 = vst [vmem:[#allocation2 + $0x18] sm:$0xff] %v1304
        %1313 = vst [vmem:[#allocation2 + $0x20] sm:$0xff] %v1305
        %1314 = vst [vmem:[#allocation2 + $0x28] sm:$0xff] %v1306
        %1315 = vst [vmem:[#allocation2 + $0x30] sm:$0xff] %v1307
        %1316 = vst [vmem:[#allocation2 + $0x38] sm:$0xff] %v1308
        %1317 = vst [vmem:[#allocation2 + $0x40] sm:$0xff] %v1309
        %v1318 = vld [vmem:[#allocation2 + $0x6] sm:$0xff]
        %v1319 = vld [vmem:[#allocation2 + $0xe] sm:$0xff]
        %v1320 = vld [vmem:[#allocation2 + $0x16] sm:$0xff]
        %v1321 = vld [vmem:[#allocation2 + $0x1e] sm:$0xff]
        %v1322 = vld [vmem:[#allocation2 + $0x26] sm:$0xff]
        %v1323 = vld [vmem:[#allocation2 + $0x2e] sm:$0xff]
        %v1324 = vld [vmem:[#allocation2 + $0x36] sm:$0xff]
        %v1325 = vld [vmem:[#allocation2 + $0x3e] sm:$0xff]
        %v1326 = vld [vmem:[#allocation2 + $0xa] sm:$0xff]
        %v1327 = vld [vmem:[#allocation2 + $0x12] sm:$0xff]
        %v1328 = vld [vmem:[#allocation2 + $0x1a] sm:$0xff]
        %v1329 = vld [vmem:[#allocation2 + $0x22] sm:$0xff]
        %v1330 = vld [vmem:[#allocation2 + $0x2a] sm:$0xff]
        %v1331 = vld [vmem:[#allocation2 + $0x32] sm:$0xff]
        %v1332 = vld [vmem:[#allocation2 + $0x3a] sm:$0xff]
        %v1333 = vld [vmem:[#allocation2 + $0x42] sm:$0xff]
        %v1334 = vpack.c.bf16 %v1319, %v1318
        %v1335 = vpack.c.bf16 %v1321, %v1320
        %v1336 = vpack.c.bf16 %v1323, %v1322
        %v1337 = vpack.c.bf16 %v1325, %v1324
        %v1338 = vpack.c.bf16 %v1303, %v1302
        %v1339 = vpack.c.bf16 %v1305, %v1304
        %v1340 = vpack.c.bf16 %v1307, %v1306
        %v1341 = vpack.c.bf16 %v1309, %v1308
        %v1342 = vpack.c.bf16 %v1327, %v1326
        %v1343 = vpack.c.bf16 %v1329, %v1328
        %v1344 = vpack.c.bf16 %v1331, %v1330
        %v1345 = vpack.c.bf16 %v1333, %v1332
        %s1346 = scalar_lea.vmem [#allocation9], 192
        %v1347 = vld [vmem:[%s1346] sm:$0xf]
        %v1348 = vld [vmem:[%s1346 + $0x4] sm:$0xf]
        %v1349 = vld [vmem:[%s1346 + $0x8] sm:$0xf]
        %v1350 = vld [vmem:[%s1346 + $0xc] sm:$0xf]
        %v1351 = vld [vmem:[%s1346 + $0x10] sm:$0xf]
        %v1352 = vld [vmem:[%s1346 + $0x14] sm:$0xf]
        %v1353 = vld [vmem:[%s1346 + $0x18] sm:$0xf]
        %v1354 = vld [vmem:[%s1346 + $0x1c] sm:$0xf]
        %v1355 = vld [vmem:[%s1346 + $0x20] sm:$0xf]
        %v1356 = vld [vmem:[%s1346 + $0x24] sm:$0xf]
        %v1357 = vld [vmem:[%s1346 + $0x28] sm:$0xf]
        %v1358 = vld [vmem:[%s1346 + $0x2c] sm:$0xf]
        %v1359 = vld [vmem:[%s1346 + $0x30] sm:$0xf]
        %v1360 = vld [vmem:[%s1346 + $0x34] sm:$0xf]
        %v1361 = vld [vmem:[%s1346 + $0x38] sm:$0xf]
        %v1362 = vld [vmem:[%s1346 + $0x3c] sm:$0xf]
        %v1363 = vld [vmem:[%s1346 + $0x40] sm:$0xf]
        %v1364 = vld [vmem:[%s1346 + $0x44] sm:$0xf]
        %v1365 = vld [vmem:[%s1346 + $0x48] sm:$0xf]
        %v1366 = vld [vmem:[%s1346 + $0x4c] sm:$0xf]
        %v1367 = vld [vmem:[%s1346 + $0x50] sm:$0xf]
        %v1368 = vld [vmem:[%s1346 + $0x54] sm:$0xf]
        %v1369 = vld [vmem:[%s1346 + $0x58] sm:$0xf]
        %v1370 = vld [vmem:[%s1346 + $0x5c] sm:$0xf]
        %v1371 = vld [vmem:[%s1346 + $0x60] sm:$0xf]
        %v1372 = vld [vmem:[%s1346 + $0x64] sm:$0xf]
        %v1373 = vld [vmem:[%s1346 + $0x68] sm:$0xf]
        %v1374 = vld [vmem:[%s1346 + $0x6c] sm:$0xf]
        %v1375 = vld [vmem:[%s1346 + $0x70] sm:$0xf]
        %v1376 = vld [vmem:[%s1346 + $0x74] sm:$0xf]
        %v1377 = vld [vmem:[%s1346 + $0x78] sm:$0xf]
        %v1378 = vld [vmem:[%s1346 + $0x7c] sm:$0xf]
        %v1379 = vld [vmem:[%s1346 + $0x80] sm:$0xf]
        %v1380 = vld [vmem:[%s1346 + $0x84] sm:$0xf]
        %v1381 = vld [vmem:[%s1346 + $0x88] sm:$0xf]
        %v1382 = vld [vmem:[%s1346 + $0x8c] sm:$0xf]
        %v1383 = vld [vmem:[%s1346 + $0x90] sm:$0xf]
        %v1384 = vld [vmem:[%s1346 + $0x94] sm:$0xf]
        %v1385 = vld [vmem:[%s1346 + $0x98] sm:$0xf]
        %v1386 = vld [vmem:[%s1346 + $0x9c] sm:$0xf]
        %v1387 = vld [vmem:[%s1346 + $0xa0] sm:$0xf]
        %v1388 = vld [vmem:[%s1346 + $0xa4] sm:$0xf]
        %v1389 = vld [vmem:[%s1346 + $0xa8] sm:$0xf]
        %v1390 = vld [vmem:[%s1346 + $0xac] sm:$0xf]
        %v1391 = vld [vmem:[%s1346 + $0xb0] sm:$0xf]
        %v1392 = vld [vmem:[%s1346 + $0xb4] sm:$0xf]
        %v1393 = vld [vmem:[%s1346 + $0xb8] sm:$0xf]
        %v1394 = vld [vmem:[%s1346 + $0xbc] sm:$0xf]
        %s1395 = scalar_lea.vmem %s7, 1
        %v1396 = vld [vmem:[%s1395] sm:$0x1]
        %v1398 = vlaneseq
        %v1399 = vshrl.u32 %v1398, 7
        %v1400 = vsub.s32 0, %v1399
        %v1401 = vrot.slane %v1396, %v1400
        %v1451 = vunpack.c.l.b16 %v1347
        %v1452 = vunpack.c.l.b16 %v1348
        %v1453 = vunpack.c.l.b16 %v1349
        %v1454 = vunpack.c.l.b16 %v1350
        %v1455 = vunpack.c.l.b16 %v1351
        %v1456 = vunpack.c.l.b16 %v1352
        %v1457 = vunpack.c.l.b16 %v1353
        %v1458 = vunpack.c.l.b16 %v1354
        %v1459 = vunpack.c.l.b16 %v1355
        %v1460 = vunpack.c.l.b16 %v1356
        %v1461 = vunpack.c.l.b16 %v1357
        %v1462 = vunpack.c.l.b16 %v1358
        %v1463 = vunpack.c.l.b16 %v1359
        %v1464 = vunpack.c.l.b16 %v1360
        %v1465 = vunpack.c.l.b16 %v1361
        %v1466 = vunpack.c.l.b16 %v1362
        %v1467 = vunpack.c.l.b16 %v1363
        %v1468 = vunpack.c.l.b16 %v1364
        %v1469 = vunpack.c.l.b16 %v1365
        %v1470 = vunpack.c.l.b16 %v1366
        %v1471 = vunpack.c.l.b16 %v1367
        %v1472 = vunpack.c.l.b16 %v1368
        %v1473 = vunpack.c.l.b16 %v1369
        %v1474 = vunpack.c.l.b16 %v1370
        %v1475 = vunpack.c.l.b16 %v1371
        %v1476 = vunpack.c.l.b16 %v1372
        %v1477 = vunpack.c.l.b16 %v1373
        %v1478 = vunpack.c.l.b16 %v1374
        %v1479 = vunpack.c.l.b16 %v1375
        %v1480 = vunpack.c.l.b16 %v1376
        %v1481 = vunpack.c.l.b16 %v1377
        %v1482 = vunpack.c.l.b16 %v1378
        %v1483 = vunpack.c.l.b16 %v1379
        %v1484 = vunpack.c.l.b16 %v1380
        %v1485 = vunpack.c.l.b16 %v1381
        %v1486 = vunpack.c.l.b16 %v1382
        %v1487 = vunpack.c.l.b16 %v1383
        %v1488 = vunpack.c.l.b16 %v1384
        %v1489 = vunpack.c.l.b16 %v1385
        %v1490 = vunpack.c.l.b16 %v1386
        %v1491 = vunpack.c.l.b16 %v1387
        %v1492 = vunpack.c.l.b16 %v1388
        %v1493 = vunpack.c.l.b16 %v1389
        %v1494 = vunpack.c.l.b16 %v1390
        %v1495 = vunpack.c.l.b16 %v1391
        %v1496 = vunpack.c.l.b16 %v1392
        %v1497 = vunpack.c.l.b16 %v1393
        %v1498 = vunpack.c.l.b16 %v1394
        %v1499 = vpack.c.b16 %v1452, %v1451
        %v1500 = vpack.c.b16 %v1454, %v1453
        %v1501 = vpack.c.b16 %v1456, %v1455
        %v1502 = vpack.c.b16 %v1458, %v1457
        %v1503 = vpack.c.b16 %v1460, %v1459
        %v1504 = vpack.c.b16 %v1462, %v1461
        %v1505 = vpack.c.b16 %v1464, %v1463
        %v1506 = vpack.c.b16 %v1466, %v1465
        %v1507 = vpack.c.b16 %v1468, %v1467
        %v1508 = vpack.c.b16 %v1470, %v1469
        %v1509 = vpack.c.b16 %v1472, %v1471
        %v1510 = vpack.c.b16 %v1474, %v1473
        %v1511 = vpack.c.b16 %v1476, %v1475
        %v1512 = vpack.c.b16 %v1478, %v1477
        %v1513 = vpack.c.b16 %v1480, %v1479
        %v1514 = vpack.c.b16 %v1482, %v1481
        %v1515 = vpack.c.b16 %v1484, %v1483
        %v1516 = vpack.c.b16 %v1486, %v1485
        %v1517 = vpack.c.b16 %v1488, %v1487
        %v1518 = vpack.c.b16 %v1490, %v1489
        %v1519 = vpack.c.b16 %v1492, %v1491
        %v1520 = vpack.c.b16 %v1494, %v1493
        %v1521 = vpack.c.b16 %v1496, %v1495
        %v1522 = vpack.c.b16 %v1498, %v1497
        %1547 = vmatprep.subr.bf16.mxu0 0
        %1548 = vmatpush1.bf16.msra.mxu0 %v1506
        %1549 = vmatprep.subr.bf16.mxu0 0
        %1550 = vmatpush1.bf16.msra.mxu0 %v1505
        %1551 = vmatprep.subr.bf16.mxu0 0
        %1552 = vmatpush1.bf16.msra.mxu0 %v1504
        %1553 = vmatprep.subr.bf16.mxu0 0
        %1554 = vmatpush1.bf16.msra.mxu0 %v1503
        %1555 = vmatprep.subr.bf16.mxu0 0
        %1556 = vmatpush1.bf16.msra.mxu0 %v1502
        %1557 = vmatprep.subr.bf16.mxu0 0
        %1558 = vmatpush1.bf16.msra.mxu0 %v1501
        %1559 = vmatprep.subr.bf16.mxu0 0
        %1560 = vmatpush1.bf16.msra.mxu0 %v1500
        %1561 = vmatprep.subr.bf16.mxu0 0
        %1562 = vmatpush1.bf16.msra.mxu0 %v1499
        %1563 = vmatprep.subr.bf16.mxu0 0
        %1564 = vmatpush2.bf16.msra.mxu0 %v1514
        %1565 = vmatprep.subr.bf16.mxu0 0
        %1566 = vmatpush2.bf16.msra.mxu0 %v1513
        %1567 = vmatprep.subr.bf16.mxu0 0
        %1568 = vmatpush2.bf16.msra.mxu0 %v1512
        %1569 = vmatprep.subr.bf16.mxu0 0
        %1570 = vmatpush2.bf16.msra.mxu0 %v1511
        %1571 = vmatprep.subr.bf16.mxu0 0
        %1572 = vmatpush2.bf16.msra.mxu0 %v1510
        %1573 = vmatprep.subr.bf16.mxu0 0
        %1574 = vmatpush2.bf16.msra.mxu0 %v1509
        %1575 = vmatprep.subr.bf16.mxu0 0
        %1576 = vmatpush2.bf16.msra.mxu0 %v1508
        %1577 = vmatprep.subr.bf16.mxu0 0
        %1578 = vmatpush2.bf16.msra.mxu0 %v1507
        %1579 = vmatprep.mubr.bf16.mxu0 %v1338
        %1580 = vmatmul.mubr.bf16.gmra.mxu0 %v1334
        %v1581 = vpop.f32.mrf.mxu0
        %v1582 = vadd.f32 %v1401, %v1581
        %v1583 = vpop.f32.mrf.mxu0
        %v1584 = vpop.f32.mrf.mxu0
        %v1585 = vadd.f32 %v1401, %v1584
        %v1586 = vpop.f32.mrf.mxu0
        %1587 = vmatprep.mubr.bf16.mxu0 %v1339
        %1588 = vmatmul.mubr.bf16.gmra.mxu0 %v1335
        %v1589 = vpop.f32.mrf.mxu0
        %v1590 = vadd.f32 %v1401, %v1589
        %v1591 = vpop.f32.mrf.mxu0
        %v1592 = vpop.f32.mrf.mxu0
        %v1593 = vadd.f32 %v1401, %v1592
        %v1594 = vpop.f32.mrf.mxu0
        %1595 = vmatprep.mubr.bf16.mxu0 %v1340
        %1596 = vmatmul.mubr.bf16.gmra.mxu0 %v1336
        %v1597 = vpop.f32.mrf.mxu0
        %v1598 = vadd.f32 %v1401, %v1597
        %v1599 = vpop.f32.mrf.mxu0
        %v1600 = vpop.f32.mrf.mxu0
        %v1601 = vadd.f32 %v1401, %v1600
        %v1602 = vpop.f32.mrf.mxu0
        %1603 = vmatprep.mubr.bf16.mxu0 %v1341
        %1604 = vmatmul.mubr.bf16.gmra.mxu0 %v1337
        %v1605 = vpop.f32.mrf.mxu0
        %v1606 = vadd.f32 %v1401, %v1605
        %v1607 = vpop.f32.mrf.mxu0
        %v1608 = vpop.f32.mrf.mxu0
        %v1609 = vadd.f32 %v1401, %v1608
        %v1610 = vpop.f32.mrf.mxu0
        %1611 = vdwg.mxu0
        %1612 = vmatprep.subr.bf16.mxu0 0
        %1613 = vmatpush1.bf16.msra.mxu0 %v1522
        %1614 = vmatprep.subr.bf16.mxu0 0
        %1615 = vmatpush1.bf16.msra.mxu0 %v1521
        %1616 = vmatprep.subr.bf16.mxu0 0
        %1617 = vmatpush1.bf16.msra.mxu0 %v1520
        %1618 = vmatprep.subr.bf16.mxu0 0
        %1619 = vmatpush1.bf16.msra.mxu0 %v1519
        %1620 = vmatprep.subr.bf16.mxu0 0
        %1621 = vmatpush1.bf16.msra.mxu0 %v1518
        %1622 = vmatprep.subr.bf16.mxu0 0
        %1623 = vmatpush1.bf16.msra.mxu0 %v1517
        %1624 = vmatprep.subr.bf16.mxu0 0
        %1625 = vmatpush1.bf16.msra.mxu0 %v1516
        %1626 = vmatprep.subr.bf16.mxu0 0
        %1627 = vmatpush1.bf16.msra.mxu0 %v1515
        %1628 = vmatprep.subr.bf16.mxu0 0
        %1629 = vmatpush2.bf16.msra.mxu0 0
        %1630 = vmatprep.subr.bf16.mxu0 0
        %1631 = vmatpush2.bf16.msra.mxu0 0
        %1632 = vmatprep.subr.bf16.mxu0 0
        %1633 = vmatpush2.bf16.msra.mxu0 0
        %1634 = vmatprep.subr.bf16.mxu0 0
        %1635 = vmatpush2.bf16.msra.mxu0 0
        %1636 = vmatprep.subr.bf16.mxu0 0
        %1637 = vmatpush2.bf16.msra.mxu0 0
        %1638 = vmatprep.subr.bf16.mxu0 0
        %1639 = vmatpush2.bf16.msra.mxu0 0
        %1640 = vmatprep.subr.bf16.mxu0 0
        %1641 = vmatpush2.bf16.msra.mxu0 0
        %1642 = vmatprep.subr.bf16.mxu0 0
        %1643 = vmatpush2.bf16.msra.mxu0 0
        %1644 = vmatprep.mubr.bf16.mxu0 0
        %1645 = vmatmul.mubr.bf16.gmra.mxu0 %v1342
        %v1646 = vpop.f32.mrf.mxu0
        %v1647 = vadd.f32 %v1582, %v1646
        %v1648 = vpop.f32.mrf.mxu0
        %v1649 = vpop.f32.mrf.mxu0
        %v1650 = vadd.f32 %v1585, %v1649
        %v1651 = vpop.f32.mrf.mxu0
        %1652 = vmatprep.mubr.bf16.mxu0 0
        %1653 = vmatmul.mubr.bf16.gmra.mxu0 %v1343
        %v1654 = vpop.f32.mrf.mxu0
        %v1655 = vadd.f32 %v1590, %v1654
        %v1656 = vpop.f32.mrf.mxu0
        %v1657 = vpop.f32.mrf.mxu0
        %v1658 = vadd.f32 %v1593, %v1657
        %v1659 = vpop.f32.mrf.mxu0
        %1660 = vmatprep.mubr.bf16.mxu0 0
        %1661 = vmatmul.mubr.bf16.gmra.mxu0 %v1344
        %v1662 = vpop.f32.mrf.mxu0
        %v1663 = vadd.f32 %v1598, %v1662
        %v1664 = vpop.f32.mrf.mxu0
        %v1665 = vpop.f32.mrf.mxu0
        %v1666 = vadd.f32 %v1601, %v1665
        %v1667 = vpop.f32.mrf.mxu0
        %1668 = vmatprep.mubr.bf16.mxu0 0
        %1669 = vmatmul.mubr.bf16.gmra.mxu0 %v1345
        %v1670 = vpop.f32.mrf.mxu0
        %v1671 = vadd.f32 %v1606, %v1670
        %v1672 = vpop.f32.mrf.mxu0
        %v1673 = vpop.f32.mrf.mxu0
        %v1674 = vadd.f32 %v1609, %v1673
        %v1675 = vpop.f32.mrf.mxu0
        %1676 = vdwg.mxu0
        %v1677 = vmax.f32 %v1647, 0.0
        %v1678 = vmax.f32 %v1650, 0.0
        %v1679 = vmax.f32 %v1655, 0.0
        %v1680 = vmax.f32 %v1658, 0.0
        %v1681 = vmax.f32 %v1663, 0.0
        %v1682 = vmax.f32 %v1666, 0.0
        %v1683 = vmax.f32 %v1671, 0.0
        %v1684 = vmax.f32 %v1674, 0.0
        %v1685 = vpack.c.bf16 %v1678, %v1677
        %v1686 = vpack.c.bf16 %v1680, %v1679
        %v1687 = vpack.c.bf16 %v1682, %v1681
        %v1688 = vpack.c.bf16 %v1684, %v1683
        %s1689 = scalar_lea.vmem [#allocation11], 64
        %v1690 = vld [vmem:[%s1689] sm:$0xf]
        %v1691 = vld [vmem:[%s1689 + $0x4] sm:$0xf]
        %v1692 = vld [vmem:[%s1689 + $0x8] sm:$0xf]
        %v1693 = vld [vmem:[%s1689 + $0xc] sm:$0xf]
        %v1694 = vld [vmem:[%s1689 + $0x10] sm:$0xf]
        %v1695 = vld [vmem:[%s1689 + $0x14] sm:$0xf]
        %v1696 = vld [vmem:[%s1689 + $0x18] sm:$0xf]
        %v1697 = vld [vmem:[%s1689 + $0x1c] sm:$0xf]
        %v1698 = vld [vmem:[%s1689 + $0x20] sm:$0xf]
        %v1699 = vld [vmem:[%s1689 + $0x24] sm:$0xf]
        %v1700 = vld [vmem:[%s1689 + $0x28] sm:$0xf]
        %v1701 = vld [vmem:[%s1689 + $0x2c] sm:$0xf]
        %v1702 = vld [vmem:[%s1689 + $0x30] sm:$0xf]
        %v1703 = vld [vmem:[%s1689 + $0x34] sm:$0xf]
        %v1704 = vld [vmem:[%s1689 + $0x38] sm:$0xf]
        %v1705 = vld [vmem:[%s1689 + $0x3c] sm:$0xf]
        %s1706 = scalar_lea.vmem %s9, 1
        %v1707 = vld [vmem:[%s1706] sm:$0x1]
        %v1709 = vlaneseq
        %v1710 = vshrl.u32 %v1709, 7
        %v1711 = vsub.s32 0, %v1710
        %v1712 = vrot.slane %v1707, %v1711
        %v1730 = vunpack.c.l.b16 %v1690
        %v1731 = vunpack.c.l.b16 %v1691
        %v1732 = vunpack.c.l.b16 %v1692
        %v1733 = vunpack.c.l.b16 %v1693
        %v1734 = vunpack.c.l.b16 %v1694
        %v1735 = vunpack.c.l.b16 %v1695
        %v1736 = vunpack.c.l.b16 %v1696
        %v1737 = vunpack.c.l.b16 %v1697
        %v1738 = vunpack.c.l.b16 %v1698
        %v1739 = vunpack.c.l.b16 %v1699
        %v1740 = vunpack.c.l.b16 %v1700
        %v1741 = vunpack.c.l.b16 %v1701
        %v1742 = vunpack.c.l.b16 %v1702
        %v1743 = vunpack.c.l.b16 %v1703
        %v1744 = vunpack.c.l.b16 %v1704
        %v1745 = vunpack.c.l.b16 %v1705
        %v1746 = vpack.c.b16 %v1731, %v1730
        %v1747 = vpack.c.b16 %v1733, %v1732
        %v1748 = vpack.c.b16 %v1735, %v1734
        %v1749 = vpack.c.b16 %v1737, %v1736
        %v1750 = vpack.c.b16 %v1739, %v1738
        %v1751 = vpack.c.b16 %v1741, %v1740
        %v1752 = vpack.c.b16 %v1743, %v1742
        %v1753 = vpack.c.b16 %v1745, %v1744
        %1762 = vmatprep.subr.bf16.mxu0 0
        %1763 = vmatpush1.bf16.msra.mxu0 %v1753
        %1764 = vmatprep.subr.bf16.mxu0 0
        %1765 = vmatpush1.bf16.msra.mxu0 %v1752
        %1766 = vmatprep.subr.bf16.mxu0 0
        %1767 = vmatpush1.bf16.msra.mxu0 %v1751
        %1768 = vmatprep.subr.bf16.mxu0 0
        %1769 = vmatpush1.bf16.msra.mxu0 %v1750
        %1770 = vmatprep.subr.bf16.mxu0 0
        %1771 = vmatpush1.bf16.msra.mxu0 %v1749
        %1772 = vmatprep.subr.bf16.mxu0 0
        %1773 = vmatpush1.bf16.msra.mxu0 %v1748
        %1774 = vmatprep.subr.bf16.mxu0 0
        %1775 = vmatpush1.bf16.msra.mxu0 %v1747
        %1776 = vmatprep.subr.bf16.mxu0 0
        %1777 = vmatpush1.bf16.msra.mxu0 %v1746
        %1778 = vmatprep.subr.bf16.mxu0 0
        %1779 = vmatpush2.bf16.msra.mxu0 0
        %1780 = vmatprep.subr.bf16.mxu0 0
        %1781 = vmatpush2.bf16.msra.mxu0 0
        %1782 = vmatprep.subr.bf16.mxu0 0
        %1783 = vmatpush2.bf16.msra.mxu0 0
        %1784 = vmatprep.subr.bf16.mxu0 0
        %1785 = vmatpush2.bf16.msra.mxu0 0
        %1786 = vmatprep.subr.bf16.mxu0 0
        %1787 = vmatpush2.bf16.msra.mxu0 0
        %1788 = vmatprep.subr.bf16.mxu0 0
        %1789 = vmatpush2.bf16.msra.mxu0 0
        %1790 = vmatprep.subr.bf16.mxu0 0
        %1791 = vmatpush2.bf16.msra.mxu0 0
        %1792 = vmatprep.subr.bf16.mxu0 0
        %1793 = vmatpush2.bf16.msra.mxu0 0
        %1794 = vmatprep.mubr.bf16.mxu0 0
        %1795 = vmatmul.mubr.bf16.gmra.mxu0 %v1685
        %v1796 = vpop.f32.mrf.mxu0
        %v1797 = vadd.f32 %v1712, %v1796
        %v1798 = vpop.f32.mrf.mxu0
        %v1799 = vpop.f32.mrf.mxu0
        %v1800 = vadd.f32 %v1712, %v1799
        %v1801 = vpop.f32.mrf.mxu0
        %1802 = vmatprep.mubr.bf16.mxu0 0
        %1803 = vmatmul.mubr.bf16.gmra.mxu0 %v1686
        %v1804 = vpop.f32.mrf.mxu0
        %v1805 = vadd.f32 %v1712, %v1804
        %v1806 = vpop.f32.mrf.mxu0
        %v1807 = vpop.f32.mrf.mxu0
        %v1808 = vadd.f32 %v1712, %v1807
        %v1809 = vpop.f32.mrf.mxu0
        %1810 = vmatprep.mubr.bf16.mxu0 0
        %1811 = vmatmul.mubr.bf16.gmra.mxu0 %v1687
        %v1812 = vpop.f32.mrf.mxu0
        %v1813 = vadd.f32 %v1712, %v1812
        %v1814 = vpop.f32.mrf.mxu0
        %v1815 = vpop.f32.mrf.mxu0
        %v1816 = vadd.f32 %v1712, %v1815
        %v1817 = vpop.f32.mrf.mxu0
        %1818 = vmatprep.mubr.bf16.mxu0 0
        %1819 = vmatmul.mubr.bf16.gmra.mxu0 %v1688
        %v1820 = vpop.f32.mrf.mxu0
        %v1821 = vadd.f32 %v1712, %v1820
        %v1822 = vpop.f32.mrf.mxu0
        %v1823 = vpop.f32.mrf.mxu0
        %v1824 = vadd.f32 %v1712, %v1823
        %v1825 = vpop.f32.mrf.mxu0
        %1826 = vdwg.mxu0
        %v1827 = vadd.f32 %v1302, %v1797
        %v1828 = vadd.f32 %v1303, %v1800
        %v1829 = vadd.f32 %v1304, %v1805
        %v1830 = vadd.f32 %v1305, %v1808
        %v1831 = vadd.f32 %v1306, %v1813
        %v1832 = vadd.f32 %v1307, %v1816
        %v1833 = vadd.f32 %v1308, %v1821
        %v1834 = vadd.f32 %v1309, %v1824
        %v1835 = vmul.f32 %v1827, %v532
        %v1836 = vmul.f32 %v1828, %v537
        %v1837 = vmul.f32 %v1829, %v542
        %v1838 = vmul.f32 %v1830, %v547
        %v1839 = vmul.f32 %v1831, %v552
        %v1840 = vmul.f32 %v1832, %v557
        %v1841 = vmul.f32 %v1833, %v562
        %v1842 = vmul.f32 %v1834, %v567
        %1843 = vst [vmem:[#allocation2 + $0x8] sm:$0xff] %v1835
        %1844 = vst [vmem:[#allocation2 + $0x10] sm:$0xff] %v1836
        %1845 = vst [vmem:[#allocation2 + $0x18] sm:$0xff] %v1837
        %1846 = vst [vmem:[#allocation2 + $0x20] sm:$0xff] %v1838
        %1847 = vst [vmem:[#allocation2 + $0x28] sm:$0xff] %v1839
        %1848 = vst [vmem:[#allocation2 + $0x30] sm:$0xff] %v1840
        %1849 = vst [vmem:[#allocation2 + $0x38] sm:$0xff] %v1841
        %1850 = vst [vmem:[#allocation2 + $0x40] sm:$0xff] %v1842
        %v1851 = vld [vmem:[#allocation2 + $0x4] sm:$0xff]
        %v1852 = vld [vmem:[#allocation2 + $0xc] sm:$0xff]
        %v1853 = vld [vmem:[#allocation2 + $0x14] sm:$0xff]
        %v1854 = vld [vmem:[#allocation2 + $0x1c] sm:$0xff]
        %v1855 = vld [vmem:[#allocation2 + $0x24] sm:$0xff]
        %v1856 = vld [vmem:[#allocation2 + $0x2c] sm:$0xff]
        %v1857 = vld [vmem:[#allocation2 + $0x34] sm:$0xff]
        %v1858 = vld [vmem:[#allocation2 + $0x3c] sm:$0xff]
        %v1859 = vld [vmem:[#allocation2 + $0x44] sm:$0xff]
        %v1860 = vpack.c.bf16 %v1852, %v1851
        %v1861 = vpack.c.bf16 %v1854, %v1853
        %v1862 = vpack.c.bf16 %v1856, %v1855
        %v1863 = vpack.c.bf16 %v1858, %v1857
        %v1864 = vpack.c.bf16 %v1836, %v1835
        %v1865 = vpack.c.bf16 %v1838, %v1837
        %v1866 = vpack.c.bf16 %v1840, %v1839
        %v1867 = vpack.c.bf16 %v1842, %v1841
        %v1868 = vpack.c.bf16 %v1853, %v1852
        %v1869 = vpack.c.bf16 %v1855, %v1854
        %v1870 = vpack.c.bf16 %v1857, %v1856
        %v1871 = vpack.c.bf16 %v1859, %v1858
        %s1872 = scalar_lea.vmem [#allocation9], 384
        %v1873 = vld [vmem:[%s1872] sm:$0xf]
        %v1874 = vld [vmem:[%s1872 + $0x4] sm:$0xf]
        %v1875 = vld [vmem:[%s1872 + $0x8] sm:$0xf]
        %v1876 = vld [vmem:[%s1872 + $0xc] sm:$0xf]
        %v1877 = vld [vmem:[%s1872 + $0x10] sm:$0xf]
        %v1878 = vld [vmem:[%s1872 + $0x14] sm:$0xf]
        %v1879 = vld [vmem:[%s1872 + $0x18] sm:$0xf]
        %v1880 = vld [vmem:[%s1872 + $0x1c] sm:$0xf]
        %v1881 = vld [vmem:[%s1872 + $0x20] sm:$0xf]
        %v1882 = vld [vmem:[%s1872 + $0x24] sm:$0xf]
        %v1883 = vld [vmem:[%s1872 + $0x28] sm:$0xf]
        %v1884 = vld [vmem:[%s1872 + $0x2c] sm:$0xf]
        %v1885 = vld [vmem:[%s1872 + $0x30] sm:$0xf]
        %v1886 = vld [vmem:[%s1872 + $0x34] sm:$0xf]
        %v1887 = vld [vmem:[%s1872 + $0x38] sm:$0xf]
        %v1888 = vld [vmem:[%s1872 + $0x3c] sm:$0xf]
        %v1889 = vld [vmem:[%s1872 + $0x40] sm:$0xf]
        %v1890 = vld [vmem:[%s1872 + $0x44] sm:$0xf]
        %v1891 = vld [vmem:[%s1872 + $0x48] sm:$0xf]
        %v1892 = vld [vmem:[%s1872 + $0x4c] sm:$0xf]
        %v1893 = vld [vmem:[%s1872 + $0x50] sm:$0xf]
        %v1894 = vld [vmem:[%s1872 + $0x54] sm:$0xf]
        %v1895 = vld [vmem:[%s1872 + $0x58] sm:$0xf]
        %v1896 = vld [vmem:[%s1872 + $0x5c] sm:$0xf]
        %v1897 = vld [vmem:[%s1872 + $0x60] sm:$0xf]
        %v1898 = vld [vmem:[%s1872 + $0x64] sm:$0xf]
        %v1899 = vld [vmem:[%s1872 + $0x68] sm:$0xf]
        %v1900 = vld [vmem:[%s1872 + $0x6c] sm:$0xf]
        %v1901 = vld [vmem:[%s1872 + $0x70] sm:$0xf]
        %v1902 = vld [vmem:[%s1872 + $0x74] sm:$0xf]
        %v1903 = vld [vmem:[%s1872 + $0x78] sm:$0xf]
        %v1904 = vld [vmem:[%s1872 + $0x7c] sm:$0xf]
        %v1905 = vld [vmem:[%s1872 + $0x80] sm:$0xf]
        %v1906 = vld [vmem:[%s1872 + $0x84] sm:$0xf]
        %v1907 = vld [vmem:[%s1872 + $0x88] sm:$0xf]
        %v1908 = vld [vmem:[%s1872 + $0x8c] sm:$0xf]
        %v1909 = vld [vmem:[%s1872 + $0x90] sm:$0xf]
        %v1910 = vld [vmem:[%s1872 + $0x94] sm:$0xf]
        %v1911 = vld [vmem:[%s1872 + $0x98] sm:$0xf]
        %v1912 = vld [vmem:[%s1872 + $0x9c] sm:$0xf]
        %v1913 = vld [vmem:[%s1872 + $0xa0] sm:$0xf]
        %v1914 = vld [vmem:[%s1872 + $0xa4] sm:$0xf]
        %v1915 = vld [vmem:[%s1872 + $0xa8] sm:$0xf]
        %v1916 = vld [vmem:[%s1872 + $0xac] sm:$0xf]
        %v1917 = vld [vmem:[%s1872 + $0xb0] sm:$0xf]
        %v1918 = vld [vmem:[%s1872 + $0xb4] sm:$0xf]
        %v1919 = vld [vmem:[%s1872 + $0xb8] sm:$0xf]
        %v1920 = vld [vmem:[%s1872 + $0xbc] sm:$0xf]
        %s1921 = scalar_lea.vmem %s7, 2
        %v1922 = vld [vmem:[%s1921] sm:$0x1]
        %v1924 = vlaneseq
        %v1925 = vshrl.u32 %v1924, 7
        %v1926 = vsub.s32 0, %v1925
        %v1927 = vrot.slane %v1922, %v1926
        %v1977 = vunpack.c.l.b16 %v1873
        %v1978 = vunpack.c.l.b16 %v1874
        %v1979 = vunpack.c.l.b16 %v1875
        %v1980 = vunpack.c.l.b16 %v1876
        %v1981 = vunpack.c.l.b16 %v1877
        %v1982 = vunpack.c.l.b16 %v1878
        %v1983 = vunpack.c.l.b16 %v1879
        %v1984 = vunpack.c.l.b16 %v1880
        %v1985 = vunpack.c.l.b16 %v1881
        %v1986 = vunpack.c.l.b16 %v1882
        %v1987 = vunpack.c.l.b16 %v1883
        %v1988 = vunpack.c.l.b16 %v1884
        %v1989 = vunpack.c.l.b16 %v1885
        %v1990 = vunpack.c.l.b16 %v1886
        %v1991 = vunpack.c.l.b16 %v1887
        %v1992 = vunpack.c.l.b16 %v1888
        %v1993 = vunpack.c.l.b16 %v1889
        %v1994 = vunpack.c.l.b16 %v1890
        %v1995 = vunpack.c.l.b16 %v1891
        %v1996 = vunpack.c.l.b16 %v1892
        %v1997 = vunpack.c.l.b16 %v1893
        %v1998 = vunpack.c.l.b16 %v1894
        %v1999 = vunpack.c.l.b16 %v1895
        %v2000 = vunpack.c.l.b16 %v1896
        %v2001 = vunpack.c.l.b16 %v1897
        %v2002 = vunpack.c.l.b16 %v1898
        %v2003 = vunpack.c.l.b16 %v1899
        %v2004 = vunpack.c.l.b16 %v1900
        %v2005 = vunpack.c.l.b16 %v1901
        %v2006 = vunpack.c.l.b16 %v1902
        %v2007 = vunpack.c.l.b16 %v1903
        %v2008 = vunpack.c.l.b16 %v1904
        %v2009 = vunpack.c.l.b16 %v1905
        %v2010 = vunpack.c.l.b16 %v1906
        %v2011 = vunpack.c.l.b16 %v1907
        %v2012 = vunpack.c.l.b16 %v1908
        %v2013 = vunpack.c.l.b16 %v1909
        %v2014 = vunpack.c.l.b16 %v1910
        %v2015 = vunpack.c.l.b16 %v1911
        %v2016 = vunpack.c.l.b16 %v1912
        %v2017 = vunpack.c.l.b16 %v1913
        %v2018 = vunpack.c.l.b16 %v1914
        %v2019 = vunpack.c.l.b16 %v1915
        %v2020 = vunpack.c.l.b16 %v1916
        %v2021 = vunpack.c.l.b16 %v1917
        %v2022 = vunpack.c.l.b16 %v1918
        %v2023 = vunpack.c.l.b16 %v1919
        %v2024 = vunpack.c.l.b16 %v1920
        %v2025 = vpack.c.b16 %v1978, %v1977
        %v2026 = vpack.c.b16 %v1980, %v1979
        %v2027 = vpack.c.b16 %v1982, %v1981
        %v2028 = vpack.c.b16 %v1984, %v1983
        %v2029 = vpack.c.b16 %v1986, %v1985
        %v2030 = vpack.c.b16 %v1988, %v1987
        %v2031 = vpack.c.b16 %v1990, %v1989
        %v2032 = vpack.c.b16 %v1992, %v1991
        %v2033 = vpack.c.b16 %v1994, %v1993
        %v2034 = vpack.c.b16 %v1996, %v1995
        %v2035 = vpack.c.b16 %v1998, %v1997
        %v2036 = vpack.c.b16 %v2000, %v1999
        %v2037 = vpack.c.b16 %v2002, %v2001
        %v2038 = vpack.c.b16 %v2004, %v2003
        %v2039 = vpack.c.b16 %v2006, %v2005
        %v2040 = vpack.c.b16 %v2008, %v2007
        %v2041 = vpack.c.b16 %v2010, %v2009
        %v2042 = vpack.c.b16 %v2012, %v2011
        %v2043 = vpack.c.b16 %v2014, %v2013
        %v2044 = vpack.c.b16 %v2016, %v2015
        %v2045 = vpack.c.b16 %v2018, %v2017
        %v2046 = vpack.c.b16 %v2020, %v2019
        %v2047 = vpack.c.b16 %v2022, %v2021
        %v2048 = vpack.c.b16 %v2024, %v2023
        %2073 = vmatprep.subr.bf16.mxu0 0
        %2074 = vmatpush1.bf16.msra.mxu0 %v2032
        %2075 = vmatprep.subr.bf16.mxu0 0
        %2076 = vmatpush1.bf16.msra.mxu0 %v2031
        %2077 = vmatprep.subr.bf16.mxu0 0
        %2078 = vmatpush1.bf16.msra.mxu0 %v2030
        %2079 = vmatprep.subr.bf16.mxu0 0
        %2080 = vmatpush1.bf16.msra.mxu0 %v2029
        %2081 = vmatprep.subr.bf16.mxu0 0
        %2082 = vmatpush1.bf16.msra.mxu0 %v2028
        %2083 = vmatprep.subr.bf16.mxu0 0
        %2084 = vmatpush1.bf16.msra.mxu0 %v2027
        %2085 = vmatprep.subr.bf16.mxu0 0
        %2086 = vmatpush1.bf16.msra.mxu0 %v2026
        %2087 = vmatprep.subr.bf16.mxu0 0
        %2088 = vmatpush1.bf16.msra.mxu0 %v2025
        %2089 = vmatprep.subr.bf16.mxu0 0
        %2090 = vmatpush2.bf16.msra.mxu0 %v2040
        %2091 = vmatprep.subr.bf16.mxu0 0
        %2092 = vmatpush2.bf16.msra.mxu0 %v2039
        %2093 = vmatprep.subr.bf16.mxu0 0
        %2094 = vmatpush2.bf16.msra.mxu0 %v2038
        %2095 = vmatprep.subr.bf16.mxu0 0
        %2096 = vmatpush2.bf16.msra.mxu0 %v2037
        %2097 = vmatprep.subr.bf16.mxu0 0
        %2098 = vmatpush2.bf16.msra.mxu0 %v2036
        %2099 = vmatprep.subr.bf16.mxu0 0
        %2100 = vmatpush2.bf16.msra.mxu0 %v2035
        %2101 = vmatprep.subr.bf16.mxu0 0
        %2102 = vmatpush2.bf16.msra.mxu0 %v2034
        %2103 = vmatprep.subr.bf16.mxu0 0
        %2104 = vmatpush2.bf16.msra.mxu0 %v2033
        %2105 = vmatprep.mubr.bf16.mxu0 %v1864
        %2106 = vmatmul.mubr.bf16.gmra.mxu0 %v1860
        %v2107 = vpop.f32.mrf.mxu0
        %v2108 = vadd.f32 %v1927, %v2107
        %v2109 = vpop.f32.mrf.mxu0
        %v2110 = vpop.f32.mrf.mxu0
        %v2111 = vadd.f32 %v1927, %v2110
        %v2112 = vpop.f32.mrf.mxu0
        %2113 = vmatprep.mubr.bf16.mxu0 %v1865
        %2114 = vmatmul.mubr.bf16.gmra.mxu0 %v1861
        %v2115 = vpop.f32.mrf.mxu0
        %v2116 = vadd.f32 %v1927, %v2115
        %v2117 = vpop.f32.mrf.mxu0
        %v2118 = vpop.f32.mrf.mxu0
        %v2119 = vadd.f32 %v1927, %v2118
        %v2120 = vpop.f32.mrf.mxu0
        %2121 = vmatprep.mubr.bf16.mxu0 %v1866
        %2122 = vmatmul.mubr.bf16.gmra.mxu0 %v1862
        %v2123 = vpop.f32.mrf.mxu0
        %v2124 = vadd.f32 %v1927, %v2123
        %v2125 = vpop.f32.mrf.mxu0
        %v2126 = vpop.f32.mrf.mxu0
        %v2127 = vadd.f32 %v1927, %v2126
        %v2128 = vpop.f32.mrf.mxu0
        %2129 = vmatprep.mubr.bf16.mxu0 %v1867
        %2130 = vmatmul.mubr.bf16.gmra.mxu0 %v1863
        %v2131 = vpop.f32.mrf.mxu0
        %v2132 = vadd.f32 %v1927, %v2131
        %v2133 = vpop.f32.mrf.mxu0
        %v2134 = vpop.f32.mrf.mxu0
        %v2135 = vadd.f32 %v1927, %v2134
        %v2136 = vpop.f32.mrf.mxu0
        %2137 = vdwg.mxu0
        %2138 = vmatprep.subr.bf16.mxu0 0
        %2139 = vmatpush1.bf16.msra.mxu0 %v2048
        %2140 = vmatprep.subr.bf16.mxu0 0
        %2141 = vmatpush1.bf16.msra.mxu0 %v2047
        %2142 = vmatprep.subr.bf16.mxu0 0
        %2143 = vmatpush1.bf16.msra.mxu0 %v2046
        %2144 = vmatprep.subr.bf16.mxu0 0
        %2145 = vmatpush1.bf16.msra.mxu0 %v2045
        %2146 = vmatprep.subr.bf16.mxu0 0
        %2147 = vmatpush1.bf16.msra.mxu0 %v2044
        %2148 = vmatprep.subr.bf16.mxu0 0
        %2149 = vmatpush1.bf16.msra.mxu0 %v2043
        %2150 = vmatprep.subr.bf16.mxu0 0
        %2151 = vmatpush1.bf16.msra.mxu0 %v2042
        %2152 = vmatprep.subr.bf16.mxu0 0
        %2153 = vmatpush1.bf16.msra.mxu0 %v2041
        %2154 = vmatprep.subr.bf16.mxu0 0
        %2155 = vmatpush2.bf16.msra.mxu0 0
        %2156 = vmatprep.subr.bf16.mxu0 0
        %2157 = vmatpush2.bf16.msra.mxu0 0
        %2158 = vmatprep.subr.bf16.mxu0 0
        %2159 = vmatpush2.bf16.msra.mxu0 0
        %2160 = vmatprep.subr.bf16.mxu0 0
        %2161 = vmatpush2.bf16.msra.mxu0 0
        %2162 = vmatprep.subr.bf16.mxu0 0
        %2163 = vmatpush2.bf16.msra.mxu0 0
        %2164 = vmatprep.subr.bf16.mxu0 0
        %2165 = vmatpush2.bf16.msra.mxu0 0
        %2166 = vmatprep.subr.bf16.mxu0 0
        %2167 = vmatpush2.bf16.msra.mxu0 0
        %2168 = vmatprep.subr.bf16.mxu0 0
        %2169 = vmatpush2.bf16.msra.mxu0 0
        %2170 = vmatprep.mubr.bf16.mxu0 0
        %2171 = vmatmul.mubr.bf16.gmra.mxu0 %v1868
        %v2172 = vpop.f32.mrf.mxu0
        %v2173 = vadd.f32 %v2108, %v2172
        %v2174 = vpop.f32.mrf.mxu0
        %v2175 = vpop.f32.mrf.mxu0
        %v2176 = vadd.f32 %v2111, %v2175
        %v2177 = vpop.f32.mrf.mxu0
        %2178 = vmatprep.mubr.bf16.mxu0 0
        %2179 = vmatmul.mubr.bf16.gmra.mxu0 %v1869
        %v2180 = vpop.f32.mrf.mxu0
        %v2181 = vadd.f32 %v2116, %v2180
        %v2182 = vpop.f32.mrf.mxu0
        %v2183 = vpop.f32.mrf.mxu0
        %v2184 = vadd.f32 %v2119, %v2183
        %v2185 = vpop.f32.mrf.mxu0
        %2186 = vmatprep.mubr.bf16.mxu0 0
        %2187 = vmatmul.mubr.bf16.gmra.mxu0 %v1870
        %v2188 = vpop.f32.mrf.mxu0
        %v2189 = vadd.f32 %v2124, %v2188
        %v2190 = vpop.f32.mrf.mxu0
        %v2191 = vpop.f32.mrf.mxu0
        %v2192 = vadd.f32 %v2127, %v2191
        %v2193 = vpop.f32.mrf.mxu0
        %2194 = vmatprep.mubr.bf16.mxu0 0
        %2195 = vmatmul.mubr.bf16.gmra.mxu0 %v1871
        %v2196 = vpop.f32.mrf.mxu0
        %v2197 = vadd.f32 %v2132, %v2196
        %v2198 = vpop.f32.mrf.mxu0
        %v2199 = vpop.f32.mrf.mxu0
        %v2200 = vadd.f32 %v2135, %v2199
        %v2201 = vpop.f32.mrf.mxu0
        %2202 = vdwg.mxu0
        %v2203 = vmax.f32 %v2173, 0.0
        %v2204 = vmax.f32 %v2176, 0.0
        %v2205 = vmax.f32 %v2181, 0.0
        %v2206 = vmax.f32 %v2184, 0.0
        %v2207 = vmax.f32 %v2189, 0.0
        %v2208 = vmax.f32 %v2192, 0.0
        %v2209 = vmax.f32 %v2197, 0.0
        %v2210 = vmax.f32 %v2200, 0.0
        %v2211 = vpack.c.bf16 %v2204, %v2203
        %v2212 = vpack.c.bf16 %v2206, %v2205
        %v2213 = vpack.c.bf16 %v2208, %v2207
        %v2214 = vpack.c.bf16 %v2210, %v2209
        %s2215 = scalar_lea.vmem [#allocation11], 128
        %v2216 = vld [vmem:[%s2215] sm:$0xf]
        %v2217 = vld [vmem:[%s2215 + $0x4] sm:$0xf]
        %v2218 = vld [vmem:[%s2215 + $0x8] sm:$0xf]
        %v2219 = vld [vmem:[%s2215 + $0xc] sm:$0xf]
        %v2220 = vld [vmem:[%s2215 + $0x10] sm:$0xf]
        %v2221 = vld [vmem:[%s2215 + $0x14] sm:$0xf]
        %v2222 = vld [vmem:[%s2215 + $0x18] sm:$0xf]
        %v2223 = vld [vmem:[%s2215 + $0x1c] sm:$0xf]
        %v2224 = vld [vmem:[%s2215 + $0x20] sm:$0xf]
        %v2225 = vld [vmem:[%s2215 + $0x24] sm:$0xf]
        %v2226 = vld [vmem:[%s2215 + $0x28] sm:$0xf]
        %v2227 = vld [vmem:[%s2215 + $0x2c] sm:$0xf]
        %v2228 = vld [vmem:[%s2215 + $0x30] sm:$0xf]
        %v2229 = vld [vmem:[%s2215 + $0x34] sm:$0xf]
        %v2230 = vld [vmem:[%s2215 + $0x38] sm:$0xf]
        %v2231 = vld [vmem:[%s2215 + $0x3c] sm:$0xf]
        %s2232 = scalar_lea.vmem %s9, 2
        %v2233 = vld [vmem:[%s2232] sm:$0x1]
        %v2235 = vlaneseq
        %v2236 = vshrl.u32 %v2235, 7
        %v2237 = vsub.s32 0, %v2236
        %v2238 = vrot.slane %v2233, %v2237
        %v2256 = vunpack.c.l.b16 %v2216
        %v2257 = vunpack.c.l.b16 %v2217
        %v2258 = vunpack.c.l.b16 %v2218
        %v2259 = vunpack.c.l.b16 %v2219
        %v2260 = vunpack.c.l.b16 %v2220
        %v2261 = vunpack.c.l.b16 %v2221
        %v2262 = vunpack.c.l.b16 %v2222
        %v2263 = vunpack.c.l.b16 %v2223
        %v2264 = vunpack.c.l.b16 %v2224
        %v2265 = vunpack.c.l.b16 %v2225
        %v2266 = vunpack.c.l.b16 %v2226
        %v2267 = vunpack.c.l.b16 %v2227
        %v2268 = vunpack.c.l.b16 %v2228
        %v2269 = vunpack.c.l.b16 %v2229
        %v2270 = vunpack.c.l.b16 %v2230
        %v2271 = vunpack.c.l.b16 %v2231
        %v2272 = vpack.c.b16 %v2257, %v2256
        %v2273 = vpack.c.b16 %v2259, %v2258
        %v2274 = vpack.c.b16 %v2261, %v2260
        %v2275 = vpack.c.b16 %v2263, %v2262
        %v2276 = vpack.c.b16 %v2265, %v2264
        %v2277 = vpack.c.b16 %v2267, %v2266
        %v2278 = vpack.c.b16 %v2269, %v2268
        %v2279 = vpack.c.b16 %v2271, %v2270
        %2288 = vmatprep.subr.bf16.mxu0 0
        %2289 = vmatpush1.bf16.msra.mxu0 %v2279
        %2290 = vmatprep.subr.bf16.mxu0 0
        %2291 = vmatpush1.bf16.msra.mxu0 %v2278
        %2292 = vmatprep.subr.bf16.mxu0 0
        %2293 = vmatpush1.bf16.msra.mxu0 %v2277
        %2294 = vmatprep.subr.bf16.mxu0 0
        %2295 = vmatpush1.bf16.msra.mxu0 %v2276
        %2296 = vmatprep.subr.bf16.mxu0 0
        %2297 = vmatpush1.bf16.msra.mxu0 %v2275
        %2298 = vmatprep.subr.bf16.mxu0 0
        %2299 = vmatpush1.bf16.msra.mxu0 %v2274
        %2300 = vmatprep.subr.bf16.mxu0 0
        %2301 = vmatpush1.bf16.msra.mxu0 %v2273
        %2302 = vmatprep.subr.bf16.mxu0 0
        %2303 = vmatpush1.bf16.msra.mxu0 %v2272
        %2304 = vmatprep.subr.bf16.mxu0 0
        %2305 = vmatpush2.bf16.msra.mxu0 0
        %2306 = vmatprep.subr.bf16.mxu0 0
        %2307 = vmatpush2.bf16.msra.mxu0 0
        %2308 = vmatprep.subr.bf16.mxu0 0
        %2309 = vmatpush2.bf16.msra.mxu0 0
        %2310 = vmatprep.subr.bf16.mxu0 0
        %2311 = vmatpush2.bf16.msra.mxu0 0
        %2312 = vmatprep.subr.bf16.mxu0 0
        %2313 = vmatpush2.bf16.msra.mxu0 0
        %2314 = vmatprep.subr.bf16.mxu0 0
        %2315 = vmatpush2.bf16.msra.mxu0 0
        %2316 = vmatprep.subr.bf16.mxu0 0
        %2317 = vmatpush2.bf16.msra.mxu0 0
        %2318 = vmatprep.subr.bf16.mxu0 0
        %2319 = vmatpush2.bf16.msra.mxu0 0
        %2320 = vmatprep.mubr.bf16.mxu0 0
        %2321 = vmatmul.mubr.bf16.gmra.mxu0 %v2211
        %v2322 = vpop.f32.mrf.mxu0
        %v2323 = vadd.f32 %v2238, %v2322
        %v2324 = vpop.f32.mrf.mxu0
        %v2325 = vpop.f32.mrf.mxu0
        %v2326 = vadd.f32 %v2238, %v2325
        %v2327 = vpop.f32.mrf.mxu0
        %2328 = vmatprep.mubr.bf16.mxu0 0
        %2329 = vmatmul.mubr.bf16.gmra.mxu0 %v2212
        %v2330 = vpop.f32.mrf.mxu0
        %v2331 = vadd.f32 %v2238, %v2330
        %v2332 = vpop.f32.mrf.mxu0
        %v2333 = vpop.f32.mrf.mxu0
        %v2334 = vadd.f32 %v2238, %v2333
        %v2335 = vpop.f32.mrf.mxu0
        %2336 = vmatprep.mubr.bf16.mxu0 0
        %2337 = vmatmul.mubr.bf16.gmra.mxu0 %v2213
        %v2338 = vpop.f32.mrf.mxu0
        %v2339 = vadd.f32 %v2238, %v2338
        %v2340 = vpop.f32.mrf.mxu0
        %v2341 = vpop.f32.mrf.mxu0
        %v2342 = vadd.f32 %v2238, %v2341
        %v2343 = vpop.f32.mrf.mxu0
        %2344 = vmatprep.mubr.bf16.mxu0 0
        %2345 = vmatmul.mubr.bf16.gmra.mxu0 %v2214
        %v2346 = vpop.f32.mrf.mxu0
        %v2347 = vadd.f32 %v2238, %v2346
        %v2348 = vpop.f32.mrf.mxu0
        %v2349 = vpop.f32.mrf.mxu0
        %v2350 = vadd.f32 %v2238, %v2349
        %v2351 = vpop.f32.mrf.mxu0
        %2352 = vdwg.mxu0
        %v2353 = vadd.f32 %v1835, %v2323
        %v2354 = vadd.f32 %v1836, %v2326
        %v2355 = vadd.f32 %v1837, %v2331
        %v2356 = vadd.f32 %v1838, %v2334
        %v2357 = vadd.f32 %v1839, %v2339
        %v2358 = vadd.f32 %v1840, %v2342
        %v2359 = vadd.f32 %v1841, %v2347
        %v2360 = vadd.f32 %v1842, %v2350
        %v2361 = vmul.f32 %v2353, %v532
        %v2362 = vmul.f32 %v2354, %v537
        %v2363 = vmul.f32 %v2355, %v542
        %v2364 = vmul.f32 %v2356, %v547
        %v2365 = vmul.f32 %v2357, %v552
        %v2366 = vmul.f32 %v2358, %v557
        %v2367 = vmul.f32 %v2359, %v562
        %v2368 = vmul.f32 %v2360, %v567
        %v2369 = vpack.c.bf16 %v2362, %v2361
        %v2370 = vpack.c.bf16 %v2364, %v2363
        %v2371 = vpack.c.bf16 %v2366, %v2365
        %v2372 = vpack.c.bf16 %v2368, %v2367
        %v2373 = vld [vmem:[%s10] sm:$0xf]
        %v2374 = vld [vmem:[%s10 + $0x4] sm:$0xf]
        %v2375 = vld [vmem:[%s10 + $0x8] sm:$0xf]
        %v2376 = vld [vmem:[%s10 + $0xc] sm:$0xf]
        %v2377 = vld [vmem:[%s10 + $0x10] sm:$0xf]
        %v2378 = vld [vmem:[%s10 + $0x14] sm:$0xf]
        %v2379 = vld [vmem:[%s10 + $0x18] sm:$0xf]
        %v2380 = vld [vmem:[%s10 + $0x1c] sm:$0xf]
        %v2381 = vld [vmem:[%s10 + $0x20] sm:$0xf]
        %v2382 = vld [vmem:[%s10 + $0x24] sm:$0xf]
        %v2383 = vld [vmem:[%s10 + $0x28] sm:$0xf]
        %v2384 = vld [vmem:[%s10 + $0x2c] sm:$0xf]
        %v2385 = vld [vmem:[%s10 + $0x30] sm:$0xf]
        %v2386 = vld [vmem:[%s10 + $0x34] sm:$0xf]
        %v2387 = vld [vmem:[%s10 + $0x38] sm:$0xf]
        %v2388 = vld [vmem:[%s10 + $0x3c] sm:$0xf]
        %v2389 = vld [vmem:[%s11] sm:$0x1]
        %v2391 = vlaneseq
        %v2392 = vshrl.u32 %v2391, 7
        %v2393 = vsub.s32 0, %v2392
        %v2394 = vrot.slane %v2389, %v2393
        %v2412 = vunpack.c.l.b16 %v2373
        %v2413 = vunpack.c.l.b16 %v2374
        %v2414 = vunpack.c.l.b16 %v2375
        %v2415 = vunpack.c.l.b16 %v2376
        %v2416 = vunpack.c.l.b16 %v2377
        %v2417 = vunpack.c.l.b16 %v2378
        %v2418 = vunpack.c.l.b16 %v2379
        %v2419 = vunpack.c.l.b16 %v2380
        %v2420 = vunpack.c.l.b16 %v2381
        %v2421 = vunpack.c.l.b16 %v2382
        %v2422 = vunpack.c.l.b16 %v2383
        %v2423 = vunpack.c.l.b16 %v2384
        %v2424 = vunpack.c.l.b16 %v2385
        %v2425 = vunpack.c.l.b16 %v2386
        %v2426 = vunpack.c.l.b16 %v2387
        %v2427 = vunpack.c.l.b16 %v2388
        %v2428 = vpack.c.b16 %v2413, %v2412
        %v2429 = vpack.c.b16 %v2415, %v2414
        %v2430 = vpack.c.b16 %v2417, %v2416
        %v2431 = vpack.c.b16 %v2419, %v2418
        %v2432 = vpack.c.b16 %v2421, %v2420
        %v2433 = vpack.c.b16 %v2423, %v2422
        %v2434 = vpack.c.b16 %v2425, %v2424
        %v2435 = vpack.c.b16 %v2427, %v2426
        %2444 = vmatprep.subr.bf16.mxu0 0
        %2445 = vmatpush1.bf16.msra.mxu0 %v2435
        %2446 = vmatprep.subr.bf16.mxu0 0
        %2447 = vmatpush1.bf16.msra.mxu0 %v2434
        %2448 = vmatprep.subr.bf16.mxu0 0
        %2449 = vmatpush1.bf16.msra.mxu0 %v2433
        %2450 = vmatprep.subr.bf16.mxu0 0
        %2451 = vmatpush1.bf16.msra.mxu0 %v2432
        %2452 = vmatprep.subr.bf16.mxu0 0
        %2453 = vmatpush1.bf16.msra.mxu0 %v2431
        %2454 = vmatprep.subr.bf16.mxu0 0
        %2455 = vmatpush1.bf16.msra.mxu0 %v2430
        %2456 = vmatprep.subr.bf16.mxu0 0
        %2457 = vmatpush1.bf16.msra.mxu0 %v2429
        %2458 = vmatprep.subr.bf16.mxu0 0
        %2459 = vmatpush1.bf16.msra.mxu0 %v2428
        %2460 = vmatprep.subr.bf16.mxu0 0
        %2461 = vmatpush2.bf16.msra.mxu0 0
        %2462 = vmatprep.subr.bf16.mxu0 0
        %2463 = vmatpush2.bf16.msra.mxu0 0
        %2464 = vmatprep.subr.bf16.mxu0 0
        %2465 = vmatpush2.bf16.msra.mxu0 0
        %2466 = vmatprep.subr.bf16.mxu0 0
        %2467 = vmatpush2.bf16.msra.mxu0 0
        %2468 = vmatprep.subr.bf16.mxu0 0
        %2469 = vmatpush2.bf16.msra.mxu0 0
        %2470 = vmatprep.subr.bf16.mxu0 0
        %2471 = vmatpush2.bf16.msra.mxu0 0
        %2472 = vmatprep.subr.bf16.mxu0 0
        %2473 = vmatpush2.bf16.msra.mxu0 0
        %2474 = vmatprep.subr.bf16.mxu0 0
        %2475 = vmatpush2.bf16.msra.mxu0 0
        %2476 = vmatprep.mubr.bf16.mxu0 0
        %2477 = vmatmul.mubr.bf16.gmra.mxu0 %v2369
        %v2478 = vpop.f32.mrf.mxu0
        %v2479 = vadd.f32 %v2394, %v2478
        %v2480 = vpop.f32.mrf.mxu0
        %v2481 = vpop.f32.mrf.mxu0
        %v2482 = vadd.f32 %v2394, %v2481
        %v2483 = vpop.f32.mrf.mxu0
        %2484 = vmatprep.mubr.bf16.mxu0 0
        %2485 = vmatmul.mubr.bf16.gmra.mxu0 %v2370
        %v2486 = vpop.f32.mrf.mxu0
        %v2487 = vadd.f32 %v2394, %v2486
        %v2488 = vpop.f32.mrf.mxu0
        %v2489 = vpop.f32.mrf.mxu0
        %v2490 = vadd.f32 %v2394, %v2489
        %v2491 = vpop.f32.mrf.mxu0
        %2492 = vmatprep.mubr.bf16.mxu0 0
        %2493 = vmatmul.mubr.bf16.gmra.mxu0 %v2371
        %v2494 = vpop.f32.mrf.mxu0
        %v2495 = vadd.f32 %v2394, %v2494
        %v2496 = vpop.f32.mrf.mxu0
        %v2497 = vpop.f32.mrf.mxu0
        %v2498 = vadd.f32 %v2394, %v2497
        %v2499 = vpop.f32.mrf.mxu0
        %2500 = vmatprep.mubr.bf16.mxu0 0
        %2501 = vmatmul.mubr.bf16.gmra.mxu0 %v2372
        %v2502 = vpop.f32.mrf.mxu0
        %v2503 = vadd.f32 %v2394, %v2502
        %v2504 = vpop.f32.mrf.mxu0
        %v2505 = vpop.f32.mrf.mxu0
        %v2506 = vadd.f32 %v2394, %v2505
        %v2507 = vpop.f32.mrf.mxu0
        %2508 = vdwg.mxu0
        %v2509 = vmul.f32 %v2479, %v532
        %v2510 = vmul.f32 %v2482, %v537
        %v2511 = vmul.f32 %v2487, %v542
        %v2512 = vmul.f32 %v2490, %v547
        %v2513 = vmul.f32 %v2495, %v552
        %v2514 = vmul.f32 %v2498, %v557
        %v2515 = vmul.f32 %v2503, %v562
        %v2516 = vmul.f32 %v2506, %v567
        %2517 = vst [vmem:[%s504] sm:$0xff] %v2509
        %2518 = vst [vmem:[%s504 + $0x8] sm:$0xff] %v2510
        %2519 = vst [vmem:[%s504 + $0x10] sm:$0xff] %v2511
        %2520 = vst [vmem:[%s504 + $0x18] sm:$0xff] %v2512
        %2521 = vst [vmem:[%s504 + $0x20] sm:$0xff] %v2513
        %2522 = vst [vmem:[%s504 + $0x28] sm:$0xff] %v2514
        %2523 = vst [vmem:[%s504 + $0x30] sm:$0xff] %v2515
        %2524 = vst [vmem:[%s504 + $0x38] sm:$0xff] %v2516
        %v2525 = vsel %vm571, %v2509, -1e+30
        %v2526 = vsel %vm571, %v2510, -1e+30
        %v2527 = vsel %vm571, %v2511, -1e+30
        %v2528 = vsel %vm571, %v2512, -1e+30
        %v2529 = vsel %vm571, %v2513, -1e+30
        %v2530 = vsel %vm571, %v2514, -1e+30
        %v2531 = vsel %vm571, %v2515, -1e+30
        %v2532 = vsel %vm571, %v2516, -1e+30
        %2533 = vmax.xlane.f32.xlu0 %v2525
        %v2534 = vpop.xlane.xlu0 %2533
        %2535 = vmax.xlane.f32.xlu0 %v2526
        %v2536 = vpop.xlane.xlu0 %2535
        %2537 = vmax.xlane.f32.xlu0 %v2527
        %v2538 = vpop.xlane.xlu0 %2537
        %2539 = vmax.xlane.f32.xlu0 %v2528
        %v2540 = vpop.xlane.xlu0 %2539
        %2541 = vmax.xlane.f32.xlu0 %v2529
        %v2542 = vpop.xlane.xlu0 %2541
        %2543 = vmax.xlane.f32.xlu0 %v2530
        %v2544 = vpop.xlane.xlu0 %2543
        %2545 = vmax.xlane.f32.xlu0 %v2531
        %v2546 = vpop.xlane.xlu0 %2545
        %2547 = vmax.xlane.f32.xlu0 %v2532
        %v2548 = vpop.xlane.xlu0 %2547
        %v2549 = vsub.f32 %v2525, %v2534
        %v2550 = vsub.f32 %v2526, %v2536
        %v2551 = vsub.f32 %v2527, %v2538
        %v2552 = vsub.f32 %v2528, %v2540
        %v2553 = vsub.f32 %v2529, %v2542
        %v2554 = vsub.f32 %v2530, %v2544
        %v2555 = vsub.f32 %v2531, %v2546
        %v2556 = vsub.f32 %v2532, %v2548
        %v2557 = vmul.f32 %v2549, 1.442695
        %v2558 = vpow.pop %v2557
        %v2559 = vmul.f32 %v2550, 1.442695
        %v2560 = vpow.pop %v2559
        %v2561 = vmul.f32 %v2551, 1.442695
        %v2562 = vpow.pop %v2561
        %v2563 = vmul.f32 %v2552, 1.442695
        %v2564 = vpow.pop %v2563
        %v2565 = vmul.f32 %v2553, 1.442695
        %v2566 = vpow.pop %v2565
        %v2567 = vmul.f32 %v2554, 1.442695
        %v2568 = vpow.pop %v2567
        %v2569 = vmul.f32 %v2555, 1.442695
        %v2570 = vpow.pop %v2569
        %v2571 = vmul.f32 %v2556, 1.442695
        %v2572 = vpow.pop %v2571
        %2573 = vadd.xlane.f32.xlu0 %v2558
        %v2574 = vpop.xlane.xlu0 %2573
        %2575 = vadd.xlane.f32.xlu0 %v2560
        %v2576 = vpop.xlane.xlu0 %2575
        %2577 = vadd.xlane.f32.xlu0 %v2562
        %v2578 = vpop.xlane.xlu0 %2577
        %2579 = vadd.xlane.f32.xlu0 %v2564
        %v2580 = vpop.xlane.xlu0 %2579
        %2581 = vadd.xlane.f32.xlu0 %v2566
        %v2582 = vpop.xlane.xlu0 %2581
        %2583 = vadd.xlane.f32.xlu0 %v2568
        %v2584 = vpop.xlane.xlu0 %2583
        %2585 = vadd.xlane.f32.xlu0 %v2570
        %v2586 = vpop.xlane.xlu0 %2585
        %2587 = vadd.xlane.f32.xlu0 %v2572
        %v2588 = vpop.xlane.xlu0 %2587
        %v2589 = vrcp.pop %v2574
        %v2590 = vrcp.pop %v2576
        %v2591 = vrcp.pop %v2578
        %v2592 = vrcp.pop %v2580
        %v2593 = vrcp.pop %v2582
        %v2594 = vrcp.pop %v2584
        %v2595 = vrcp.pop %v2586
        %v2596 = vrcp.pop %v2588
        %v2597 = vmul.f32 %v2558, %v2589
        %v2598 = vmul.f32 %v2560, %v2590
        %v2599 = vmul.f32 %v2562, %v2591
        %v2600 = vmul.f32 %v2564, %v2592
        %v2601 = vmul.f32 %v2566, %v2593
        %v2602 = vmul.f32 %v2568, %v2594
        %v2603 = vmul.f32 %v2570, %v2595
        %v2604 = vmul.f32 %v2572, %v2596
        %v2605 = vmul.f32 %v2597, %v532
        %v2606 = vmul.f32 %v2598, %v537
        %v2607 = vmul.f32 %v2599, %v542
        %v2608 = vmul.f32 %v2600, %v547
        %v2609 = vmul.f32 %v2601, %v552
        %v2610 = vmul.f32 %v2602, %v557
        %v2611 = vmul.f32 %v2603, %v562
        %v2612 = vmul.f32 %v2604, %v567
        %v2613 = vpack.c.bf16 %v2606, %v2605
        %v2614 = vpack.c.bf16 %v2608, %v2607
        %v2615 = vpack.c.bf16 %v2610, %v2609
        %v2616 = vpack.c.bf16 %v2612, %v2611
        %v2617 = vld [vmem:[#allocation8] sm:$0xf]
        %v2618 = vld [vmem:[#allocation8 + $0x4] sm:$0xf]
        %v2619 = vld [vmem:[#allocation8 + $0x8] sm:$0xf]
        %v2620 = vld [vmem:[#allocation8 + $0xc] sm:$0xf]
        %v2621 = vld [vmem:[#allocation8 + $0x10] sm:$0xf]
        %v2622 = vld [vmem:[#allocation8 + $0x14] sm:$0xf]
        %v2623 = vld [vmem:[#allocation8 + $0x18] sm:$0xf]
        %v2624 = vld [vmem:[#allocation8 + $0x1c] sm:$0xf]
        %v2625 = vld [vmem:[#allocation8 + $0x20] sm:$0xf]
        %v2626 = vld [vmem:[#allocation8 + $0x24] sm:$0xf]
        %v2627 = vld [vmem:[#allocation8 + $0x28] sm:$0xf]
        %v2628 = vld [vmem:[#allocation8 + $0x2c] sm:$0xf]
        %v2629 = vld [vmem:[#allocation8 + $0x30] sm:$0xf]
        %v2630 = vld [vmem:[#allocation8 + $0x34] sm:$0xf]
        %v2631 = vld [vmem:[#allocation8 + $0x38] sm:$0xf]
        %v2632 = vld [vmem:[#allocation8 + $0x3c] sm:$0xf]
        %v2633 = vld [vmem:[%s5] sm:$0x1]
        %v2635 = vlaneseq
        %v2636 = vshrl.u32 %v2635, 7
        %v2637 = vsub.s32 0, %v2636
        %v2638 = vrot.slane %v2633, %v2637
        %v2656 = vunpack.c.l.b16 %v2617
        %v2657 = vunpack.c.l.b16 %v2618
        %v2658 = vunpack.c.l.b16 %v2619
        %v2659 = vunpack.c.l.b16 %v2620
        %v2660 = vunpack.c.l.b16 %v2621
        %v2661 = vunpack.c.l.b16 %v2622
        %v2662 = vunpack.c.l.b16 %v2623
        %v2663 = vunpack.c.l.b16 %v2624
        %v2664 = vunpack.c.l.b16 %v2625
        %v2665 = vunpack.c.l.b16 %v2626
        %v2666 = vunpack.c.l.b16 %v2627
        %v2667 = vunpack.c.l.b16 %v2628
        %v2668 = vunpack.c.l.b16 %v2629
        %v2669 = vunpack.c.l.b16 %v2630
        %v2670 = vunpack.c.l.b16 %v2631
        %v2671 = vunpack.c.l.b16 %v2632
        %v2672 = vpack.c.b16 %v2657, %v2656
        %v2673 = vpack.c.b16 %v2659, %v2658
        %v2674 = vpack.c.b16 %v2661, %v2660
        %v2675 = vpack.c.b16 %v2663, %v2662
        %v2676 = vpack.c.b16 %v2665, %v2664
        %v2677 = vpack.c.b16 %v2667, %v2666
        %v2678 = vpack.c.b16 %v2669, %v2668
        %v2679 = vpack.c.b16 %v2671, %v2670
        %2688 = vmatprep.subr.bf16.mxu0 0
        %2689 = vmatpush1.bf16.msra.mxu0 %v2679
        %2690 = vmatprep.subr.bf16.mxu0 0
        %2691 = vmatpush1.bf16.msra.mxu0 %v2678
        %2692 = vmatprep.subr.bf16.mxu0 0
        %2693 = vmatpush1.bf16.msra.mxu0 %v2677
        %2694 = vmatprep.subr.bf16.mxu0 0
        %2695 = vmatpush1.bf16.msra.mxu0 %v2676
        %2696 = vmatprep.subr.bf16.mxu0 0
        %2697 = vmatpush1.bf16.msra.mxu0 %v2675
        %2698 = vmatprep.subr.bf16.mxu0 0
        %2699 = vmatpush1.bf16.msra.mxu0 %v2674
        %2700 = vmatprep.subr.bf16.mxu0 0
        %2701 = vmatpush1.bf16.msra.mxu0 %v2673
        %2702 = vmatprep.subr.bf16.mxu0 0
        %2703 = vmatpush1.bf16.msra.mxu0 %v2672
        %2704 = vmatprep.subr.bf16.mxu0 0
        %2705 = vmatpush2.bf16.msra.mxu0 0
        %2706 = vmatprep.subr.bf16.mxu0 0
        %2707 = vmatpush2.bf16.msra.mxu0 0
        %2708 = vmatprep.subr.bf16.mxu0 0
        %2709 = vmatpush2.bf16.msra.mxu0 0
        %2710 = vmatprep.subr.bf16.mxu0 0
        %2711 = vmatpush2.bf16.msra.mxu0 0
        %2712 = vmatprep.subr.bf16.mxu0 0
        %2713 = vmatpush2.bf16.msra.mxu0 0
        %2714 = vmatprep.subr.bf16.mxu0 0
        %2715 = vmatpush2.bf16.msra.mxu0 0
        %2716 = vmatprep.subr.bf16.mxu0 0
        %2717 = vmatpush2.bf16.msra.mxu0 0
        %2718 = vmatprep.subr.bf16.mxu0 0
        %2719 = vmatpush2.bf16.msra.mxu0 0
        %2720 = vmatprep.mubr.bf16.mxu0 0
        %2721 = vmatmul.mubr.bf16.gmra.mxu0 %v2613
        %v2722 = vpop.f32.mrf.mxu0
        %v2723 = vadd.f32 %v2638, %v2722
        %v2724 = vpop.f32.mrf.mxu0
        %v2725 = vpop.f32.mrf.mxu0
        %v2726 = vadd.f32 %v2638, %v2725
        %v2727 = vpop.f32.mrf.mxu0
        %2728 = vmatprep.mubr.bf16.mxu0 0
        %2729 = vmatmul.mubr.bf16.gmra.mxu0 %v2614
        %v2730 = vpop.f32.mrf.mxu0
        %v2731 = vadd.f32 %v2638, %v2730
        %v2732 = vpop.f32.mrf.mxu0
        %v2733 = vpop.f32.mrf.mxu0
        %v2734 = vadd.f32 %v2638, %v2733
        %v2735 = vpop.f32.mrf.mxu0
        %2736 = vmatprep.mubr.bf16.mxu0 0
        %2737 = vmatmul.mubr.bf16.gmra.mxu0 %v2615
        %v2738 = vpop.f32.mrf.mxu0
        %v2739 = vadd.f32 %v2638, %v2738
        %v2740 = vpop.f32.mrf.mxu0
        %v2741 = vpop.f32.mrf.mxu0
        %v2742 = vadd.f32 %v2638, %v2741
        %v2743 = vpop.f32.mrf.mxu0
        %2744 = vmatprep.mubr.bf16.mxu0 0
        %2745 = vmatmul.mubr.bf16.gmra.mxu0 %v2616
        %v2746 = vpop.f32.mrf.mxu0
        %v2747 = vadd.f32 %v2638, %v2746
        %v2748 = vpop.f32.mrf.mxu0
        %v2749 = vpop.f32.mrf.mxu0
        %v2750 = vadd.f32 %v2638, %v2749
        %v2751 = vpop.f32.mrf.mxu0
        %2752 = vdwg.mxu0
        %v2753 = vmul.f32 %v2723, %v597
        %v2754 = vmul.f32 %v2726, %v598
        %v2755 = vmul.f32 %v2731, %v599
        %v2756 = vmul.f32 %v2734, %v600
        %v2757 = vmul.f32 %v2739, %v601
        %v2758 = vmul.f32 %v2742, %v602
        %v2759 = vmul.f32 %v2747, %v603
        %v2760 = vmul.f32 %v2750, %v604
        %2761 = vst [vmem:[#allocation2 + $0x8] sm:$0xff] %v2753
        %2762 = vst [vmem:[#allocation2 + $0x10] sm:$0xff] %v2754
        %2763 = vst [vmem:[#allocation2 + $0x18] sm:$0xff] %v2755
        %2764 = vst [vmem:[#allocation2 + $0x20] sm:$0xff] %v2756
        %2765 = vst [vmem:[#allocation2 + $0x28] sm:$0xff] %v2757
        %2766 = vst [vmem:[#allocation2 + $0x30] sm:$0xff] %v2758
        %2767 = vst [vmem:[#allocation2 + $0x38] sm:$0xff] %v2759
        %2768 = vst [vmem:[#allocation2 + $0x40] sm:$0xff] %v2760
        %v2769 = vld [vmem:[#allocation2 + $0x7] sm:$0xff]
        %v2770 = vld [vmem:[#allocation2 + $0xf] sm:$0xff]
        %v2771 = vld [vmem:[#allocation2 + $0x17] sm:$0xff]
        %v2772 = vld [vmem:[#allocation2 + $0x1f] sm:$0xff]
        %v2773 = vld [vmem:[#allocation2 + $0x27] sm:$0xff]
        %v2774 = vld [vmem:[#allocation2 + $0x2f] sm:$0xff]
        %v2775 = vld [vmem:[#allocation2 + $0x37] sm:$0xff]
        %v2776 = vld [vmem:[#allocation2 + $0x3f] sm:$0xff]
        %v2777 = vld [vmem:[#allocation2 + $0x9] sm:$0xff]
        %v2778 = vld [vmem:[#allocation2 + $0x11] sm:$0xff]
        %v2779 = vld [vmem:[#allocation2 + $0x19] sm:$0xff]
        %v2780 = vld [vmem:[#allocation2 + $0x21] sm:$0xff]
        %v2781 = vld [vmem:[#allocation2 + $0x29] sm:$0xff]
        %v2782 = vld [vmem:[#allocation2 + $0x31] sm:$0xff]
        %v2783 = vld [vmem:[#allocation2 + $0x39] sm:$0xff]
        %v2784 = vld [vmem:[#allocation2 + $0x41] sm:$0xff]
        %v2785 = vpack.c.bf16 %v2770, %v2769
        %v2786 = vpack.c.bf16 %v2772, %v2771
        %v2787 = vpack.c.bf16 %v2774, %v2773
        %v2788 = vpack.c.bf16 %v2776, %v2775
        %v2789 = vpack.c.bf16 %v2754, %v2753
        %v2790 = vpack.c.bf16 %v2756, %v2755
        %v2791 = vpack.c.bf16 %v2758, %v2757
        %v2792 = vpack.c.bf16 %v2760, %v2759
        %v2793 = vpack.c.bf16 %v2778, %v2777
        %v2794 = vpack.c.bf16 %v2780, %v2779
        %v2795 = vpack.c.bf16 %v2782, %v2781
        %v2796 = vpack.c.bf16 %v2784, %v2783
        %s2797 = scalar_lea.vmem [#allocation9], 576
        %v2798 = vld [vmem:[%s2797] sm:$0xf]
        %v2799 = vld [vmem:[%s2797 + $0x4] sm:$0xf]
        %v2800 = vld [vmem:[%s2797 + $0x8] sm:$0xf]
        %v2801 = vld [vmem:[%s2797 + $0xc] sm:$0xf]
        %v2802 = vld [vmem:[%s2797 + $0x10] sm:$0xf]
        %v2803 = vld [vmem:[%s2797 + $0x14] sm:$0xf]
        %v2804 = vld [vmem:[%s2797 + $0x18] sm:$0xf]
        %v2805 = vld [vmem:[%s2797 + $0x1c] sm:$0xf]
        %v2806 = vld [vmem:[%s2797 + $0x20] sm:$0xf]
        %v2807 = vld [vmem:[%s2797 + $0x24] sm:$0xf]
        %v2808 = vld [vmem:[%s2797 + $0x28] sm:$0xf]
        %v2809 = vld [vmem:[%s2797 + $0x2c] sm:$0xf]
        %v2810 = vld [vmem:[%s2797 + $0x30] sm:$0xf]
        %v2811 = vld [vmem:[%s2797 + $0x34] sm:$0xf]
        %v2812 = vld [vmem:[%s2797 + $0x38] sm:$0xf]
        %v2813 = vld [vmem:[%s2797 + $0x3c] sm:$0xf]
        %v2814 = vld [vmem:[%s2797 + $0x40] sm:$0xf]
        %v2815 = vld [vmem:[%s2797 + $0x44] sm:$0xf]
        %v2816 = vld [vmem:[%s2797 + $0x48] sm:$0xf]
        %v2817 = vld [vmem:[%s2797 + $0x4c] sm:$0xf]
        %v2818 = vld [vmem:[%s2797 + $0x50] sm:$0xf]
        %v2819 = vld [vmem:[%s2797 + $0x54] sm:$0xf]
        %v2820 = vld [vmem:[%s2797 + $0x58] sm:$0xf]
        %v2821 = vld [vmem:[%s2797 + $0x5c] sm:$0xf]
        %v2822 = vld [vmem:[%s2797 + $0x60] sm:$0xf]
        %v2823 = vld [vmem:[%s2797 + $0x64] sm:$0xf]
        %v2824 = vld [vmem:[%s2797 + $0x68] sm:$0xf]
        %v2825 = vld [vmem:[%s2797 + $0x6c] sm:$0xf]
        %v2826 = vld [vmem:[%s2797 + $0x70] sm:$0xf]
        %v2827 = vld [vmem:[%s2797 + $0x74] sm:$0xf]
        %v2828 = vld [vmem:[%s2797 + $0x78] sm:$0xf]
        %v2829 = vld [vmem:[%s2797 + $0x7c] sm:$0xf]
        %v2830 = vld [vmem:[%s2797 + $0x80] sm:$0xf]
        %v2831 = vld [vmem:[%s2797 + $0x84] sm:$0xf]
        %v2832 = vld [vmem:[%s2797 + $0x88] sm:$0xf]
        %v2833 = vld [vmem:[%s2797 + $0x8c] sm:$0xf]
        %v2834 = vld [vmem:[%s2797 + $0x90] sm:$0xf]
        %v2835 = vld [vmem:[%s2797 + $0x94] sm:$0xf]
        %v2836 = vld [vmem:[%s2797 + $0x98] sm:$0xf]
        %v2837 = vld [vmem:[%s2797 + $0x9c] sm:$0xf]
        %v2838 = vld [vmem:[%s2797 + $0xa0] sm:$0xf]
        %v2839 = vld [vmem:[%s2797 + $0xa4] sm:$0xf]
        %v2840 = vld [vmem:[%s2797 + $0xa8] sm:$0xf]
        %v2841 = vld [vmem:[%s2797 + $0xac] sm:$0xf]
        %v2842 = vld [vmem:[%s2797 + $0xb0] sm:$0xf]
        %v2843 = vld [vmem:[%s2797 + $0xb4] sm:$0xf]
        %v2844 = vld [vmem:[%s2797 + $0xb8] sm:$0xf]
        %v2845 = vld [vmem:[%s2797 + $0xbc] sm:$0xf]
        %s2846 = scalar_lea.vmem %s7, 3
        %v2847 = vld [vmem:[%s2846] sm:$0x1]
        %v2849 = vlaneseq
        %v2850 = vshrl.u32 %v2849, 7
        %v2851 = vsub.s32 0, %v2850
        %v2852 = vrot.slane %v2847, %v2851
        %v2902 = vunpack.c.l.b16 %v2798
        %v2903 = vunpack.c.l.b16 %v2799
        %v2904 = vunpack.c.l.b16 %v2800
        %v2905 = vunpack.c.l.b16 %v2801
        %v2906 = vunpack.c.l.b16 %v2802
        %v2907 = vunpack.c.l.b16 %v2803
        %v2908 = vunpack.c.l.b16 %v2804
        %v2909 = vunpack.c.l.b16 %v2805
        %v2910 = vunpack.c.l.b16 %v2806
        %v2911 = vunpack.c.l.b16 %v2807
        %v2912 = vunpack.c.l.b16 %v2808
        %v2913 = vunpack.c.l.b16 %v2809
        %v2914 = vunpack.c.l.b16 %v2810
        %v2915 = vunpack.c.l.b16 %v2811
        %v2916 = vunpack.c.l.b16 %v2812
        %v2917 = vunpack.c.l.b16 %v2813
        %v2918 = vunpack.c.l.b16 %v2814
        %v2919 = vunpack.c.l.b16 %v2815
        %v2920 = vunpack.c.l.b16 %v2816
        %v2921 = vunpack.c.l.b16 %v2817
        %v2922 = vunpack.c.l.b16 %v2818
        %v2923 = vunpack.c.l.b16 %v2819
        %v2924 = vunpack.c.l.b16 %v2820
        %v2925 = vunpack.c.l.b16 %v2821
        %v2926 = vunpack.c.l.b16 %v2822
        %v2927 = vunpack.c.l.b16 %v2823
        %v2928 = vunpack.c.l.b16 %v2824
        %v2929 = vunpack.c.l.b16 %v2825
        %v2930 = vunpack.c.l.b16 %v2826
        %v2931 = vunpack.c.l.b16 %v2827
        %v2932 = vunpack.c.l.b16 %v2828
        %v2933 = vunpack.c.l.b16 %v2829
        %v2934 = vunpack.c.l.b16 %v2830
        %v2935 = vunpack.c.l.b16 %v2831
        %v2936 = vunpack.c.l.b16 %v2832
        %v2937 = vunpack.c.l.b16 %v2833
        %v2938 = vunpack.c.l.b16 %v2834
        %v2939 = vunpack.c.l.b16 %v2835
        %v2940 = vunpack.c.l.b16 %v2836
        %v2941 = vunpack.c.l.b16 %v2837
        %v2942 = vunpack.c.l.b16 %v2838
        %v2943 = vunpack.c.l.b16 %v2839
        %v2944 = vunpack.c.l.b16 %v2840
        %v2945 = vunpack.c.l.b16 %v2841
        %v2946 = vunpack.c.l.b16 %v2842
        %v2947 = vunpack.c.l.b16 %v2843
        %v2948 = vunpack.c.l.b16 %v2844
        %v2949 = vunpack.c.l.b16 %v2845
        %v2950 = vpack.c.b16 %v2903, %v2902
        %v2951 = vpack.c.b16 %v2905, %v2904
        %v2952 = vpack.c.b16 %v2907, %v2906
        %v2953 = vpack.c.b16 %v2909, %v2908
        %v2954 = vpack.c.b16 %v2911, %v2910
        %v2955 = vpack.c.b16 %v2913, %v2912
        %v2956 = vpack.c.b16 %v2915, %v2914
        %v2957 = vpack.c.b16 %v2917, %v2916
        %v2958 = vpack.c.b16 %v2919, %v2918
        %v2959 = vpack.c.b16 %v2921, %v2920
        %v2960 = vpack.c.b16 %v2923, %v2922
        %v2961 = vpack.c.b16 %v2925, %v2924
        %v2962 = vpack.c.b16 %v2927, %v2926
        %v2963 = vpack.c.b16 %v2929, %v2928
        %v2964 = vpack.c.b16 %v2931, %v2930
        %v2965 = vpack.c.b16 %v2933, %v2932
        %v2966 = vpack.c.b16 %v2935, %v2934
        %v2967 = vpack.c.b16 %v2937, %v2936
        %v2968 = vpack.c.b16 %v2939, %v2938
        %v2969 = vpack.c.b16 %v2941, %v2940
        %v2970 = vpack.c.b16 %v2943, %v2942
        %v2971 = vpack.c.b16 %v2945, %v2944
        %v2972 = vpack.c.b16 %v2947, %v2946
        %v2973 = vpack.c.b16 %v2949, %v2948
        %2998 = vmatprep.subr.bf16.mxu0 0
        %2999 = vmatpush1.bf16.msra.mxu0 %v2957
        %3000 = vmatprep.subr.bf16.mxu0 0
        %3001 = vmatpush1.bf16.msra.mxu0 %v2956
        %3002 = vmatprep.subr.bf16.mxu0 0
        %3003 = vmatpush1.bf16.msra.mxu0 %v2955
        %3004 = vmatprep.subr.bf16.mxu0 0
        %3005 = vmatpush1.bf16.msra.mxu0 %v2954
        %3006 = vmatprep.subr.bf16.mxu0 0
        %3007 = vmatpush1.bf16.msra.mxu0 %v2953
        %3008 = vmatprep.subr.bf16.mxu0 0
        %3009 = vmatpush1.bf16.msra.mxu0 %v2952
        %3010 = vmatprep.subr.bf16.mxu0 0
        %3011 = vmatpush1.bf16.msra.mxu0 %v2951
        %3012 = vmatprep.subr.bf16.mxu0 0
        %3013 = vmatpush1.bf16.msra.mxu0 %v2950
        %3014 = vmatprep.subr.bf16.mxu0 0
        %3015 = vmatpush2.bf16.msra.mxu0 %v2965
        %3016 = vmatprep.subr.bf16.mxu0 0
        %3017 = vmatpush2.bf16.msra.mxu0 %v2964
        %3018 = vmatprep.subr.bf16.mxu0 0
        %3019 = vmatpush2.bf16.msra.mxu0 %v2963
        %3020 = vmatprep.subr.bf16.mxu0 0
        %3021 = vmatpush2.bf16.msra.mxu0 %v2962
        %3022 = vmatprep.subr.bf16.mxu0 0
        %3023 = vmatpush2.bf16.msra.mxu0 %v2961
        %3024 = vmatprep.subr.bf16.mxu0 0
        %3025 = vmatpush2.bf16.msra.mxu0 %v2960
        %3026 = vmatprep.subr.bf16.mxu0 0
        %3027 = vmatpush2.bf16.msra.mxu0 %v2959
        %3028 = vmatprep.subr.bf16.mxu0 0
        %3029 = vmatpush2.bf16.msra.mxu0 %v2958
        %3030 = vmatprep.mubr.bf16.mxu0 %v2789
        %3031 = vmatmul.mubr.bf16.gmra.mxu0 %v2785
        %v3032 = vpop.f32.mrf.mxu0
        %v3033 = vadd.f32 %v2852, %v3032
        %v3034 = vpop.f32.mrf.mxu0
        %v3035 = vpop.f32.mrf.mxu0
        %v3036 = vadd.f32 %v2852, %v3035
        %v3037 = vpop.f32.mrf.mxu0
        %3038 = vmatprep.mubr.bf16.mxu0 %v2790
        %3039 = vmatmul.mubr.bf16.gmra.mxu0 %v2786
        %v3040 = vpop.f32.mrf.mxu0
        %v3041 = vadd.f32 %v2852, %v3040
        %v3042 = vpop.f32.mrf.mxu0
        %v3043 = vpop.f32.mrf.mxu0
        %v3044 = vadd.f32 %v2852, %v3043
        %v3045 = vpop.f32.mrf.mxu0
        %3046 = vmatprep.mubr.bf16.mxu0 %v2791
        %3047 = vmatmul.mubr.bf16.gmra.mxu0 %v2787
        %v3048 = vpop.f32.mrf.mxu0
        %v3049 = vadd.f32 %v2852, %v3048
        %v3050 = vpop.f32.mrf.mxu0
        %v3051 = vpop.f32.mrf.mxu0
        %v3052 = vadd.f32 %v2852, %v3051
        %v3053 = vpop.f32.mrf.mxu0
        %3054 = vmatprep.mubr.bf16.mxu0 %v2792
        %3055 = vmatmul.mubr.bf16.gmra.mxu0 %v2788
        %v3056 = vpop.f32.mrf.mxu0
        %v3057 = vadd.f32 %v2852, %v3056
        %v3058 = vpop.f32.mrf.mxu0
        %v3059 = vpop.f32.mrf.mxu0
        %v3060 = vadd.f32 %v2852, %v3059
        %v3061 = vpop.f32.mrf.mxu0
        %3062 = vdwg.mxu0
        %3063 = vmatprep.subr.bf16.mxu0 0
        %3064 = vmatpush1.bf16.msra.mxu0 %v2973
        %3065 = vmatprep.subr.bf16.mxu0 0
        %3066 = vmatpush1.bf16.msra.mxu0 %v2972
        %3067 = vmatprep.subr.bf16.mxu0 0
        %3068 = vmatpush1.bf16.msra.mxu0 %v2971
        %3069 = vmatprep.subr.bf16.mxu0 0
        %3070 = vmatpush1.bf16.msra.mxu0 %v2970
        %3071 = vmatprep.subr.bf16.mxu0 0
        %3072 = vmatpush1.bf16.msra.mxu0 %v2969
        %3073 = vmatprep.subr.bf16.mxu0 0
        %3074 = vmatpush1.bf16.msra.mxu0 %v2968
        %3075 = vmatprep.subr.bf16.mxu0 0
        %3076 = vmatpush1.bf16.msra.mxu0 %v2967
        %3077 = vmatprep.subr.bf16.mxu0 0
        %3078 = vmatpush1.bf16.msra.mxu0 %v2966
        %3079 = vmatprep.subr.bf16.mxu0 0
        %3080 = vmatpush2.bf16.msra.mxu0 0
        %3081 = vmatprep.subr.bf16.mxu0 0
        %3082 = vmatpush2.bf16.msra.mxu0 0
        %3083 = vmatprep.subr.bf16.mxu0 0
        %3084 = vmatpush2.bf16.msra.mxu0 0
        %3085 = vmatprep.subr.bf16.mxu0 0
        %3086 = vmatpush2.bf16.msra.mxu0 0
        %3087 = vmatprep.subr.bf16.mxu0 0
        %3088 = vmatpush2.bf16.msra.mxu0 0
        %3089 = vmatprep.subr.bf16.mxu0 0
        %3090 = vmatpush2.bf16.msra.mxu0 0
        %3091 = vmatprep.subr.bf16.mxu0 0
        %3092 = vmatpush2.bf16.msra.mxu0 0
        %3093 = vmatprep.subr.bf16.mxu0 0
        %3094 = vmatpush2.bf16.msra.mxu0 0
        %3095 = vmatprep.mubr.bf16.mxu0 0
        %3096 = vmatmul.mubr.bf16.gmra.mxu0 %v2793
        %v3097 = vpop.f32.mrf.mxu0
        %v3098 = vadd.f32 %v3033, %v3097
        %v3099 = vpop.f32.mrf.mxu0
        %v3100 = vpop.f32.mrf.mxu0
        %v3101 = vadd.f32 %v3036, %v3100
        %v3102 = vpop.f32.mrf.mxu0
        %3103 = vmatprep.mubr.bf16.mxu0 0
        %3104 = vmatmul.mubr.bf16.gmra.mxu0 %v2794
        %v3105 = vpop.f32.mrf.mxu0
        %v3106 = vadd.f32 %v3041, %v3105
        %v3107 = vpop.f32.mrf.mxu0
        %v3108 = vpop.f32.mrf.mxu0
        %v3109 = vadd.f32 %v3044, %v3108
        %v3110 = vpop.f32.mrf.mxu0
        %3111 = vmatprep.mubr.bf16.mxu0 0
        %3112 = vmatmul.mubr.bf16.gmra.mxu0 %v2795
        %v3113 = vpop.f32.mrf.mxu0
        %v3114 = vadd.f32 %v3049, %v3113
        %v3115 = vpop.f32.mrf.mxu0
        %v3116 = vpop.f32.mrf.mxu0
        %v3117 = vadd.f32 %v3052, %v3116
        %v3118 = vpop.f32.mrf.mxu0
        %3119 = vmatprep.mubr.bf16.mxu0 0
        %3120 = vmatmul.mubr.bf16.gmra.mxu0 %v2796
        %v3121 = vpop.f32.mrf.mxu0
        %v3122 = vadd.f32 %v3057, %v3121
        %v3123 = vpop.f32.mrf.mxu0
        %v3124 = vpop.f32.mrf.mxu0
        %v3125 = vadd.f32 %v3060, %v3124
        %v3126 = vpop.f32.mrf.mxu0
        %3127 = vdwg.mxu0
        %v3128 = vmax.f32 %v3098, 0.0
        %v3129 = vmax.f32 %v3101, 0.0
        %v3130 = vmax.f32 %v3106, 0.0
        %v3131 = vmax.f32 %v3109, 0.0
        %v3132 = vmax.f32 %v3114, 0.0
        %v3133 = vmax.f32 %v3117, 0.0
        %v3134 = vmax.f32 %v3122, 0.0
        %v3135 = vmax.f32 %v3125, 0.0
        %v3136 = vpack.c.bf16 %v3129, %v3128
        %v3137 = vpack.c.bf16 %v3131, %v3130
        %v3138 = vpack.c.bf16 %v3133, %v3132
        %v3139 = vpack.c.bf16 %v3135, %v3134
        %s3140 = scalar_lea.vmem [#allocation11], 192
        %v3141 = vld [vmem:[%s3140] sm:$0xf]
        %v3142 = vld [vmem:[%s3140 + $0x4] sm:$0xf]
        %v3143 = vld [vmem:[%s3140 + $0x8] sm:$0xf]
        %v3144 = vld [vmem:[%s3140 + $0xc] sm:$0xf]
        %v3145 = vld [vmem:[%s3140 + $0x10] sm:$0xf]
        %v3146 = vld [vmem:[%s3140 + $0x14] sm:$0xf]
        %v3147 = vld [vmem:[%s3140 + $0x18] sm:$0xf]
        %v3148 = vld [vmem:[%s3140 + $0x1c] sm:$0xf]
        %v3149 = vld [vmem:[%s3140 + $0x20] sm:$0xf]
        %v3150 = vld [vmem:[%s3140 + $0x24] sm:$0xf]
        %v3151 = vld [vmem:[%s3140 + $0x28] sm:$0xf]
        %v3152 = vld [vmem:[%s3140 + $0x2c] sm:$0xf]
        %v3153 = vld [vmem:[%s3140 + $0x30] sm:$0xf]
        %v3154 = vld [vmem:[%s3140 + $0x34] sm:$0xf]
        %v3155 = vld [vmem:[%s3140 + $0x38] sm:$0xf]
        %v3156 = vld [vmem:[%s3140 + $0x3c] sm:$0xf]
        %s3157 = scalar_lea.vmem %s9, 3
        %v3158 = vld [vmem:[%s3157] sm:$0x1]
        %v3160 = vlaneseq
        %v3161 = vshrl.u32 %v3160, 7
        %v3162 = vsub.s32 0, %v3161
        %v3163 = vrot.slane %v3158, %v3162
        %v3181 = vunpack.c.l.b16 %v3141
        %v3182 = vunpack.c.l.b16 %v3142
        %v3183 = vunpack.c.l.b16 %v3143
        %v3184 = vunpack.c.l.b16 %v3144
        %v3185 = vunpack.c.l.b16 %v3145
        %v3186 = vunpack.c.l.b16 %v3146
        %v3187 = vunpack.c.l.b16 %v3147
        %v3188 = vunpack.c.l.b16 %v3148
        %v3189 = vunpack.c.l.b16 %v3149
        %v3190 = vunpack.c.l.b16 %v3150
        %v3191 = vunpack.c.l.b16 %v3151
        %v3192 = vunpack.c.l.b16 %v3152
        %v3193 = vunpack.c.l.b16 %v3153
        %v3194 = vunpack.c.l.b16 %v3154
        %v3195 = vunpack.c.l.b16 %v3155
        %v3196 = vunpack.c.l.b16 %v3156
        %v3197 = vpack.c.b16 %v3182, %v3181
        %v3198 = vpack.c.b16 %v3184, %v3183
        %v3199 = vpack.c.b16 %v3186, %v3185
        %v3200 = vpack.c.b16 %v3188, %v3187
        %v3201 = vpack.c.b16 %v3190, %v3189
        %v3202 = vpack.c.b16 %v3192, %v3191
        %v3203 = vpack.c.b16 %v3194, %v3193
        %v3204 = vpack.c.b16 %v3196, %v3195
        %3213 = vmatprep.subr.bf16.mxu0 0
        %3214 = vmatpush1.bf16.msra.mxu0 %v3204
        %3215 = vmatprep.subr.bf16.mxu0 0
        %3216 = vmatpush1.bf16.msra.mxu0 %v3203
        %3217 = vmatprep.subr.bf16.mxu0 0
        %3218 = vmatpush1.bf16.msra.mxu0 %v3202
        %3219 = vmatprep.subr.bf16.mxu0 0
        %3220 = vmatpush1.bf16.msra.mxu0 %v3201
        %3221 = vmatprep.subr.bf16.mxu0 0
        %3222 = vmatpush1.bf16.msra.mxu0 %v3200
        %3223 = vmatprep.subr.bf16.mxu0 0
        %3224 = vmatpush1.bf16.msra.mxu0 %v3199
        %3225 = vmatprep.subr.bf16.mxu0 0
        %3226 = vmatpush1.bf16.msra.mxu0 %v3198
        %3227 = vmatprep.subr.bf16.mxu0 0
        %3228 = vmatpush1.bf16.msra.mxu0 %v3197
        %3229 = vmatprep.subr.bf16.mxu0 0
        %3230 = vmatpush2.bf16.msra.mxu0 0
        %3231 = vmatprep.subr.bf16.mxu0 0
        %3232 = vmatpush2.bf16.msra.mxu0 0
        %3233 = vmatprep.subr.bf16.mxu0 0
        %3234 = vmatpush2.bf16.msra.mxu0 0
        %3235 = vmatprep.subr.bf16.mxu0 0
        %3236 = vmatpush2.bf16.msra.mxu0 0
        %3237 = vmatprep.subr.bf16.mxu0 0
        %3238 = vmatpush2.bf16.msra.mxu0 0
        %3239 = vmatprep.subr.bf16.mxu0 0
        %3240 = vmatpush2.bf16.msra.mxu0 0
        %3241 = vmatprep.subr.bf16.mxu0 0
        %3242 = vmatpush2.bf16.msra.mxu0 0
        %3243 = vmatprep.subr.bf16.mxu0 0
        %3244 = vmatpush2.bf16.msra.mxu0 0
        %3245 = vmatprep.mubr.bf16.mxu0 0
        %3246 = vmatmul.mubr.bf16.gmra.mxu0 %v3136
        %v3247 = vpop.f32.mrf.mxu0
        %v3248 = vadd.f32 %v3163, %v3247
        %v3249 = vpop.f32.mrf.mxu0
        %v3250 = vpop.f32.mrf.mxu0
        %v3251 = vadd.f32 %v3163, %v3250
        %v3252 = vpop.f32.mrf.mxu0
        %3253 = vmatprep.mubr.bf16.mxu0 0
        %3254 = vmatmul.mubr.bf16.gmra.mxu0 %v3137
        %v3255 = vpop.f32.mrf.mxu0
        %v3256 = vadd.f32 %v3163, %v3255
        %v3257 = vpop.f32.mrf.mxu0
        %v3258 = vpop.f32.mrf.mxu0
        %v3259 = vadd.f32 %v3163, %v3258
        %v3260 = vpop.f32.mrf.mxu0
        %3261 = vmatprep.mubr.bf16.mxu0 0
        %3262 = vmatmul.mubr.bf16.gmra.mxu0 %v3138
        %v3263 = vpop.f32.mrf.mxu0
        %v3264 = vadd.f32 %v3163, %v3263
        %v3265 = vpop.f32.mrf.mxu0
        %v3266 = vpop.f32.mrf.mxu0
        %v3267 = vadd.f32 %v3163, %v3266
        %v3268 = vpop.f32.mrf.mxu0
        %3269 = vmatprep.mubr.bf16.mxu0 0
        %3270 = vmatmul.mubr.bf16.gmra.mxu0 %v3139
        %v3271 = vpop.f32.mrf.mxu0
        %v3272 = vadd.f32 %v3163, %v3271
        %v3273 = vpop.f32.mrf.mxu0
        %v3274 = vpop.f32.mrf.mxu0
        %v3275 = vadd.f32 %v3163, %v3274
        %v3276 = vpop.f32.mrf.mxu0
        %3277 = vdwg.mxu0
        %v3278 = vadd.f32 %v2753, %v3248
        %v3279 = vadd.f32 %v2754, %v3251
        %v3280 = vadd.f32 %v2755, %v3256
        %v3281 = vadd.f32 %v2756, %v3259
        %v3282 = vadd.f32 %v2757, %v3264
        %v3283 = vadd.f32 %v2758, %v3267
        %v3284 = vadd.f32 %v2759, %v3272
        %v3285 = vadd.f32 %v2760, %v3275
        %v3286 = vmul.f32 %v3278, %v532
        %v3287 = vmul.f32 %v3279, %v537
        %v3288 = vmul.f32 %v3280, %v542
        %v3289 = vmul.f32 %v3281, %v547
        %v3290 = vmul.f32 %v3282, %v552
        %v3291 = vmul.f32 %v3283, %v557
        %v3292 = vmul.f32 %v3284, %v562
        %v3293 = vmul.f32 %v3285, %v567
        %3294 = vst [vmem:[#allocation2 + $0x8] sm:$0xff] %v3286
        %3295 = vst [vmem:[#allocation2 + $0x10] sm:$0xff] %v3287
        %3296 = vst [vmem:[#allocation2 + $0x18] sm:$0xff] %v3288
        %3297 = vst [vmem:[#allocation2 + $0x20] sm:$0xff] %v3289
        %3298 = vst [vmem:[#allocation2 + $0x28] sm:$0xff] %v3290
        %3299 = vst [vmem:[#allocation2 + $0x30] sm:$0xff] %v3291
        %3300 = vst [vmem:[#allocation2 + $0x38] sm:$0xff] %v3292
        %3301 = vst [vmem:[#allocation2 + $0x40] sm:$0xff] %v3293
        %v3302 = vld [vmem:[#allocation2 + $0x6] sm:$0xff]
        %v3303 = vld [vmem:[#allocation2 + $0xe] sm:$0xff]
        %v3304 = vld [vmem:[#allocation2 + $0x16] sm:$0xff]
        %v3305 = vld [vmem:[#allocation2 + $0x1e] sm:$0xff]
        %v3306 = vld [vmem:[#allocation2 + $0x26] sm:$0xff]
        %v3307 = vld [vmem:[#allocation2 + $0x2e] sm:$0xff]
        %v3308 = vld [vmem:[#allocation2 + $0x36] sm:$0xff]
        %v3309 = vld [vmem:[#allocation2 + $0x3e] sm:$0xff]
        %v3310 = vld [vmem:[#allocation2 + $0xa] sm:$0xff]
        %v3311 = vld [vmem:[#allocation2 + $0x12] sm:$0xff]
        %v3312 = vld [vmem:[#allocation2 + $0x1a] sm:$0xff]
        %v3313 = vld [vmem:[#allocation2 + $0x22] sm:$0xff]
        %v3314 = vld [vmem:[#allocation2 + $0x2a] sm:$0xff]
        %v3315 = vld [vmem:[#allocation2 + $0x32] sm:$0xff]
        %v3316 = vld [vmem:[#allocation2 + $0x3a] sm:$0xff]
        %v3317 = vld [vmem:[#allocation2 + $0x42] sm:$0xff]
        %v3318 = vpack.c.bf16 %v3303, %v3302
        %v3319 = vpack.c.bf16 %v3305, %v3304
        %v3320 = vpack.c.bf16 %v3307, %v3306
        %v3321 = vpack.c.bf16 %v3309, %v3308
        %v3322 = vpack.c.bf16 %v3287, %v3286
        %v3323 = vpack.c.bf16 %v3289, %v3288
        %v3324 = vpack.c.bf16 %v3291, %v3290
        %v3325 = vpack.c.bf16 %v3293, %v3292
        %v3326 = vpack.c.bf16 %v3311, %v3310
        %v3327 = vpack.c.bf16 %v3313, %v3312
        %v3328 = vpack.c.bf16 %v3315, %v3314
        %v3329 = vpack.c.bf16 %v3317, %v3316
        %s3330 = scalar_lea.vmem [#allocation9], 768
        %v3331 = vld [vmem:[%s3330] sm:$0xf]
        %v3332 = vld [vmem:[%s3330 + $0x4] sm:$0xf]
        %v3333 = vld [vmem:[%s3330 + $0x8] sm:$0xf]
        %v3334 = vld [vmem:[%s3330 + $0xc] sm:$0xf]
        %v3335 = vld [vmem:[%s3330 + $0x10] sm:$0xf]
        %v3336 = vld [vmem:[%s3330 + $0x14] sm:$0xf]
        %v3337 = vld [vmem:[%s3330 + $0x18] sm:$0xf]
        %v3338 = vld [vmem:[%s3330 + $0x1c] sm:$0xf]
        %v3339 = vld [vmem:[%s3330 + $0x20] sm:$0xf]
        %v3340 = vld [vmem:[%s3330 + $0x24] sm:$0xf]
        %v3341 = vld [vmem:[%s3330 + $0x28] sm:$0xf]
        %v3342 = vld [vmem:[%s3330 + $0x2c] sm:$0xf]
        %v3343 = vld [vmem:[%s3330 + $0x30] sm:$0xf]
        %v3344 = vld [vmem:[%s3330 + $0x34] sm:$0xf]
        %v3345 = vld [vmem:[%s3330 + $0x38] sm:$0xf]
        %v3346 = vld [vmem:[%s3330 + $0x3c] sm:$0xf]
        %v3347 = vld [vmem:[%s3330 + $0x40] sm:$0xf]
        %v3348 = vld [vmem:[%s3330 + $0x44] sm:$0xf]
        %v3349 = vld [vmem:[%s3330 + $0x48] sm:$0xf]
        %v3350 = vld [vmem:[%s3330 + $0x4c] sm:$0xf]
        %v3351 = vld [vmem:[%s3330 + $0x50] sm:$0xf]
        %v3352 = vld [vmem:[%s3330 + $0x54] sm:$0xf]
        %v3353 = vld [vmem:[%s3330 + $0x58] sm:$0xf]
        %v3354 = vld [vmem:[%s3330 + $0x5c] sm:$0xf]
        %v3355 = vld [vmem:[%s3330 + $0x60] sm:$0xf]
        %v3356 = vld [vmem:[%s3330 + $0x64] sm:$0xf]
        %v3357 = vld [vmem:[%s3330 + $0x68] sm:$0xf]
        %v3358 = vld [vmem:[%s3330 + $0x6c] sm:$0xf]
        %v3359 = vld [vmem:[%s3330 + $0x70] sm:$0xf]
        %v3360 = vld [vmem:[%s3330 + $0x74] sm:$0xf]
        %v3361 = vld [vmem:[%s3330 + $0x78] sm:$0xf]
        %v3362 = vld [vmem:[%s3330 + $0x7c] sm:$0xf]
        %v3363 = vld [vmem:[%s3330 + $0x80] sm:$0xf]
        %v3364 = vld [vmem:[%s3330 + $0x84] sm:$0xf]
        %v3365 = vld [vmem:[%s3330 + $0x88] sm:$0xf]
        %v3366 = vld [vmem:[%s3330 + $0x8c] sm:$0xf]
        %v3367 = vld [vmem:[%s3330 + $0x90] sm:$0xf]
        %v3368 = vld [vmem:[%s3330 + $0x94] sm:$0xf]
        %v3369 = vld [vmem:[%s3330 + $0x98] sm:$0xf]
        %v3370 = vld [vmem:[%s3330 + $0x9c] sm:$0xf]
        %v3371 = vld [vmem:[%s3330 + $0xa0] sm:$0xf]
        %v3372 = vld [vmem:[%s3330 + $0xa4] sm:$0xf]
        %v3373 = vld [vmem:[%s3330 + $0xa8] sm:$0xf]
        %v3374 = vld [vmem:[%s3330 + $0xac] sm:$0xf]
        %v3375 = vld [vmem:[%s3330 + $0xb0] sm:$0xf]
        %v3376 = vld [vmem:[%s3330 + $0xb4] sm:$0xf]
        %v3377 = vld [vmem:[%s3330 + $0xb8] sm:$0xf]
        %v3378 = vld [vmem:[%s3330 + $0xbc] sm:$0xf]
        %s3379 = scalar_lea.vmem %s7, 4
        %v3380 = vld [vmem:[%s3379] sm:$0x1]
        %v3382 = vlaneseq
        %v3383 = vshrl.u32 %v3382, 7
        %v3384 = vsub.s32 0, %v3383
        %v3385 = vrot.slane %v3380, %v3384
        %v3435 = vunpack.c.l.b16 %v3331
        %v3436 = vunpack.c.l.b16 %v3332
        %v3437 = vunpack.c.l.b16 %v3333
        %v3438 = vunpack.c.l.b16 %v3334
        %v3439 = vunpack.c.l.b16 %v3335
        %v3440 = vunpack.c.l.b16 %v3336
        %v3441 = vunpack.c.l.b16 %v3337
        %v3442 = vunpack.c.l.b16 %v3338
        %v3443 = vunpack.c.l.b16 %v3339
        %v3444 = vunpack.c.l.b16 %v3340
        %v3445 = vunpack.c.l.b16 %v3341
        %v3446 = vunpack.c.l.b16 %v3342
        %v3447 = vunpack.c.l.b16 %v3343
        %v3448 = vunpack.c.l.b16 %v3344
        %v3449 = vunpack.c.l.b16 %v3345
        %v3450 = vunpack.c.l.b16 %v3346
        %v3451 = vunpack.c.l.b16 %v3347
        %v3452 = vunpack.c.l.b16 %v3348
        %v3453 = vunpack.c.l.b16 %v3349
        %v3454 = vunpack.c.l.b16 %v3350
        %v3455 = vunpack.c.l.b16 %v3351
        %v3456 = vunpack.c.l.b16 %v3352
        %v3457 = vunpack.c.l.b16 %v3353
        %v3458 = vunpack.c.l.b16 %v3354
        %v3459 = vunpack.c.l.b16 %v3355
        %v3460 = vunpack.c.l.b16 %v3356
        %v3461 = vunpack.c.l.b16 %v3357
        %v3462 = vunpack.c.l.b16 %v3358
        %v3463 = vunpack.c.l.b16 %v3359
        %v3464 = vunpack.c.l.b16 %v3360
        %v3465 = vunpack.c.l.b16 %v3361
        %v3466 = vunpack.c.l.b16 %v3362
        %v3467 = vunpack.c.l.b16 %v3363
        %v3468 = vunpack.c.l.b16 %v3364
        %v3469 = vunpack.c.l.b16 %v3365
        %v3470 = vunpack.c.l.b16 %v3366
        %v3471 = vunpack.c.l.b16 %v3367
        %v3472 = vunpack.c.l.b16 %v3368
        %v3473 = vunpack.c.l.b16 %v3369
        %v3474 = vunpack.c.l.b16 %v3370
        %v3475 = vunpack.c.l.b16 %v3371
        %v3476 = vunpack.c.l.b16 %v3372
        %v3477 = vunpack.c.l.b16 %v3373
        %v3478 = vunpack.c.l.b16 %v3374
        %v3479 = vunpack.c.l.b16 %v3375
        %v3480 = vunpack.c.l.b16 %v3376
        %v3481 = vunpack.c.l.b16 %v3377
        %v3482 = vunpack.c.l.b16 %v3378
        %v3483 = vpack.c.b16 %v3436, %v3435
        %v3484 = vpack.c.b16 %v3438, %v3437
        %v3485 = vpack.c.b16 %v3440, %v3439
        %v3486 = vpack.c.b16 %v3442, %v3441
        %v3487 = vpack.c.b16 %v3444, %v3443
        %v3488 = vpack.c.b16 %v3446, %v3445
        %v3489 = vpack.c.b16 %v3448, %v3447
        %v3490 = vpack.c.b16 %v3450, %v3449
        %v3491 = vpack.c.b16 %v3452, %v3451
        %v3492 = vpack.c.b16 %v3454, %v3453
        %v3493 = vpack.c.b16 %v3456, %v3455
        %v3494 = vpack.c.b16 %v3458, %v3457
        %v3495 = vpack.c.b16 %v3460, %v3459
        %v3496 = vpack.c.b16 %v3462, %v3461
        %v3497 = vpack.c.b16 %v3464, %v3463
        %v3498 = vpack.c.b16 %v3466, %v3465
        %v3499 = vpack.c.b16 %v3468, %v3467
        %v3500 = vpack.c.b16 %v3470, %v3469
        %v3501 = vpack.c.b16 %v3472, %v3471
        %v3502 = vpack.c.b16 %v3474, %v3473
        %v3503 = vpack.c.b16 %v3476, %v3475
        %v3504 = vpack.c.b16 %v3478, %v3477
        %v3505 = vpack.c.b16 %v3480, %v3479
        %v3506 = vpack.c.b16 %v3482, %v3481
        %3531 = vmatprep.subr.bf16.mxu0 0
        %3532 = vmatpush1.bf16.msra.mxu0 %v3490
        %3533 = vmatprep.subr.bf16.mxu0 0
        %3534 = vmatpush1.bf16.msra.mxu0 %v3489
        %3535 = vmatprep.subr.bf16.mxu0 0
        %3536 = vmatpush1.bf16.msra.mxu0 %v3488
        %3537 = vmatprep.subr.bf16.mxu0 0
        %3538 = vmatpush1.bf16.msra.mxu0 %v3487
        %3539 = vmatprep.subr.bf16.mxu0 0
        %3540 = vmatpush1.bf16.msra.mxu0 %v3486
        %3541 = vmatprep.subr.bf16.mxu0 0
        %3542 = vmatpush1.bf16.msra.mxu0 %v3485
        %3543 = vmatprep.subr.bf16.mxu0 0
        %3544 = vmatpush1.bf16.msra.mxu0 %v3484
        %3545 = vmatprep.subr.bf16.mxu0 0
        %3546 = vmatpush1.bf16.msra.mxu0 %v3483
        %3547 = vmatprep.subr.bf16.mxu0 0
        %3548 = vmatpush2.bf16.msra.mxu0 %v3498
        %3549 = vmatprep.subr.bf16.mxu0 0
        %3550 = vmatpush2.bf16.msra.mxu0 %v3497
        %3551 = vmatprep.subr.bf16.mxu0 0
        %3552 = vmatpush2.bf16.msra.mxu0 %v3496
        %3553 = vmatprep.subr.bf16.mxu0 0
        %3554 = vmatpush2.bf16.msra.mxu0 %v3495
        %3555 = vmatprep.subr.bf16.mxu0 0
        %3556 = vmatpush2.bf16.msra.mxu0 %v3494
        %3557 = vmatprep.subr.bf16.mxu0 0
        %3558 = vmatpush2.bf16.msra.mxu0 %v3493
        %3559 = vmatprep.subr.bf16.mxu0 0
        %3560 = vmatpush2.bf16.msra.mxu0 %v3492
        %3561 = vmatprep.subr.bf16.mxu0 0
        %3562 = vmatpush2.bf16.msra.mxu0 %v3491
        %3563 = vmatprep.mubr.bf16.mxu0 %v3322
        %3564 = vmatmul.mubr.bf16.gmra.mxu0 %v3318
        %v3565 = vpop.f32.mrf.mxu0
        %v3566 = vadd.f32 %v3385, %v3565
        %v3567 = vpop.f32.mrf.mxu0
        %v3568 = vpop.f32.mrf.mxu0
        %v3569 = vadd.f32 %v3385, %v3568
        %v3570 = vpop.f32.mrf.mxu0
        %3571 = vmatprep.mubr.bf16.mxu0 %v3323
        %3572 = vmatmul.mubr.bf16.gmra.mxu0 %v3319
        %v3573 = vpop.f32.mrf.mxu0
        %v3574 = vadd.f32 %v3385, %v3573
        %v3575 = vpop.f32.mrf.mxu0
        %v3576 = vpop.f32.mrf.mxu0
        %v3577 = vadd.f32 %v3385, %v3576
        %v3578 = vpop.f32.mrf.mxu0
        %3579 = vmatprep.mubr.bf16.mxu0 %v3324
        %3580 = vmatmul.mubr.bf16.gmra.mxu0 %v3320
        %v3581 = vpop.f32.mrf.mxu0
        %v3582 = vadd.f32 %v3385, %v3581
        %v3583 = vpop.f32.mrf.mxu0
        %v3584 = vpop.f32.mrf.mxu0
        %v3585 = vadd.f32 %v3385, %v3584
        %v3586 = vpop.f32.mrf.mxu0
        %3587 = vmatprep.mubr.bf16.mxu0 %v3325
        %3588 = vmatmul.mubr.bf16.gmra.mxu0 %v3321
        %v3589 = vpop.f32.mrf.mxu0
        %v3590 = vadd.f32 %v3385, %v3589
        %v3591 = vpop.f32.mrf.mxu0
        %v3592 = vpop.f32.mrf.mxu0
        %v3593 = vadd.f32 %v3385, %v3592
        %v3594 = vpop.f32.mrf.mxu0
        %3595 = vdwg.mxu0
        %3596 = vmatprep.subr.bf16.mxu0 0
        %3597 = vmatpush1.bf16.msra.mxu0 %v3506
        %3598 = vmatprep.subr.bf16.mxu0 0
        %3599 = vmatpush1.bf16.msra.mxu0 %v3505
        %3600 = vmatprep.subr.bf16.mxu0 0
        %3601 = vmatpush1.bf16.msra.mxu0 %v3504
        %3602 = vmatprep.subr.bf16.mxu0 0
        %3603 = vmatpush1.bf16.msra.mxu0 %v3503
        %3604 = vmatprep.subr.bf16.mxu0 0
        %3605 = vmatpush1.bf16.msra.mxu0 %v3502
        %3606 = vmatprep.subr.bf16.mxu0 0
        %3607 = vmatpush1.bf16.msra.mxu0 %v3501
        %3608 = vmatprep.subr.bf16.mxu0 0
        %3609 = vmatpush1.bf16.msra.mxu0 %v3500
        %3610 = vmatprep.subr.bf16.mxu0 0
        %3611 = vmatpush1.bf16.msra.mxu0 %v3499
        %3612 = vmatprep.subr.bf16.mxu0 0
        %3613 = vmatpush2.bf16.msra.mxu0 0
        %3614 = vmatprep.subr.bf16.mxu0 0
        %3615 = vmatpush2.bf16.msra.mxu0 0
        %3616 = vmatprep.subr.bf16.mxu0 0
        %3617 = vmatpush2.bf16.msra.mxu0 0
        %3618 = vmatprep.subr.bf16.mxu0 0
        %3619 = vmatpush2.bf16.msra.mxu0 0
        %3620 = vmatprep.subr.bf16.mxu0 0
        %3621 = vmatpush2.bf16.msra.mxu0 0
        %3622 = vmatprep.subr.bf16.mxu0 0
        %3623 = vmatpush2.bf16.msra.mxu0 0
        %3624 = vmatprep.subr.bf16.mxu0 0
        %3625 = vmatpush2.bf16.msra.mxu0 0
        %3626 = vmatprep.subr.bf16.mxu0 0
        %3627 = vmatpush2.bf16.msra.mxu0 0
        %3628 = vmatprep.mubr.bf16.mxu0 0
        %3629 = vmatmul.mubr.bf16.gmra.mxu0 %v3326
        %v3630 = vpop.f32.mrf.mxu0
        %v3631 = vadd.f32 %v3566, %v3630
        %v3632 = vpop.f32.mrf.mxu0
        %v3633 = vpop.f32.mrf.mxu0
        %v3634 = vadd.f32 %v3569, %v3633
        %v3635 = vpop.f32.mrf.mxu0
        %3636 = vmatprep.mubr.bf16.mxu0 0
        %3637 = vmatmul.mubr.bf16.gmra.mxu0 %v3327
        %v3638 = vpop.f32.mrf.mxu0
        %v3639 = vadd.f32 %v3574, %v3638
        %v3640 = vpop.f32.mrf.mxu0
        %v3641 = vpop.f32.mrf.mxu0
        %v3642 = vadd.f32 %v3577, %v3641
        %v3643 = vpop.f32.mrf.mxu0
        %3644 = vmatprep.mubr.bf16.mxu0 0
        %3645 = vmatmul.mubr.bf16.gmra.mxu0 %v3328
        %v3646 = vpop.f32.mrf.mxu0
        %v3647 = vadd.f32 %v3582, %v3646
        %v3648 = vpop.f32.mrf.mxu0
        %v3649 = vpop.f32.mrf.mxu0
        %v3650 = vadd.f32 %v3585, %v3649
        %v3651 = vpop.f32.mrf.mxu0
        %3652 = vmatprep.mubr.bf16.mxu0 0
        %3653 = vmatmul.mubr.bf16.gmra.mxu0 %v3329
        %v3654 = vpop.f32.mrf.mxu0
        %v3655 = vadd.f32 %v3590, %v3654
        %v3656 = vpop.f32.mrf.mxu0
        %v3657 = vpop.f32.mrf.mxu0
        %v3658 = vadd.f32 %v3593, %v3657
        %v3659 = vpop.f32.mrf.mxu0
        %3660 = vdwg.mxu0
        %v3661 = vmax.f32 %v3631, 0.0
        %v3662 = vmax.f32 %v3634, 0.0
        %v3663 = vmax.f32 %v3639, 0.0
        %v3664 = vmax.f32 %v3642, 0.0
        %v3665 = vmax.f32 %v3647, 0.0
        %v3666 = vmax.f32 %v3650, 0.0
        %v3667 = vmax.f32 %v3655, 0.0
        %v3668 = vmax.f32 %v3658, 0.0
        %v3669 = vpack.c.bf16 %v3662, %v3661
        %v3670 = vpack.c.bf16 %v3664, %v3663
        %v3671 = vpack.c.bf16 %v3666, %v3665
        %v3672 = vpack.c.bf16 %v3668, %v3667
        %s3673 = scalar_lea.vmem [#allocation11], 256
        %v3674 = vld [vmem:[%s3673] sm:$0xf]
        %v3675 = vld [vmem:[%s3673 + $0x4] sm:$0xf]
        %v3676 = vld [vmem:[%s3673 + $0x8] sm:$0xf]
        %v3677 = vld [vmem:[%s3673 + $0xc] sm:$0xf]
        %v3678 = vld [vmem:[%s3673 + $0x10] sm:$0xf]
        %v3679 = vld [vmem:[%s3673 + $0x14] sm:$0xf]
        %v3680 = vld [vmem:[%s3673 + $0x18] sm:$0xf]
        %v3681 = vld [vmem:[%s3673 + $0x1c] sm:$0xf]
        %v3682 = vld [vmem:[%s3673 + $0x20] sm:$0xf]
        %v3683 = vld [vmem:[%s3673 + $0x24] sm:$0xf]
        %v3684 = vld [vmem:[%s3673 + $0x28] sm:$0xf]
        %v3685 = vld [vmem:[%s3673 + $0x2c] sm:$0xf]
        %v3686 = vld [vmem:[%s3673 + $0x30] sm:$0xf]
        %v3687 = vld [vmem:[%s3673 + $0x34] sm:$0xf]
        %v3688 = vld [vmem:[%s3673 + $0x38] sm:$0xf]
        %v3689 = vld [vmem:[%s3673 + $0x3c] sm:$0xf]
        %s3690 = scalar_lea.vmem %s9, 4
        %v3691 = vld [vmem:[%s3690] sm:$0x1]
        %v3693 = vlaneseq
        %v3694 = vshrl.u32 %v3693, 7
        %v3695 = vsub.s32 0, %v3694
        %v3696 = vrot.slane %v3691, %v3695
        %v3714 = vunpack.c.l.b16 %v3674
        %v3715 = vunpack.c.l.b16 %v3675
        %v3716 = vunpack.c.l.b16 %v3676
        %v3717 = vunpack.c.l.b16 %v3677
        %v3718 = vunpack.c.l.b16 %v3678
        %v3719 = vunpack.c.l.b16 %v3679
        %v3720 = vunpack.c.l.b16 %v3680
        %v3721 = vunpack.c.l.b16 %v3681
        %v3722 = vunpack.c.l.b16 %v3682
        %v3723 = vunpack.c.l.b16 %v3683
        %v3724 = vunpack.c.l.b16 %v3684
        %v3725 = vunpack.c.l.b16 %v3685
        %v3726 = vunpack.c.l.b16 %v3686
        %v3727 = vunpack.c.l.b16 %v3687
        %v3728 = vunpack.c.l.b16 %v3688
        %v3729 = vunpack.c.l.b16 %v3689
        %v3730 = vpack.c.b16 %v3715, %v3714
        %v3731 = vpack.c.b16 %v3717, %v3716
        %v3732 = vpack.c.b16 %v3719, %v3718
        %v3733 = vpack.c.b16 %v3721, %v3720
        %v3734 = vpack.c.b16 %v3723, %v3722
        %v3735 = vpack.c.b16 %v3725, %v3724
        %v3736 = vpack.c.b16 %v3727, %v3726
        %v3737 = vpack.c.b16 %v3729, %v3728
        %3746 = vmatprep.subr.bf16.mxu0 0
        %3747 = vmatpush1.bf16.msra.mxu0 %v3737
        %3748 = vmatprep.subr.bf16.mxu0 0
        %3749 = vmatpush1.bf16.msra.mxu0 %v3736
        %3750 = vmatprep.subr.bf16.mxu0 0
        %3751 = vmatpush1.bf16.msra.mxu0 %v3735
        %3752 = vmatprep.subr.bf16.mxu0 0
        %3753 = vmatpush1.bf16.msra.mxu0 %v3734
        %3754 = vmatprep.subr.bf16.mxu0 0
        %3755 = vmatpush1.bf16.msra.mxu0 %v3733
        %3756 = vmatprep.subr.bf16.mxu0 0
        %3757 = vmatpush1.bf16.msra.mxu0 %v3732
        %3758 = vmatprep.subr.bf16.mxu0 0
        %3759 = vmatpush1.bf16.msra.mxu0 %v3731
        %3760 = vmatprep.subr.bf16.mxu0 0
        %3761 = vmatpush1.bf16.msra.mxu0 %v3730
        %3762 = vmatprep.subr.bf16.mxu0 0
        %3763 = vmatpush2.bf16.msra.mxu0 0
        %3764 = vmatprep.subr.bf16.mxu0 0
        %3765 = vmatpush2.bf16.msra.mxu0 0
        %3766 = vmatprep.subr.bf16.mxu0 0
        %3767 = vmatpush2.bf16.msra.mxu0 0
        %3768 = vmatprep.subr.bf16.mxu0 0
        %3769 = vmatpush2.bf16.msra.mxu0 0
        %3770 = vmatprep.subr.bf16.mxu0 0
        %3771 = vmatpush2.bf16.msra.mxu0 0
        %3772 = vmatprep.subr.bf16.mxu0 0
        %3773 = vmatpush2.bf16.msra.mxu0 0
        %3774 = vmatprep.subr.bf16.mxu0 0
        %3775 = vmatpush2.bf16.msra.mxu0 0
        %3776 = vmatprep.subr.bf16.mxu0 0
        %3777 = vmatpush2.bf16.msra.mxu0 0
        %3778 = vmatprep.mubr.bf16.mxu0 0
        %3779 = vmatmul.mubr.bf16.gmra.mxu0 %v3669
        %v3780 = vpop.f32.mrf.mxu0
        %v3781 = vadd.f32 %v3696, %v3780
        %v3782 = vpop.f32.mrf.mxu0
        %v3783 = vpop.f32.mrf.mxu0
        %v3784 = vadd.f32 %v3696, %v3783
        %v3785 = vpop.f32.mrf.mxu0
        %3786 = vmatprep.mubr.bf16.mxu0 0
        %3787 = vmatmul.mubr.bf16.gmra.mxu0 %v3670
        %v3788 = vpop.f32.mrf.mxu0
        %v3789 = vadd.f32 %v3696, %v3788
        %v3790 = vpop.f32.mrf.mxu0
        %v3791 = vpop.f32.mrf.mxu0
        %v3792 = vadd.f32 %v3696, %v3791
        %v3793 = vpop.f32.mrf.mxu0
        %3794 = vmatprep.mubr.bf16.mxu0 0
        %3795 = vmatmul.mubr.bf16.gmra.mxu0 %v3671
        %v3796 = vpop.f32.mrf.mxu0
        %v3797 = vadd.f32 %v3696, %v3796
        %v3798 = vpop.f32.mrf.mxu0
        %v3799 = vpop.f32.mrf.mxu0
        %v3800 = vadd.f32 %v3696, %v3799
        %v3801 = vpop.f32.mrf.mxu0
        %3802 = vmatprep.mubr.bf16.mxu0 0
        %3803 = vmatmul.mubr.bf16.gmra.mxu0 %v3672
        %v3804 = vpop.f32.mrf.mxu0
        %v3805 = vadd.f32 %v3696, %v3804
        %v3806 = vpop.f32.mrf.mxu0
        %v3807 = vpop.f32.mrf.mxu0
        %v3808 = vadd.f32 %v3696, %v3807
        %v3809 = vpop.f32.mrf.mxu0
        %3810 = vdwg.mxu0
        %v3811 = vadd.f32 %v3286, %v3781
        %v3812 = vadd.f32 %v3287, %v3784
        %v3813 = vadd.f32 %v3288, %v3789
        %v3814 = vadd.f32 %v3289, %v3792
        %v3815 = vadd.f32 %v3290, %v3797
        %v3816 = vadd.f32 %v3291, %v3800
        %v3817 = vadd.f32 %v3292, %v3805
        %v3818 = vadd.f32 %v3293, %v3808
        %v3819 = vmul.f32 %v3811, %v532
        %v3820 = vmul.f32 %v3812, %v537
        %v3821 = vmul.f32 %v3813, %v542
        %v3822 = vmul.f32 %v3814, %v547
        %v3823 = vmul.f32 %v3815, %v552
        %v3824 = vmul.f32 %v3816, %v557
        %v3825 = vmul.f32 %v3817, %v562
        %v3826 = vmul.f32 %v3818, %v567
        %3827 = vst [vmem:[#allocation2 + $0x8] sm:$0xff] %v3819
        %3828 = vst [vmem:[#allocation2 + $0x10] sm:$0xff] %v3820
        %3829 = vst [vmem:[#allocation2 + $0x18] sm:$0xff] %v3821
        %3830 = vst [vmem:[#allocation2 + $0x20] sm:$0xff] %v3822
        %3831 = vst [vmem:[#allocation2 + $0x28] sm:$0xff] %v3823
        %3832 = vst [vmem:[#allocation2 + $0x30] sm:$0xff] %v3824
        %3833 = vst [vmem:[#allocation2 + $0x38] sm:$0xff] %v3825
        %3834 = vst [vmem:[#allocation2 + $0x40] sm:$0xff] %v3826
        %v3835 = vld [vmem:[#allocation2 + $0x4] sm:$0xff]
        %v3836 = vld [vmem:[#allocation2 + $0xc] sm:$0xff]
        %v3837 = vld [vmem:[#allocation2 + $0x14] sm:$0xff]
        %v3838 = vld [vmem:[#allocation2 + $0x1c] sm:$0xff]
        %v3839 = vld [vmem:[#allocation2 + $0x24] sm:$0xff]
        %v3840 = vld [vmem:[#allocation2 + $0x2c] sm:$0xff]
        %v3841 = vld [vmem:[#allocation2 + $0x34] sm:$0xff]
        %v3842 = vld [vmem:[#allocation2 + $0x3c] sm:$0xff]
        %v3843 = vld [vmem:[#allocation2 + $0x44] sm:$0xff]
        %v3844 = vpack.c.bf16 %v3836, %v3835
        %v3845 = vpack.c.bf16 %v3838, %v3837
        %v3846 = vpack.c.bf16 %v3840, %v3839
        %v3847 = vpack.c.bf16 %v3842, %v3841
        %v3848 = vpack.c.bf16 %v3820, %v3819
        %v3849 = vpack.c.bf16 %v3822, %v3821
        %v3850 = vpack.c.bf16 %v3824, %v3823
        %v3851 = vpack.c.bf16 %v3826, %v3825
        %v3852 = vpack.c.bf16 %v3837, %v3836
        %v3853 = vpack.c.bf16 %v3839, %v3838
        %v3854 = vpack.c.bf16 %v3841, %v3840
        %v3855 = vpack.c.bf16 %v3843, %v3842
        %s3856 = scalar_lea.vmem [#allocation9], 960
        %v3857 = vld [vmem:[%s3856] sm:$0xf]
        %v3858 = vld [vmem:[%s3856 + $0x4] sm:$0xf]
        %v3859 = vld [vmem:[%s3856 + $0x8] sm:$0xf]
        %v3860 = vld [vmem:[%s3856 + $0xc] sm:$0xf]
        %v3861 = vld [vmem:[%s3856 + $0x10] sm:$0xf]
        %v3862 = vld [vmem:[%s3856 + $0x14] sm:$0xf]
        %v3863 = vld [vmem:[%s3856 + $0x18] sm:$0xf]
        %v3864 = vld [vmem:[%s3856 + $0x1c] sm:$0xf]
        %v3865 = vld [vmem:[%s3856 + $0x20] sm:$0xf]
        %v3866 = vld [vmem:[%s3856 + $0x24] sm:$0xf]
        %v3867 = vld [vmem:[%s3856 + $0x28] sm:$0xf]
        %v3868 = vld [vmem:[%s3856 + $0x2c] sm:$0xf]
        %v3869 = vld [vmem:[%s3856 + $0x30] sm:$0xf]
        %v3870 = vld [vmem:[%s3856 + $0x34] sm:$0xf]
        %v3871 = vld [vmem:[%s3856 + $0x38] sm:$0xf]
        %v3872 = vld [vmem:[%s3856 + $0x3c] sm:$0xf]
        %v3873 = vld [vmem:[%s3856 + $0x40] sm:$0xf]
        %v3874 = vld [vmem:[%s3856 + $0x44] sm:$0xf]
        %v3875 = vld [vmem:[%s3856 + $0x48] sm:$0xf]
        %v3876 = vld [vmem:[%s3856 + $0x4c] sm:$0xf]
        %v3877 = vld [vmem:[%s3856 + $0x50] sm:$0xf]
        %v3878 = vld [vmem:[%s3856 + $0x54] sm:$0xf]
        %v3879 = vld [vmem:[%s3856 + $0x58] sm:$0xf]
        %v3880 = vld [vmem:[%s3856 + $0x5c] sm:$0xf]
        %v3881 = vld [vmem:[%s3856 + $0x60] sm:$0xf]
        %v3882 = vld [vmem:[%s3856 + $0x64] sm:$0xf]
        %v3883 = vld [vmem:[%s3856 + $0x68] sm:$0xf]
        %v3884 = vld [vmem:[%s3856 + $0x6c] sm:$0xf]
        %v3885 = vld [vmem:[%s3856 + $0x70] sm:$0xf]
        %v3886 = vld [vmem:[%s3856 + $0x74] sm:$0xf]
        %v3887 = vld [vmem:[%s3856 + $0x78] sm:$0xf]
        %v3888 = vld [vmem:[%s3856 + $0x7c] sm:$0xf]
        %v3889 = vld [vmem:[%s3856 + $0x80] sm:$0xf]
        %v3890 = vld [vmem:[%s3856 + $0x84] sm:$0xf]
        %v3891 = vld [vmem:[%s3856 + $0x88] sm:$0xf]
        %v3892 = vld [vmem:[%s3856 + $0x8c] sm:$0xf]
        %v3893 = vld [vmem:[%s3856 + $0x90] sm:$0xf]
        %v3894 = vld [vmem:[%s3856 + $0x94] sm:$0xf]
        %v3895 = vld [vmem:[%s3856 + $0x98] sm:$0xf]
        %v3896 = vld [vmem:[%s3856 + $0x9c] sm:$0xf]
        %v3897 = vld [vmem:[%s3856 + $0xa0] sm:$0xf]
        %v3898 = vld [vmem:[%s3856 + $0xa4] sm:$0xf]
        %v3899 = vld [vmem:[%s3856 + $0xa8] sm:$0xf]
        %v3900 = vld [vmem:[%s3856 + $0xac] sm:$0xf]
        %v3901 = vld [vmem:[%s3856 + $0xb0] sm:$0xf]
        %v3902 = vld [vmem:[%s3856 + $0xb4] sm:$0xf]
        %v3903 = vld [vmem:[%s3856 + $0xb8] sm:$0xf]
        %v3904 = vld [vmem:[%s3856 + $0xbc] sm:$0xf]
        %s3905 = scalar_lea.vmem %s7, 5
        %v3906 = vld [vmem:[%s3905] sm:$0x1]
        %v3908 = vlaneseq
        %v3909 = vshrl.u32 %v3908, 7
        %v3910 = vsub.s32 0, %v3909
        %v3911 = vrot.slane %v3906, %v3910
        %v3961 = vunpack.c.l.b16 %v3857
        %v3962 = vunpack.c.l.b16 %v3858
        %v3963 = vunpack.c.l.b16 %v3859
        %v3964 = vunpack.c.l.b16 %v3860
        %v3965 = vunpack.c.l.b16 %v3861
        %v3966 = vunpack.c.l.b16 %v3862
        %v3967 = vunpack.c.l.b16 %v3863
        %v3968 = vunpack.c.l.b16 %v3864
        %v3969 = vunpack.c.l.b16 %v3865
        %v3970 = vunpack.c.l.b16 %v3866
        %v3971 = vunpack.c.l.b16 %v3867
        %v3972 = vunpack.c.l.b16 %v3868
        %v3973 = vunpack.c.l.b16 %v3869
        %v3974 = vunpack.c.l.b16 %v3870
        %v3975 = vunpack.c.l.b16 %v3871
        %v3976 = vunpack.c.l.b16 %v3872
        %v3977 = vunpack.c.l.b16 %v3873
        %v3978 = vunpack.c.l.b16 %v3874
        %v3979 = vunpack.c.l.b16 %v3875
        %v3980 = vunpack.c.l.b16 %v3876
        %v3981 = vunpack.c.l.b16 %v3877
        %v3982 = vunpack.c.l.b16 %v3878
        %v3983 = vunpack.c.l.b16 %v3879
        %v3984 = vunpack.c.l.b16 %v3880
        %v3985 = vunpack.c.l.b16 %v3881
        %v3986 = vunpack.c.l.b16 %v3882
        %v3987 = vunpack.c.l.b16 %v3883
        %v3988 = vunpack.c.l.b16 %v3884
        %v3989 = vunpack.c.l.b16 %v3885
        %v3990 = vunpack.c.l.b16 %v3886
        %v3991 = vunpack.c.l.b16 %v3887
        %v3992 = vunpack.c.l.b16 %v3888
        %v3993 = vunpack.c.l.b16 %v3889
        %v3994 = vunpack.c.l.b16 %v3890
        %v3995 = vunpack.c.l.b16 %v3891
        %v3996 = vunpack.c.l.b16 %v3892
        %v3997 = vunpack.c.l.b16 %v3893
        %v3998 = vunpack.c.l.b16 %v3894
        %v3999 = vunpack.c.l.b16 %v3895
        %v4000 = vunpack.c.l.b16 %v3896
        %v4001 = vunpack.c.l.b16 %v3897
        %v4002 = vunpack.c.l.b16 %v3898
        %v4003 = vunpack.c.l.b16 %v3899
        %v4004 = vunpack.c.l.b16 %v3900
        %v4005 = vunpack.c.l.b16 %v3901
        %v4006 = vunpack.c.l.b16 %v3902
        %v4007 = vunpack.c.l.b16 %v3903
        %v4008 = vunpack.c.l.b16 %v3904
        %v4009 = vpack.c.b16 %v3962, %v3961
        %v4010 = vpack.c.b16 %v3964, %v3963
        %v4011 = vpack.c.b16 %v3966, %v3965
        %v4012 = vpack.c.b16 %v3968, %v3967
        %v4013 = vpack.c.b16 %v3970, %v3969
        %v4014 = vpack.c.b16 %v3972, %v3971
        %v4015 = vpack.c.b16 %v3974, %v3973
        %v4016 = vpack.c.b16 %v3976, %v3975
        %v4017 = vpack.c.b16 %v3978, %v3977
        %v4018 = vpack.c.b16 %v3980, %v3979
        %v4019 = vpack.c.b16 %v3982, %v3981
        %v4020 = vpack.c.b16 %v3984, %v3983
        %v4021 = vpack.c.b16 %v3986, %v3985
        %v4022 = vpack.c.b16 %v3988, %v3987
        %v4023 = vpack.c.b16 %v3990, %v3989
        %v4024 = vpack.c.b16 %v3992, %v3991
        %v4025 = vpack.c.b16 %v3994, %v3993
        %v4026 = vpack.c.b16 %v3996, %v3995
        %v4027 = vpack.c.b16 %v3998, %v3997
        %v4028 = vpack.c.b16 %v4000, %v3999
        %v4029 = vpack.c.b16 %v4002, %v4001
        %v4030 = vpack.c.b16 %v4004, %v4003
        %v4031 = vpack.c.b16 %v4006, %v4005
        %v4032 = vpack.c.b16 %v4008, %v4007
        %4057 = vmatprep.subr.bf16.mxu0 0
        %4058 = vmatpush1.bf16.msra.mxu0 %v4016
        %4059 = vmatprep.subr.bf16.mxu0 0
        %4060 = vmatpush1.bf16.msra.mxu0 %v4015
        %4061 = vmatprep.subr.bf16.mxu0 0
        %4062 = vmatpush1.bf16.msra.mxu0 %v4014
        %4063 = vmatprep.subr.bf16.mxu0 0
        %4064 = vmatpush1.bf16.msra.mxu0 %v4013
        %4065 = vmatprep.subr.bf16.mxu0 0
        %4066 = vmatpush1.bf16.msra.mxu0 %v4012
        %4067 = vmatprep.subr.bf16.mxu0 0
        %4068 = vmatpush1.bf16.msra.mxu0 %v4011
        %4069 = vmatprep.subr.bf16.mxu0 0
        %4070 = vmatpush1.bf16.msra.mxu0 %v4010
        %4071 = vmatprep.subr.bf16.mxu0 0
        %4072 = vmatpush1.bf16.msra.mxu0 %v4009
        %4073 = vmatprep.subr.bf16.mxu0 0
        %4074 = vmatpush2.bf16.msra.mxu0 %v4024
        %4075 = vmatprep.subr.bf16.mxu0 0
        %4076 = vmatpush2.bf16.msra.mxu0 %v4023
        %4077 = vmatprep.subr.bf16.mxu0 0
        %4078 = vmatpush2.bf16.msra.mxu0 %v4022
        %4079 = vmatprep.subr.bf16.mxu0 0
        %4080 = vmatpush2.bf16.msra.mxu0 %v4021
        %4081 = vmatprep.subr.bf16.mxu0 0
        %4082 = vmatpush2.bf16.msra.mxu0 %v4020
        %4083 = vmatprep.subr.bf16.mxu0 0
        %4084 = vmatpush2.bf16.msra.mxu0 %v4019
        %4085 = vmatprep.subr.bf16.mxu0 0
        %4086 = vmatpush2.bf16.msra.mxu0 %v4018
        %4087 = vmatprep.subr.bf16.mxu0 0
        %4088 = vmatpush2.bf16.msra.mxu0 %v4017
        %4089 = vmatprep.mubr.bf16.mxu0 %v3848
        %4090 = vmatmul.mubr.bf16.gmra.mxu0 %v3844
        %v4091 = vpop.f32.mrf.mxu0
        %v4092 = vadd.f32 %v3911, %v4091
        %v4093 = vpop.f32.mrf.mxu0
        %v4094 = vpop.f32.mrf.mxu0
        %v4095 = vadd.f32 %v3911, %v4094
        %v4096 = vpop.f32.mrf.mxu0
        %4097 = vmatprep.mubr.bf16.mxu0 %v3849
        %4098 = vmatmul.mubr.bf16.gmra.mxu0 %v3845
        %v4099 = vpop.f32.mrf.mxu0
        %v4100 = vadd.f32 %v3911, %v4099
        %v4101 = vpop.f32.mrf.mxu0
        %v4102 = vpop.f32.mrf.mxu0
        %v4103 = vadd.f32 %v3911, %v4102
        %v4104 = vpop.f32.mrf.mxu0
        %4105 = vmatprep.mubr.bf16.mxu0 %v3850
        %4106 = vmatmul.mubr.bf16.gmra.mxu0 %v3846
        %v4107 = vpop.f32.mrf.mxu0
        %v4108 = vadd.f32 %v3911, %v4107
        %v4109 = vpop.f32.mrf.mxu0
        %v4110 = vpop.f32.mrf.mxu0
        %v4111 = vadd.f32 %v3911, %v4110
        %v4112 = vpop.f32.mrf.mxu0
        %4113 = vmatprep.mubr.bf16.mxu0 %v3851
        %4114 = vmatmul.mubr.bf16.gmra.mxu0 %v3847
        %v4115 = vpop.f32.mrf.mxu0
        %v4116 = vadd.f32 %v3911, %v4115
        %v4117 = vpop.f32.mrf.mxu0
        %v4118 = vpop.f32.mrf.mxu0
        %v4119 = vadd.f32 %v3911, %v4118
        %v4120 = vpop.f32.mrf.mxu0
        %4121 = vdwg.mxu0
        %4122 = vmatprep.subr.bf16.mxu0 0
        %4123 = vmatpush1.bf16.msra.mxu0 %v4032
        %4124 = vmatprep.subr.bf16.mxu0 0
        %4125 = vmatpush1.bf16.msra.mxu0 %v4031
        %4126 = vmatprep.subr.bf16.mxu0 0
        %4127 = vmatpush1.bf16.msra.mxu0 %v4030
        %4128 = vmatprep.subr.bf16.mxu0 0
        %4129 = vmatpush1.bf16.msra.mxu0 %v4029
        %4130 = vmatprep.subr.bf16.mxu0 0
        %4131 = vmatpush1.bf16.msra.mxu0 %v4028
        %4132 = vmatprep.subr.bf16.mxu0 0
        %4133 = vmatpush1.bf16.msra.mxu0 %v4027
        %4134 = vmatprep.subr.bf16.mxu0 0
        %4135 = vmatpush1.bf16.msra.mxu0 %v4026
        %4136 = vmatprep.subr.bf16.mxu0 0
        %4137 = vmatpush1.bf16.msra.mxu0 %v4025
        %4138 = vmatprep.subr.bf16.mxu0 0
        %4139 = vmatpush2.bf16.msra.mxu0 0
        %4140 = vmatprep.subr.bf16.mxu0 0
        %4141 = vmatpush2.bf16.msra.mxu0 0
        %4142 = vmatprep.subr.bf16.mxu0 0
        %4143 = vmatpush2.bf16.msra.mxu0 0
        %4144 = vmatprep.subr.bf16.mxu0 0
        %4145 = vmatpush2.bf16.msra.mxu0 0
        %4146 = vmatprep.subr.bf16.mxu0 0
        %4147 = vmatpush2.bf16.msra.mxu0 0
        %4148 = vmatprep.subr.bf16.mxu0 0
        %4149 = vmatpush2.bf16.msra.mxu0 0
        %4150 = vmatprep.subr.bf16.mxu0 0
        %4151 = vmatpush2.bf16.msra.mxu0 0
        %4152 = vmatprep.subr.bf16.mxu0 0
        %4153 = vmatpush2.bf16.msra.mxu0 0
        %4154 = vmatprep.mubr.bf16.mxu0 0
        %4155 = vmatmul.mubr.bf16.gmra.mxu0 %v3852
        %v4156 = vpop.f32.mrf.mxu0
        %v4157 = vadd.f32 %v4092, %v4156
        %v4158 = vpop.f32.mrf.mxu0
        %v4159 = vpop.f32.mrf.mxu0
        %v4160 = vadd.f32 %v4095, %v4159
        %v4161 = vpop.f32.mrf.mxu0
        %4162 = vmatprep.mubr.bf16.mxu0 0
        %4163 = vmatmul.mubr.bf16.gmra.mxu0 %v3853
        %v4164 = vpop.f32.mrf.mxu0
        %v4165 = vadd.f32 %v4100, %v4164
        %v4166 = vpop.f32.mrf.mxu0
        %v4167 = vpop.f32.mrf.mxu0
        %v4168 = vadd.f32 %v4103, %v4167
        %v4169 = vpop.f32.mrf.mxu0
        %4170 = vmatprep.mubr.bf16.mxu0 0
        %4171 = vmatmul.mubr.bf16.gmra.mxu0 %v3854
        %v4172 = vpop.f32.mrf.mxu0
        %v4173 = vadd.f32 %v4108, %v4172
        %v4174 = vpop.f32.mrf.mxu0
        %v4175 = vpop.f32.mrf.mxu0
        %v4176 = vadd.f32 %v4111, %v4175
        %v4177 = vpop.f32.mrf.mxu0
        %4178 = vmatprep.mubr.bf16.mxu0 0
        %4179 = vmatmul.mubr.bf16.gmra.mxu0 %v3855
        %v4180 = vpop.f32.mrf.mxu0
        %v4181 = vadd.f32 %v4116, %v4180
        %v4182 = vpop.f32.mrf.mxu0
        %v4183 = vpop.f32.mrf.mxu0
        %v4184 = vadd.f32 %v4119, %v4183
        %v4185 = vpop.f32.mrf.mxu0
        %4186 = vdwg.mxu0
        %v4187 = vmax.f32 %v4157, 0.0
        %v4188 = vmax.f32 %v4160, 0.0
        %v4189 = vmax.f32 %v4165, 0.0
        %v4190 = vmax.f32 %v4168, 0.0
        %v4191 = vmax.f32 %v4173, 0.0
        %v4192 = vmax.f32 %v4176, 0.0
        %v4193 = vmax.f32 %v4181, 0.0
        %v4194 = vmax.f32 %v4184, 0.0
        %v4195 = vpack.c.bf16 %v4188, %v4187
        %v4196 = vpack.c.bf16 %v4190, %v4189
        %v4197 = vpack.c.bf16 %v4192, %v4191
        %v4198 = vpack.c.bf16 %v4194, %v4193
        %s4199 = scalar_lea.vmem [#allocation11], 320
        %v4200 = vld [vmem:[%s4199] sm:$0xf]
        %v4201 = vld [vmem:[%s4199 + $0x4] sm:$0xf]
        %v4202 = vld [vmem:[%s4199 + $0x8] sm:$0xf]
        %v4203 = vld [vmem:[%s4199 + $0xc] sm:$0xf]
        %v4204 = vld [vmem:[%s4199 + $0x10] sm:$0xf]
        %v4205 = vld [vmem:[%s4199 + $0x14] sm:$0xf]
        %v4206 = vld [vmem:[%s4199 + $0x18] sm:$0xf]
        %v4207 = vld [vmem:[%s4199 + $0x1c] sm:$0xf]
        %v4208 = vld [vmem:[%s4199 + $0x20] sm:$0xf]
        %v4209 = vld [vmem:[%s4199 + $0x24] sm:$0xf]
        %v4210 = vld [vmem:[%s4199 + $0x28] sm:$0xf]
        %v4211 = vld [vmem:[%s4199 + $0x2c] sm:$0xf]
        %v4212 = vld [vmem:[%s4199 + $0x30] sm:$0xf]
        %v4213 = vld [vmem:[%s4199 + $0x34] sm:$0xf]
        %v4214 = vld [vmem:[%s4199 + $0x38] sm:$0xf]
        %v4215 = vld [vmem:[%s4199 + $0x3c] sm:$0xf]
        %s4216 = scalar_lea.vmem %s9, 5
        %v4217 = vld [vmem:[%s4216] sm:$0x1]
        %v4219 = vlaneseq
        %v4220 = vshrl.u32 %v4219, 7
        %v4221 = vsub.s32 0, %v4220
        %v4222 = vrot.slane %v4217, %v4221
        %v4240 = vunpack.c.l.b16 %v4200
        %v4241 = vunpack.c.l.b16 %v4201
        %v4242 = vunpack.c.l.b16 %v4202
        %v4243 = vunpack.c.l.b16 %v4203
        %v4244 = vunpack.c.l.b16 %v4204
        %v4245 = vunpack.c.l.b16 %v4205
        %v4246 = vunpack.c.l.b16 %v4206
        %v4247 = vunpack.c.l.b16 %v4207
        %v4248 = vunpack.c.l.b16 %v4208
        %v4249 = vunpack.c.l.b16 %v4209
        %v4250 = vunpack.c.l.b16 %v4210
        %v4251 = vunpack.c.l.b16 %v4211
        %v4252 = vunpack.c.l.b16 %v4212
        %v4253 = vunpack.c.l.b16 %v4213
        %v4254 = vunpack.c.l.b16 %v4214
        %v4255 = vunpack.c.l.b16 %v4215
        %v4256 = vpack.c.b16 %v4241, %v4240
        %v4257 = vpack.c.b16 %v4243, %v4242
        %v4258 = vpack.c.b16 %v4245, %v4244
        %v4259 = vpack.c.b16 %v4247, %v4246
        %v4260 = vpack.c.b16 %v4249, %v4248
        %v4261 = vpack.c.b16 %v4251, %v4250
        %v4262 = vpack.c.b16 %v4253, %v4252
        %v4263 = vpack.c.b16 %v4255, %v4254
        %4272 = vmatprep.subr.bf16.mxu0 0
        %4273 = vmatpush1.bf16.msra.mxu0 %v4263
        %4274 = vmatprep.subr.bf16.mxu0 0
        %4275 = vmatpush1.bf16.msra.mxu0 %v4262
        %4276 = vmatprep.subr.bf16.mxu0 0
        %4277 = vmatpush1.bf16.msra.mxu0 %v4261
        %4278 = vmatprep.subr.bf16.mxu0 0
        %4279 = vmatpush1.bf16.msra.mxu0 %v4260
        %4280 = vmatprep.subr.bf16.mxu0 0
        %4281 = vmatpush1.bf16.msra.mxu0 %v4259
        %4282 = vmatprep.subr.bf16.mxu0 0
        %4283 = vmatpush1.bf16.msra.mxu0 %v4258
        %4284 = vmatprep.subr.bf16.mxu0 0
        %4285 = vmatpush1.bf16.msra.mxu0 %v4257
        %4286 = vmatprep.subr.bf16.mxu0 0
        %4287 = vmatpush1.bf16.msra.mxu0 %v4256
        %4288 = vmatprep.subr.bf16.mxu0 0
        %4289 = vmatpush2.bf16.msra.mxu0 0
        %4290 = vmatprep.subr.bf16.mxu0 0
        %4291 = vmatpush2.bf16.msra.mxu0 0
        %4292 = vmatprep.subr.bf16.mxu0 0
        %4293 = vmatpush2.bf16.msra.mxu0 0
        %4294 = vmatprep.subr.bf16.mxu0 0
        %4295 = vmatpush2.bf16.msra.mxu0 0
        %4296 = vmatprep.subr.bf16.mxu0 0
        %4297 = vmatpush2.bf16.msra.mxu0 0
        %4298 = vmatprep.subr.bf16.mxu0 0
        %4299 = vmatpush2.bf16.msra.mxu0 0
        %4300 = vmatprep.subr.bf16.mxu0 0
        %4301 = vmatpush2.bf16.msra.mxu0 0
        %4302 = vmatprep.subr.bf16.mxu0 0
        %4303 = vmatpush2.bf16.msra.mxu0 0
        %4304 = vmatprep.mubr.bf16.mxu0 0
        %4305 = vmatmul.mubr.bf16.gmra.mxu0 %v4195
        %v4306 = vpop.f32.mrf.mxu0
        %v4307 = vadd.f32 %v4222, %v4306
        %v4308 = vpop.f32.mrf.mxu0
        %v4309 = vpop.f32.mrf.mxu0
        %v4310 = vadd.f32 %v4222, %v4309
        %v4311 = vpop.f32.mrf.mxu0
        %4312 = vmatprep.mubr.bf16.mxu0 0
        %4313 = vmatmul.mubr.bf16.gmra.mxu0 %v4196
        %v4314 = vpop.f32.mrf.mxu0
        %v4315 = vadd.f32 %v4222, %v4314
        %v4316 = vpop.f32.mrf.mxu0
        %v4317 = vpop.f32.mrf.mxu0
        %v4318 = vadd.f32 %v4222, %v4317
        %v4319 = vpop.f32.mrf.mxu0
        %4320 = vmatprep.mubr.bf16.mxu0 0
        %4321 = vmatmul.mubr.bf16.gmra.mxu0 %v4197
        %v4322 = vpop.f32.mrf.mxu0
        %v4323 = vadd.f32 %v4222, %v4322
        %v4324 = vpop.f32.mrf.mxu0
        %v4325 = vpop.f32.mrf.mxu0
        %v4326 = vadd.f32 %v4222, %v4325
        %v4327 = vpop.f32.mrf.mxu0
        %4328 = vmatprep.mubr.bf16.mxu0 0
        %4329 = vmatmul.mubr.bf16.gmra.mxu0 %v4198
        %v4330 = vpop.f32.mrf.mxu0
        %v4331 = vadd.f32 %v4222, %v4330
        %v4332 = vpop.f32.mrf.mxu0
        %v4333 = vpop.f32.mrf.mxu0
        %v4334 = vadd.f32 %v4222, %v4333
        %v4335 = vpop.f32.mrf.mxu0
        %4336 = vdwg.mxu0
        %v4337 = vadd.f32 %v3819, %v4307
        %v4338 = vadd.f32 %v3820, %v4310
        %v4339 = vadd.f32 %v3821, %v4315
        %v4340 = vadd.f32 %v3822, %v4318
        %v4341 = vadd.f32 %v3823, %v4323
        %v4342 = vadd.f32 %v3824, %v4326
        %v4343 = vadd.f32 %v3825, %v4331
        %v4344 = vadd.f32 %v3826, %v4334
        %v4345 = vmul.f32 %v4337, %v532
        %v4346 = vmul.f32 %v4338, %v537
        %v4347 = vmul.f32 %v4339, %v542
        %v4348 = vmul.f32 %v4340, %v547
        %v4349 = vmul.f32 %v4341, %v552
        %v4350 = vmul.f32 %v4342, %v557
        %v4351 = vmul.f32 %v4343, %v562
        %v4352 = vmul.f32 %v4344, %v567
        %v4353 = vpack.c.bf16 %v4346, %v4345
        %v4354 = vpack.c.bf16 %v4348, %v4347
        %v4355 = vpack.c.bf16 %v4350, %v4349
        %v4356 = vpack.c.bf16 %v4352, %v4351
        %s4357 = scalar_lea.vmem %s10, 64
        %v4358 = vld [vmem:[%s4357] sm:$0xf]
        %v4359 = vld [vmem:[%s4357 + $0x4] sm:$0xf]
        %v4360 = vld [vmem:[%s4357 + $0x8] sm:$0xf]
        %v4361 = vld [vmem:[%s4357 + $0xc] sm:$0xf]
        %v4362 = vld [vmem:[%s4357 + $0x10] sm:$0xf]
        %v4363 = vld [vmem:[%s4357 + $0x14] sm:$0xf]
        %v4364 = vld [vmem:[%s4357 + $0x18] sm:$0xf]
        %v4365 = vld [vmem:[%s4357 + $0x1c] sm:$0xf]
        %v4366 = vld [vmem:[%s4357 + $0x20] sm:$0xf]
        %v4367 = vld [vmem:[%s4357 + $0x24] sm:$0xf]
        %v4368 = vld [vmem:[%s4357 + $0x28] sm:$0xf]
        %v4369 = vld [vmem:[%s4357 + $0x2c] sm:$0xf]
        %v4370 = vld [vmem:[%s4357 + $0x30] sm:$0xf]
        %v4371 = vld [vmem:[%s4357 + $0x34] sm:$0xf]
        %v4372 = vld [vmem:[%s4357 + $0x38] sm:$0xf]
        %v4373 = vld [vmem:[%s4357 + $0x3c] sm:$0xf]
        %s4374 = scalar_lea.vmem %s11, 1
        %v4375 = vld [vmem:[%s4374] sm:$0x1]
        %v4377 = vlaneseq
        %v4378 = vshrl.u32 %v4377, 7
        %v4379 = vsub.s32 0, %v4378
        %v4380 = vrot.slane %v4375, %v4379
        %v4398 = vunpack.c.l.b16 %v4358
        %v4399 = vunpack.c.l.b16 %v4359
        %v4400 = vunpack.c.l.b16 %v4360
        %v4401 = vunpack.c.l.b16 %v4361
        %v4402 = vunpack.c.l.b16 %v4362
        %v4403 = vunpack.c.l.b16 %v4363
        %v4404 = vunpack.c.l.b16 %v4364
        %v4405 = vunpack.c.l.b16 %v4365
        %v4406 = vunpack.c.l.b16 %v4366
        %v4407 = vunpack.c.l.b16 %v4367
        %v4408 = vunpack.c.l.b16 %v4368
        %v4409 = vunpack.c.l.b16 %v4369
        %v4410 = vunpack.c.l.b16 %v4370
        %v4411 = vunpack.c.l.b16 %v4371
        %v4412 = vunpack.c.l.b16 %v4372
        %v4413 = vunpack.c.l.b16 %v4373
        %v4414 = vpack.c.b16 %v4399, %v4398
        %v4415 = vpack.c.b16 %v4401, %v4400
        %v4416 = vpack.c.b16 %v4403, %v4402
        %v4417 = vpack.c.b16 %v4405, %v4404
        %v4418 = vpack.c.b16 %v4407, %v4406
        %v4419 = vpack.c.b16 %v4409, %v4408
        %v4420 = vpack.c.b16 %v4411, %v4410
        %v4421 = vpack.c.b16 %v4413, %v4412
        %4430 = vmatprep.subr.bf16.mxu0 0
        %4431 = vmatpush1.bf16.msra.mxu0 %v4421
        %4432 = vmatprep.subr.bf16.mxu0 0
        %4433 = vmatpush1.bf16.msra.mxu0 %v4420
        %4434 = vmatprep.subr.bf16.mxu0 0
        %4435 = vmatpush1.bf16.msra.mxu0 %v4419
        %4436 = vmatprep.subr.bf16.mxu0 0
        %4437 = vmatpush1.bf16.msra.mxu0 %v4418
        %4438 = vmatprep.subr.bf16.mxu0 0
        %4439 = vmatpush1.bf16.msra.mxu0 %v4417
        %4440 = vmatprep.subr.bf16.mxu0 0
        %4441 = vmatpush1.bf16.msra.mxu0 %v4416
        %4442 = vmatprep.subr.bf16.mxu0 0
        %4443 = vmatpush1.bf16.msra.mxu0 %v4415
        %4444 = vmatprep.subr.bf16.mxu0 0
        %4445 = vmatpush1.bf16.msra.mxu0 %v4414
        %4446 = vmatprep.subr.bf16.mxu0 0
        %4447 = vmatpush2.bf16.msra.mxu0 0
        %4448 = vmatprep.subr.bf16.mxu0 0
        %4449 = vmatpush2.bf16.msra.mxu0 0
        %4450 = vmatprep.subr.bf16.mxu0 0
        %4451 = vmatpush2.bf16.msra.mxu0 0
        %4452 = vmatprep.subr.bf16.mxu0 0
        %4453 = vmatpush2.bf16.msra.mxu0 0
        %4454 = vmatprep.subr.bf16.mxu0 0
        %4455 = vmatpush2.bf16.msra.mxu0 0
        %4456 = vmatprep.subr.bf16.mxu0 0
        %4457 = vmatpush2.bf16.msra.mxu0 0
        %4458 = vmatprep.subr.bf16.mxu0 0
        %4459 = vmatpush2.bf16.msra.mxu0 0
        %4460 = vmatprep.subr.bf16.mxu0 0
        %4461 = vmatpush2.bf16.msra.mxu0 0
        %4462 = vmatprep.mubr.bf16.mxu0 0
        %4463 = vmatmul.mubr.bf16.gmra.mxu0 %v4353
        %v4464 = vpop.f32.mrf.mxu0
        %v4465 = vadd.f32 %v4380, %v4464
        %v4466 = vpop.f32.mrf.mxu0
        %v4467 = vpop.f32.mrf.mxu0
        %v4468 = vadd.f32 %v4380, %v4467
        %v4469 = vpop.f32.mrf.mxu0
        %4470 = vmatprep.mubr.bf16.mxu0 0
        %4471 = vmatmul.mubr.bf16.gmra.mxu0 %v4354
        %v4472 = vpop.f32.mrf.mxu0
        %v4473 = vadd.f32 %v4380, %v4472
        %v4474 = vpop.f32.mrf.mxu0
        %v4475 = vpop.f32.mrf.mxu0
        %v4476 = vadd.f32 %v4380, %v4475
        %v4477 = vpop.f32.mrf.mxu0
        %4478 = vmatprep.mubr.bf16.mxu0 0
        %4479 = vmatmul.mubr.bf16.gmra.mxu0 %v4355
        %v4480 = vpop.f32.mrf.mxu0
        %v4481 = vadd.f32 %v4380, %v4480
        %v4482 = vpop.f32.mrf.mxu0
        %v4483 = vpop.f32.mrf.mxu0
        %v4484 = vadd.f32 %v4380, %v4483
        %v4485 = vpop.f32.mrf.mxu0
        %4486 = vmatprep.mubr.bf16.mxu0 0
        %4487 = vmatmul.mubr.bf16.gmra.mxu0 %v4356
        %v4488 = vpop.f32.mrf.mxu0
        %v4489 = vadd.f32 %v4380, %v4488
        %v4490 = vpop.f32.mrf.mxu0
        %v4491 = vpop.f32.mrf.mxu0
        %v4492 = vadd.f32 %v4380, %v4491
        %v4493 = vpop.f32.mrf.mxu0
        %4494 = vdwg.mxu0
        %v4495 = vmul.f32 %v4465, %v532
        %v4496 = vmul.f32 %v4468, %v537
        %v4497 = vmul.f32 %v4473, %v542
        %v4498 = vmul.f32 %v4476, %v547
        %v4499 = vmul.f32 %v4481, %v552
        %v4500 = vmul.f32 %v4484, %v557
        %v4501 = vmul.f32 %v4489, %v562
        %v4502 = vmul.f32 %v4492, %v567
        %s4503 = scalar_lea.vmem %s504, 64 [#allocation12]
        %4504 = vst [vmem:[%s4503] sm:$0xff] %v4495
        %4505 = vst [vmem:[%s4503 + $0x8] sm:$0xff] %v4496
        %4506 = vst [vmem:[%s4503 + $0x10] sm:$0xff] %v4497
        %4507 = vst [vmem:[%s4503 + $0x18] sm:$0xff] %v4498
        %4508 = vst [vmem:[%s4503 + $0x20] sm:$0xff] %v4499
        %4509 = vst [vmem:[%s4503 + $0x28] sm:$0xff] %v4500
        %4510 = vst [vmem:[%s4503 + $0x30] sm:$0xff] %v4501
        %4511 = vst [vmem:[%s4503 + $0x38] sm:$0xff] %v4502
        %s4512 = sand.u32 %s301, 1
        %s4513 = scalar_lea.sflag [#allocation5], %s4512
        %s4514 = sand.u32 %s301, 1
        %s4515 = smul.addr %s4514, 128
        %s4516 = scalar_lea.vmem [#allocation12], %s4515
        // Predicated region
        $region89: #{tpu_custom_call.1} parent=67 // pred_check
          %p4517 = pneg %p311
        $region90: #{tpu_custom_call.1} parent=67 // pred_check_branch
          %4519 = sbr.rel (%p4517) target = $region92
        $region91: #{tpu_custom_call.1} parent=67 // pred_region
          #allocation14 [shape = 'u32[6]{0}', space=smem, size = 0x18, scoped, tag = 'DMA stride descriptor']
          %s4521 = ssub.s32 2048, 2048
          %4522 = vsyncadd %s4513, %s4521
          %s4523 = smul.addr %s31, 8
          %s4524 = smul.addr %s4523, 128
          %s4525 = scalar_lea.hbm %s12, %s4524
          %s4527 = sshll.u32 1, 14
          %s4528 = sxor.u32 4294967295, %s4527
          %s4531 = sshll.u32 7, 18
          %s4532 = sxor.u32 4294967295, %s4531
          %s4533 = sand.u32 0, %s4532
          %s4535 = sor.u32 %s4533, 0
          %s4536 = sshll.u32 %s4516, 4
          %s4537 = int_to_ptr.vmem [resolvable:$true] %s4536
          %4543 = sst [smem:[#allocation14]] 1024
          %s4544 = scalar_lea.smem [#allocation14], 1
          %4545 = sst [smem:[%s4544]] 2048
          %s4546 = scalar_lea.smem [#allocation14], 2
          %4547 = sst [smem:[%s4546]] 8
          %s4548 = scalar_lea.smem [#allocation14], 3
          %4549 = sst [smem:[%s4548]] 128
          %s4550 = scalar_lea.smem [#allocation14], 4
          %4551 = sst [smem:[%s4550]] 128
          %s4552 = scalar_lea.smem [#allocation14], 5
          %4553 = sst [smem:[%s4552]] 8
          %4555 = dma.general %s4537, 2048, %s4525, %s4513, 131072, [#allocation14], %s4535, 0
        $region92: #{tpu_custom_call.1} parent=67 // pred_fallthru
          _
      $region68: #{tpu_custom_call.1} parent=5 // pred_fallthru
        _
      %p4556 = scmp.le.s32.totalorder 2, %s26
      // Predicated region
      $region93: #{tpu_custom_call.1} parent=5 // pred_check
        %p4557 = pneg %p4556
      $region94: #{tpu_custom_call.1} parent=5 // pred_check_branch
        %4559 = sbr.rel (%p4557) target = $region96
      $region95: #{tpu_custom_call.1} parent=5 // pred_region
        %s4560 = ssub.s32 %s26, 2
        // Predicated region
        $region97: #{tpu_custom_call.1} parent=95 // pred_check
          %p4561 = pneg %p317
        $region98: #{tpu_custom_call.1} parent=95 // pred_check_branch
          %4563 = sbr.rel (%p4561) target = $region100
        $region99: #{tpu_custom_call.1} parent=95 // pred_region
          %s4564 = sand.u32 %s302, 1
          %s4565 = scalar_lea.sflag [#allocation5], %s4564
          %s4566 = sand.u32 %s302, 1
          %s4567 = smul.addr %s4566, 128
          %s4568 = scalar_lea.vmem [#allocation12], %s4567
          %4569 = dma.done %s4565, 2048
        $region100: #{tpu_custom_call.1} parent=95 // pred_fallthru
          _
      $region96: #{tpu_custom_call.1} parent=5 // pred_fallthru
        _
    $region6: #{tpu_custom_call.1} parent=1 // loop_footer
      %s30 = sadd.s32 1, %s26
    $region7: #{tpu_custom_call.1} parent=1 // loop_footer_branch
      %25 = sbr.rel target = $region3
    $region8: #{tpu_custom_call.1} parent=1 // loop_exit
      _
    %4570 = vsyncpa [#allocation4], 1
    %s4571 = scalar_lea.sflag [#allocation4], 1
    %4572 = vsyncpa %s4571, 1
    %4573 = vsyncpa [#allocation7], 1
    %4574 = vsyncpa [#allocation10], 1
    %4575 = vsyncpa [#allocation5], 1
    %s4576 = scalar_lea.sflag [#allocation5], 1
    %4577 = vsyncpa %s4576, 1

</llo_original>
